<compile_context>
chip_gen: v7x
topology: tpu7x:2x2x1
jax: 0.10.0
libtpu: 0.0.40
codegen_flags: <defaults>
</compile_context>

<pallas_src>
import functools

import jax
import jax.numpy as jnp
from jax import lax
from jax.experimental import pallas as pl
from jax.experimental.pallas import tpu as pltpu


# ----------------------------------------------------------------------------
# Helpers
# ----------------------------------------------------------------------------
def _round_up(x, m):
    return (x + m - 1) // m * m


def _time_block(t):
    for tt in (8, 4, 2, 1):
        if t % tt == 0:
            return tt
    return 1


# ----------------------------------------------------------------------------
# One LSTM cell step.  Gate order matches PyTorch: i, f, g, o;
# c' = f*c + i*g ; h' = o*tanh(c').  xi/xf/xg/xo already contain
# x_t @ W_ih^T + b_ih + b_hh (hoisted out of the recurrence, f32).
# h/c stay f32; the recurrent matmuls run in the weight dtype (bf16 by
# default) with f32 accumulation.
# ----------------------------------------------------------------------------
def _lstm_step(xi, xf, xg, xo, h, c, wi, wf, wg, wo):
    hm = h.astype(wi.dtype)
    pre_i = xi + jnp.dot(hm, wi, preferred_element_type=jnp.float32)
    pre_f = xf + jnp.dot(hm, wf, preferred_element_type=jnp.float32)
    pre_g = xg + jnp.dot(hm, wg, preferred_element_type=jnp.float32)
    pre_o = xo + jnp.dot(hm, wo, preferred_element_type=jnp.float32)
    i_g = jax.nn.sigmoid(pre_i)
    f_g = jax.nn.sigmoid(pre_f)
    g_g = jnp.tanh(pre_g)
    o_g = jax.nn.sigmoid(pre_o)
    c_new = f_g * c + i_g * g_g
    h_new = o_g * jnp.tanh(c_new)
    return h_new, c_new


# ----------------------------------------------------------------------------
# Encoder kernel: grid=(nb, nt).  Per grid step: unrolled loop over `tt`
# timesteps.  Only the FINAL hidden state is emitted (constant output block,
# written at the last time block).
# ----------------------------------------------------------------------------
def _lstm_encoder_kernel(xproj_ref, whh_ref, hlast_ref, h_sc, c_sc, *, tt):
    t_blk = pl.program_id(1)

    @pl.when(t_blk == 0)
    def _():
        h_sc[...] = jnp.zeros_like(h_sc)
        c_sc[...] = jnp.zeros_like(c_sc)

    wi, wf, wg, wo = whh_ref[0], whh_ref[1], whh_ref[2], whh_ref[3]

    def body(step, carry):
        h, c = carry
        xp = xproj_ref[step]                       # (4, BB, H) f32
        return _lstm_step(xp[0], xp[1], xp[2], xp[3], h, c, wi, wf, wg, wo)

    h, c = lax.fori_loop(0, tt, body, (h_sc[...], c_sc[...]), unroll=True)
    h_sc[...] = h
    c_sc[...] = c

    @pl.when(t_blk == pl.num_programs(1) - 1)
    def _():
        hlast_ref[...] = h.astype(hlast_ref.dtype)


# ----------------------------------------------------------------------------
# Decoder kernel: the input projection is CONSTANT across output_len, so it
# is passed once (constant index_map) and re-used every step; only h @ W_hh
# runs per step.  All hidden states are emitted (time-major output block).
# ----------------------------------------------------------------------------
def _lstm_decoder_kernel(xproj_ref, whh_ref, out_ref, h_sc, c_sc, *, tt):
    t_blk = pl.program_id(1)

    @pl.when(t_blk == 0)
    def _():
        h_sc[...] = jnp.zeros_like(h_sc)
        c_sc[...] = jnp.zeros_like(c_sc)

    wi, wf, wg, wo = whh_ref[0], whh_ref[1], whh_ref[2], whh_ref[3]
    xp = xproj_ref[...]                            # (4, BB, Hc) f32, constant
    xi, xf, xg, xo = xp[0], xp[1], xp[2], xp[3]

    def body(step, carry):
        h, c = carry
        h, c = _lstm_step(xi, xf, xg, xo, h, c, wi, wf, wg, wo)
        out_ref[step] = h.astype(out_ref.dtype)
        return h, c

    h, c = lax.fori_loop(0, tt, body, (h_sc[...], c_sc[...]), unroll=True)
    h_sc[...] = h
    c_sc[...] = c


# ----------------------------------------------------------------------------
# Wrappers
# ----------------------------------------------------------------------------
def lstm_encode_last(x_pad, w_ih, w_hh, b_ih, b_hh, *, batch_block, matmul_dtype):
    """x_pad: (B_pad, T, D).  Returns final hidden state (B_pad, H)."""
    B_pad, T, D = x_pad.shape
    H = w_hh.shape[1]
    TT = _time_block(T)
    nb = B_pad // batch_block
    nt = T // TT

    # Hoisted input projection for all timesteps, gate-major, bias folded in.
    w4 = w_ih.reshape(4, H, D).astype(matmul_dtype)
    bias = (b_ih + b_hh).reshape(4, H).astype(jnp.float32)
    xproj = jnp.einsum(
        "btd,ghd->tgbh", x_pad.astype(matmul_dtype), w4,
        preferred_element_type=jnp.float32,
    ) + bias[None, :, None, :]                             # (T, 4, B_pad, H) f32

    # Recurrent weights gate-major, pre-transposed for h @ W: (4, H_in, H_out).
    whh = jnp.transpose(w_hh.reshape(4, H, H), (0, 2, 1)).astype(matmul_dtype)

    kernel = functools.partial(_lstm_encoder_kernel, tt=TT)
    return pl.pallas_call(
        kernel,
        out_shape=jax.ShapeDtypeStruct((B_pad, H), jnp.float32),
        grid_spec=pltpu.PrefetchScalarGridSpec(
            num_scalar_prefetch=0,
            grid=(nb, nt),
            in_specs=[
                pl.BlockSpec((TT, 4, batch_block, H), lambda b, t: (t, 0, b, 0)),
                pl.BlockSpec((4, H, H), lambda b, t: (0, 0, 0)),
            ],
            out_specs=pl.BlockSpec((batch_block, H), lambda b, t: (b, 0)),
            scratch_shapes=[
                pltpu.VMEM((batch_block, H), jnp.float32),   # h state
                pltpu.VMEM((batch_block, H), jnp.float32),   # c state
            ],
        ),
        compiler_params=pltpu.CompilerParams(
            dimension_semantics=("parallel", "arbitrary"),
        ),
    )(xproj, whh)


def lstm_decode(xproj_dec, w_hh, out_len, *, batch_block, matmul_dtype):
    """xproj_dec: (4, B_pad, Hc) precomputed constant input projection (f32).
       Returns all hidden states, batch-first (B_pad, out_len, Hc)."""
    _, B_pad, Hc = xproj_dec.shape
    TT = _time_block(out_len)
    nb = B_pad // batch_block
    nt = out_len // TT

    whh = jnp.transpose(w_hh.reshape(4, Hc, Hc), (0, 2, 1)).astype(matmul_dtype)

    kernel = functools.partial(_lstm_decoder_kernel, tt=TT)
    out_tbh = pl.pallas_call(
        kernel,
        out_shape=jax.ShapeDtypeStruct((out_len, B_pad, Hc), jnp.float32),
        grid_spec=pltpu.PrefetchScalarGridSpec(
            num_scalar_prefetch=0,
            grid=(nb, nt),
            in_specs=[
                pl.BlockSpec((4, batch_block, Hc), lambda b, t: (0, b, 0)),
                pl.BlockSpec((4, Hc, Hc), lambda b, t: (0, 0, 0)),
            ],
            out_specs=pl.BlockSpec((TT, batch_block, Hc), lambda b, t: (t, b, 0)),
            scratch_shapes=[
                pltpu.VMEM((batch_block, Hc), jnp.float32),  # h state
                pltpu.VMEM((batch_block, Hc), jnp.float32),  # c state
            ],
        ),
        compiler_params=pltpu.CompilerParams(
            dimension_semantics=("parallel", "arbitrary"),
        ),
    )(xproj_dec, whh)
    # Tiny tensor (out_len, B_pad, Hc) -> batch-first.
    return jnp.transpose(out_tbh, (1, 0, 2))


# ----------------------------------------------------------------------------
# Module: parameters + forward
# ----------------------------------------------------------------------------
def init_params(key, input_dim, hidden_dim, latent_dim):
    ks = jax.random.split(key, 12)

    def u(k, shape, fan):
        bound = 1.0 / jnp.sqrt(fan)
        return jax.random.uniform(k, shape, jnp.float32, -bound, bound)

    params = {
        # encoder LSTM: input_dim -> hidden_dim
        "enc_w_ih": u(ks[0], (4 * hidden_dim, input_dim), hidden_dim),
        "enc_w_hh": u(ks[1], (4 * hidden_dim, hidden_dim), hidden_dim),
        "enc_b_ih": u(ks[2], (4 * hidden_dim,), hidden_dim),
        "enc_b_hh": u(ks[3], (4 * hidden_dim,), hidden_dim),
        # hidden_to_mean: hidden_dim -> latent_dim
        "h2m_w": u(ks[4], (latent_dim, hidden_dim), hidden_dim),
        "h2m_b": u(ks[5], (latent_dim,), hidden_dim),
        # latent_to_hidden: latent_dim -> hidden_dim
        "l2h_w": u(ks[6], (hidden_dim, latent_dim), latent_dim),
        "l2h_b": u(ks[7], (hidden_dim,), latent_dim),
        # decoder LSTM: hidden_dim -> input_dim
        "dec_w_ih": u(ks[8], (4 * input_dim, hidden_dim), input_dim),
        "dec_w_hh": u(ks[9], (4 * input_dim, input_dim), input_dim),
        "dec_b_ih": u(ks[10], (4 * input_dim,), input_dim),
        "dec_b_hh": u(ks[11], (4 * input_dim,), input_dim),
    }
    # NOTE: l1, l2, hidden_to_logvar exist in __init__ but are unused in forward.
    return params


def timeseries_autoencoder_forward(params, x, output_len,
                                   matmul_dtype=jnp.bfloat16):
    B, T, D = x.shape
    H = params["enc_w_hh"].shape[1]

    # Pad batch to a sublane-aligned width (zeros; sliced off at the end).
    B_pad = _round_up(max(B, 8), 8)
    if B_pad > 256:
        B_pad = _round_up(B_pad, 256)
        batch_block = 256
    else:
        batch_block = B_pad
    x_pad = jnp.zeros((B_pad, T, D), jnp.float32).at[:B].set(
        x.astype(jnp.float32))

    # ---- encoder: only the final hidden state is produced ----
    h_last = lstm_encode_last(
        x_pad, params["enc_w_ih"], params["enc_w_hh"],
        params["enc_b_ih"], params["enc_b_hh"],
        batch_block=batch_block, matmul_dtype=matmul_dtype,
    )                                                      # (B_pad, H)

    # ---- latent path: tiny matmuls, plain XLA (per perf review) ----
    latent = h_last @ params["h2m_w"].T + params["h2m_b"]          # (B_pad, latent)
    hidden2 = latent @ params["l2h_w"].T + params["l2h_b"]         # (B_pad, H)

    # ---- decoder: input is constant across output_len -> project ONCE ----
    Hc = params["dec_w_hh"].shape[1]                               # == input_dim
    w4_dec = params["dec_w_ih"].reshape(4, Hc, H).astype(matmul_dtype)
    bias_dec = (params["dec_b_ih"] + params["dec_b_hh"]).reshape(4, Hc)
    xproj_dec = jnp.einsum(
        "bd,ghd->gbh", hidden2.astype(matmul_dtype), w4_dec,
        preferred_element_type=jnp.float32,
    ) + bias_dec[:, None, :].astype(jnp.float32)                   # (4, B_pad, Hc)

    out_pad = lstm_decode(
        xproj_dec, params["dec_w_hh"], output_len,
        batch_block=batch_block, matmul_dtype=matmul_dtype,
    )                                                              # (B_pad, L, Hc)

    return out_pad[:B], latent[:B]


if __name__ == "__main__":
    B, T = 2, 8
    input_dim, hidden_dim, latent_dim, output_len = 4, 32, 16, 8

    key = jax.random.PRNGKey(0)
    k_param, k_x = jax.random.split(key)
    params = init_params(k_param, input_dim, hidden_dim, latent_dim)
    x = jax.random.normal(k_x, (B, T, input_dim), jnp.float32)

    fwd = jax.jit(functools.partial(timeseries_autoencoder_forward,
                                    output_len=output_len))
    output, latent = fwd(params, x)
    jax.block_until_ready((output, latent))

    assert output.shape == (B, output_len, input_dim)
    assert latent.shape == (B, latent_dim)
    print("KERNEL_OK")
</pallas_src>

<mosaic_0001>
module attributes {stable_mosaic.version = 11 : i64} {
  func.func @_lstm_encoder_kernel(%arg0: i32, %arg1: i32, %arg2: memref<8x4x8x32xf32, #tpu.memory_space<vmem>>, %arg3: memref<4x32x32xbf16, #tpu.memory_space<vmem>>, %arg4: memref<8x32xf32, #tpu.memory_space<vmem>>, %arg5: memref<8x32xf32, #tpu.memory_space<vmem>>, %arg6: memref<8x32xf32, #tpu.memory_space<vmem>>) attributes {dimension_semantics = [#tpu.dimension_semantics<parallel>, #tpu.dimension_semantics<arbitrary>], iteration_bounds = array<i64: 1, 1>, scalar_prefetch = 0 : i64, scratch_operands = 2 : i64, tpu.core_type = #tpu.core_type<tc>, window_params = [{transform_indices = @transform_0, window_bounds = array<i64: 8, 4, 8, 32>}, {pipeline_mode = #tpu.pipeline_mode<synchronous>, transform_indices = @transform_1, window_bounds = array<i64: 4, 32, 32>}, {transform_indices = @transform_2, window_bounds = array<i64: 8, 32>}]} {
    %c0_i32 = arith.constant 0 : i32
    %0 = arith.cmpi eq, %arg1, %c0_i32 : i32
    %1 = arith.extui %0 : i1 to i32
    %c0_i32_0 = arith.constant 0 : i32
    %2 = arith.cmpi ne, %1, %c0_i32_0 : i32
    scf.if %2 {
      %cst_99 = arith.constant 0.000000e+00 : f32
      %346 = vector.broadcast %cst_99 : f32 to vector<8x32xf32>
      %c0_100 = arith.constant 0 : index
      %c0_101 = arith.constant 0 : index
      %347 = vector.load %arg5[%c0_100, %c0_101] : memref<8x32xf32, #tpu.memory_space<vmem>>, vector<8x32xf32>
      tpu.vector_store %arg5[%c0_100, %c0_101], %346 {strides = array<i32>} : memref<8x32xf32, #tpu.memory_space<vmem>>, vector<8x32xf32>,
      %cst_102 = arith.constant 0.000000e+00 : f32
      %348 = vector.broadcast %cst_102 : f32 to vector<8x32xf32>
      %c0_103 = arith.constant 0 : index
      %c0_104 = arith.constant 0 : index
      %349 = vector.load %arg6[%c0_103, %c0_104] : memref<8x32xf32, #tpu.memory_space<vmem>>, vector<8x32xf32>
      tpu.vector_store %arg6[%c0_103, %c0_104], %348 {strides = array<i32>} : memref<8x32xf32, #tpu.memory_space<vmem>>, vector<8x32xf32>,
    } else {
    }
    %c0 = arith.constant 0 : index
    %c0_1 = arith.constant 0 : index
    %c0_2 = arith.constant 0 : index
    %3 = vector.load %arg3[%c0, %c0_1, %c0_2] : memref<4x32x32xbf16, #tpu.memory_space<vmem>>, vector<1x32x32xbf16>
    %4 = vector.shape_cast %3 : vector<1x32x32xbf16> to vector<32x32xbf16>
    %c1 = arith.constant 1 : index
    %c0_3 = arith.constant 0 : index
    %c0_4 = arith.constant 0 : index
    %5 = vector.load %arg3[%c1, %c0_3, %c0_4] : memref<4x32x32xbf16, #tpu.memory_space<vmem>>, vector<1x32x32xbf16>
    %6 = vector.shape_cast %5 : vector<1x32x32xbf16> to vector<32x32xbf16>
    %c2 = arith.constant 2 : index
    %c0_5 = arith.constant 0 : index
    %c0_6 = arith.constant 0 : index
    %7 = vector.load %arg3[%c2, %c0_5, %c0_6] : memref<4x32x32xbf16, #tpu.memory_space<vmem>>, vector<1x32x32xbf16>
    %8 = vector.shape_cast %7 : vector<1x32x32xbf16> to vector<32x32xbf16>
    %c3 = arith.constant 3 : index
    %c0_7 = arith.constant 0 : index
    %c0_8 = arith.constant 0 : index
    %9 = vector.load %arg3[%c3, %c0_7, %c0_8] : memref<4x32x32xbf16, #tpu.memory_space<vmem>>, vector<1x32x32xbf16>
    %10 = vector.shape_cast %9 : vector<1x32x32xbf16> to vector<32x32xbf16>
    %c0_9 = arith.constant 0 : index
    %c0_10 = arith.constant 0 : index
    %11 = vector.load %arg5[%c0_9, %c0_10] : memref<8x32xf32, #tpu.memory_space<vmem>>, vector<8x32xf32>
    %c0_11 = arith.constant 0 : index
    %c0_12 = arith.constant 0 : index
    %12 = vector.load %arg6[%c0_11, %c0_12] : memref<8x32xf32, #tpu.memory_space<vmem>>, vector<8x32xf32>
    %c0_i32_13 = arith.constant 0 : i32
    %13 = arith.index_cast %c0_i32_13 : i32 to index
    %c0_14 = arith.constant 0 : index
    %c0_15 = arith.constant 0 : index
    %c0_16 = arith.constant 0 : index
    %14 = vector.load %arg2[%13, %c0_14, %c0_15, %c0_16] : memref<8x4x8x32xf32, #tpu.memory_space<vmem>>, vector<1x4x8x32xf32>
    %15 = vector.shape_cast %14 : vector<1x4x8x32xf32> to vector<4x8x32xf32>
    %16 = vector.extract_strided_slice %15 {offsets = [0, 0, 0], sizes = [1, 8, 32], strides = [1, 1, 1]} : vector<4x8x32xf32> to vector<1x8x32xf32>
    %17 = vector.shape_cast %16 : vector<1x8x32xf32> to vector<8x32xf32>
    %18 = vector.extract_strided_slice %15 {offsets = [1, 0, 0], sizes = [1, 8, 32], strides = [1, 1, 1]} : vector<4x8x32xf32> to vector<1x8x32xf32>
    %19 = vector.shape_cast %18 : vector<1x8x32xf32> to vector<8x32xf32>
    %20 = vector.extract_strided_slice %15 {offsets = [2, 0, 0], sizes = [1, 8, 32], strides = [1, 1, 1]} : vector<4x8x32xf32> to vector<1x8x32xf32>
    %21 = vector.shape_cast %20 : vector<1x8x32xf32> to vector<8x32xf32>
    %22 = vector.extract_strided_slice %15 {offsets = [3, 0, 0], sizes = [1, 8, 32], strides = [1, 1, 1]} : vector<4x8x32xf32> to vector<1x8x32xf32>
    %23 = vector.shape_cast %22 : vector<1x8x32xf32> to vector<8x32xf32>
    %24 = arith.truncf %11 : vector<8x32xf32> to vector<8x32xbf16>
    %cst = arith.constant dense<0.000000e+00> : vector<8x32xf32>
    %25 = tpu.matmul %24, %4, %cst {dimension_numbers = #tpu.dot_dimension_numbers<[1], [0], [0], [1], [0, 0, 1, 1], [], []>} : vector<8x32xbf16>, vector<32x32xbf16>, vector<8x32xf32> -> vector<8x32xf32>
    %26 = arith.addf %17, %25 : vector<8x32xf32>
    %cst_17 = arith.constant dense<0.000000e+00> : vector<8x32xf32>
    %27 = tpu.matmul %24, %6, %cst_17 {dimension_numbers = #tpu.dot_dimension_numbers<[1], [0], [0], [1], [0, 0, 1, 1], [], []>} : vector<8x32xbf16>, vector<32x32xbf16>, vector<8x32xf32> -> vector<8x32xf32>
    %28 = arith.addf %19, %27 : vector<8x32xf32>
    %cst_18 = arith.constant dense<0.000000e+00> : vector<8x32xf32>
    %29 = tpu.matmul %24, %8, %cst_18 {dimension_numbers = #tpu.dot_dimension_numbers<[1], [0], [0], [1], [0, 0, 1, 1], [], []>} : vector<8x32xbf16>, vector<32x32xbf16>, vector<8x32xf32> -> vector<8x32xf32>
    %30 = arith.addf %21, %29 : vector<8x32xf32>
    %cst_19 = arith.constant dense<0.000000e+00> : vector<8x32xf32>
    %31 = tpu.matmul %24, %10, %cst_19 {dimension_numbers = #tpu.dot_dimension_numbers<[1], [0], [0], [1], [0, 0, 1, 1], [], []>} : vector<8x32xbf16>, vector<32x32xbf16>, vector<8x32xf32> -> vector<8x32xf32>
    %32 = arith.addf %23, %31 : vector<8x32xf32>
    %33 = arith.negf %26 : vector<8x32xf32>
    %34 = math.exp %33 : vector<8x32xf32>
    %cst_20 = arith.constant 1.000000e+00 : f32
    %35 = vector.broadcast %cst_20 : f32 to vector<8x32xf32>
    %36 = arith.addf %35, %34 : vector<8x32xf32>
    %37 = arith.divf %35, %36 : vector<8x32xf32>
    %38 = arith.negf %28 : vector<8x32xf32>
    %39 = math.exp %38 : vector<8x32xf32>
    %cst_21 = arith.constant 1.000000e+00 : f32
    %40 = vector.broadcast %cst_21 : f32 to vector<8x32xf32>
    %41 = arith.addf %40, %39 : vector<8x32xf32>
    %42 = arith.divf %40, %41 : vector<8x32xf32>
    %43 = math.tanh %30 : vector<8x32xf32>
    %44 = arith.negf %32 : vector<8x32xf32>
    %45 = math.exp %44 : vector<8x32xf32>
    %cst_22 = arith.constant 1.000000e+00 : f32
    %46 = vector.broadcast %cst_22 : f32 to vector<8x32xf32>
    %47 = arith.addf %46, %45 : vector<8x32xf32>
    %48 = arith.divf %46, %47 : vector<8x32xf32>
    %49 = arith.mulf %42, %12 : vector<8x32xf32>
    %50 = arith.mulf %37, %43 : vector<8x32xf32>
    %51 = arith.addf %49, %50 : vector<8x32xf32>
    %52 = math.tanh %51 : vector<8x32xf32>
    %53 = arith.mulf %48, %52 : vector<8x32xf32>
    %c1_i32 = arith.constant 1 : i32
    %54 = arith.index_cast %c1_i32 : i32 to index
    %c0_23 = arith.constant 0 : index
    %c0_24 = arith.constant 0 : index
    %c0_25 = arith.constant 0 : index
    %55 = vector.load %arg2[%54, %c0_23, %c0_24, %c0_25] : memref<8x4x8x32xf32, #tpu.memory_space<vmem>>, vector<1x4x8x32xf32>
    %56 = vector.shape_cast %55 : vector<1x4x8x32xf32> to vector<4x8x32xf32>
    %57 = vector.extract_strided_slice %56 {offsets = [0, 0, 0], sizes = [1, 8, 32], strides = [1, 1, 1]} : vector<4x8x32xf32> to vector<1x8x32xf32>
    %58 = vector.shape_cast %57 : vector<1x8x32xf32> to vector<8x32xf32>
    %59 = vector.extract_strided_slice %56 {offsets = [1, 0, 0], sizes = [1, 8, 32], strides = [1, 1, 1]} : vector<4x8x32xf32> to vector<1x8x32xf32>
    %60 = vector.shape_cast %59 : vector<1x8x32xf32> to vector<8x32xf32>
    %61 = vector.extract_strided_slice %56 {offsets = [2, 0, 0], sizes = [1, 8, 32], strides = [1, 1, 1]} : vector<4x8x32xf32> to vector<1x8x32xf32>
    %62 = vector.shape_cast %61 : vector<1x8x32xf32> to vector<8x32xf32>
    %63 = vector.extract_strided_slice %56 {offsets = [3, 0, 0], sizes = [1, 8, 32], strides = [1, 1, 1]} : vector<4x8x32xf32> to vector<1x8x32xf32>
    %64 = vector.shape_cast %63 : vector<1x8x32xf32> to vector<8x32xf32>
    %65 = arith.truncf %53 : vector<8x32xf32> to vector<8x32xbf16>
    %cst_26 = arith.constant dense<0.000000e+00> : vector<8x32xf32>
    %66 = tpu.matmul %65, %4, %cst_26 {dimension_numbers = #tpu.dot_dimension_numbers<[1], [0], [0], [1], [0, 0, 1, 1], [], []>} : vector<8x32xbf16>, vector<32x32xbf16>, vector<8x32xf32> -> vector<8x32xf32>
    %67 = arith.addf %58, %66 : vector<8x32xf32>
    %cst_27 = arith.constant dense<0.000000e+00> : vector<8x32xf32>
    %68 = tpu.matmul %65, %6, %cst_27 {dimension_numbers = #tpu.dot_dimension_numbers<[1], [0], [0], [1], [0, 0, 1, 1], [], []>} : vector<8x32xbf16>, vector<32x32xbf16>, vector<8x32xf32> -> vector<8x32xf32>
    %69 = arith.addf %60, %68 : vector<8x32xf32>
    %cst_28 = arith.constant dense<0.000000e+00> : vector<8x32xf32>
    %70 = tpu.matmul %65, %8, %cst_28 {dimension_numbers = #tpu.dot_dimension_numbers<[1], [0], [0], [1], [0, 0, 1, 1], [], []>} : vector<8x32xbf16>, vector<32x32xbf16>, vector<8x32xf32> -> vector<8x32xf32>
    %71 = arith.addf %62, %70 : vector<8x32xf32>
    %cst_29 = arith.constant dense<0.000000e+00> : vector<8x32xf32>
    %72 = tpu.matmul %65, %10, %cst_29 {dimension_numbers = #tpu.dot_dimension_numbers<[1], [0], [0], [1], [0, 0, 1, 1], [], []>} : vector<8x32xbf16>, vector<32x32xbf16>, vector<8x32xf32> -> vector<8x32xf32>
    %73 = arith.addf %64, %72 : vector<8x32xf32>
    %74 = arith.negf %67 : vector<8x32xf32>
    %75 = math.exp %74 : vector<8x32xf32>
    %cst_30 = arith.constant 1.000000e+00 : f32
    %76 = vector.broadcast %cst_30 : f32 to vector<8x32xf32>
    %77 = arith.addf %76, %75 : vector<8x32xf32>
    %78 = arith.divf %76, %77 : vector<8x32xf32>
    %79 = arith.negf %69 : vector<8x32xf32>
    %80 = math.exp %79 : vector<8x32xf32>
    %cst_31 = arith.constant 1.000000e+00 : f32
    %81 = vector.broadcast %cst_31 : f32 to vector<8x32xf32>
    %82 = arith.addf %81, %80 : vector<8x32xf32>
    %83 = arith.divf %81, %82 : vector<8x32xf32>
    %84 = math.tanh %71 : vector<8x32xf32>
    %85 = arith.negf %73 : vector<8x32xf32>
    %86 = math.exp %85 : vector<8x32xf32>
    %cst_32 = arith.constant 1.000000e+00 : f32
    %87 = vector.broadcast %cst_32 : f32 to vector<8x32xf32>
    %88 = arith.addf %87, %86 : vector<8x32xf32>
    %89 = arith.divf %87, %88 : vector<8x32xf32>
    %90 = arith.mulf %83, %51 : vector<8x32xf32>
    %91 = arith.mulf %78, %84 : vector<8x32xf32>
    %92 = arith.addf %90, %91 : vector<8x32xf32>
    %93 = math.tanh %92 : vector<8x32xf32>
    %94 = arith.mulf %89, %93 : vector<8x32xf32>
    %c2_i32 = arith.constant 2 : i32
    %95 = arith.index_cast %c2_i32 : i32 to index
    %c0_33 = arith.constant 0 : index
    %c0_34 = arith.constant 0 : index
    %c0_35 = arith.constant 0 : index
    %96 = vector.load %arg2[%95, %c0_33, %c0_34, %c0_35] : memref<8x4x8x32xf32, #tpu.memory_space<vmem>>, vector<1x4x8x32xf32>
    %97 = vector.shape_cast %96 : vector<1x4x8x32xf32> to vector<4x8x32xf32>
    %98 = vector.extract_strided_slice %97 {offsets = [0, 0, 0], sizes = [1, 8, 32], strides = [1, 1, 1]} : vector<4x8x32xf32> to vector<1x8x32xf32>
    %99 = vector.shape_cast %98 : vector<1x8x32xf32> to vector<8x32xf32>
    %100 = vector.extract_strided_slice %97 {offsets = [1, 0, 0], sizes = [1, 8, 32], strides = [1, 1, 1]} : vector<4x8x32xf32> to vector<1x8x32xf32>
    %101 = vector.shape_cast %100 : vector<1x8x32xf32> to vector<8x32xf32>
    %102 = vector.extract_strided_slice %97 {offsets = [2, 0, 0], sizes = [1, 8, 32], strides = [1, 1, 1]} : vector<4x8x32xf32> to vector<1x8x32xf32>
    %103 = vector.shape_cast %102 : vector<1x8x32xf32> to vector<8x32xf32>
    %104 = vector.extract_strided_slice %97 {offsets = [3, 0, 0], sizes = [1, 8, 32], strides = [1, 1, 1]} : vector<4x8x32xf32> to vector<1x8x32xf32>
    %105 = vector.shape_cast %104 : vector<1x8x32xf32> to vector<8x32xf32>
    %106 = arith.truncf %94 : vector<8x32xf32> to vector<8x32xbf16>
    %cst_36 = arith.constant dense<0.000000e+00> : vector<8x32xf32>
    %107 = tpu.matmul %106, %4, %cst_36 {dimension_numbers = #tpu.dot_dimension_numbers<[1], [0], [0], [1], [0, 0, 1, 1], [], []>} : vector<8x32xbf16>, vector<32x32xbf16>, vector<8x32xf32> -> vector<8x32xf32>
    %108 = arith.addf %99, %107 : vector<8x32xf32>
    %cst_37 = arith.constant dense<0.000000e+00> : vector<8x32xf32>
    %109 = tpu.matmul %106, %6, %cst_37 {dimension_numbers = #tpu.dot_dimension_numbers<[1], [0], [0], [1], [0, 0, 1, 1], [], []>} : vector<8x32xbf16>, vector<32x32xbf16>, vector<8x32xf32> -> vector<8x32xf32>
    %110 = arith.addf %101, %109 : vector<8x32xf32>
    %cst_38 = arith.constant dense<0.000000e+00> : vector<8x32xf32>
    %111 = tpu.matmul %106, %8, %cst_38 {dimension_numbers = #tpu.dot_dimension_numbers<[1], [0], [0], [1], [0, 0, 1, 1], [], []>} : vector<8x32xbf16>, vector<32x32xbf16>, vector<8x32xf32> -> vector<8x32xf32>
    %112 = arith.addf %103, %111 : vector<8x32xf32>
    %cst_39 = arith.constant dense<0.000000e+00> : vector<8x32xf32>
    %113 = tpu.matmul %106, %10, %cst_39 {dimension_numbers = #tpu.dot_dimension_numbers<[1], [0], [0], [1], [0, 0, 1, 1], [], []>} : vector<8x32xbf16>, vector<32x32xbf16>, vector<8x32xf32> -> vector<8x32xf32>
    %114 = arith.addf %105, %113 : vector<8x32xf32>
    %115 = arith.negf %108 : vector<8x32xf32>
    %116 = math.exp %115 : vector<8x32xf32>
    %cst_40 = arith.constant 1.000000e+00 : f32
    %117 = vector.broadcast %cst_40 : f32 to vector<8x32xf32>
    %118 = arith.addf %117, %116 : vector<8x32xf32>
    %119 = arith.divf %117, %118 : vector<8x32xf32>
    %120 = arith.negf %110 : vector<8x32xf32>
    %121 = math.exp %120 : vector<8x32xf32>
    %cst_41 = arith.constant 1.000000e+00 : f32
    %122 = vector.broadcast %cst_41 : f32 to vector<8x32xf32>
    %123 = arith.addf %122, %121 : vector<8x32xf32>
    %124 = arith.divf %122, %123 : vector<8x32xf32>
    %125 = math.tanh %112 : vector<8x32xf32>
    %126 = arith.negf %114 : vector<8x32xf32>
    %127 = math.exp %126 : vector<8x32xf32>
    %cst_42 = arith.constant 1.000000e+00 : f32
    %128 = vector.broadcast %cst_42 : f32 to vector<8x32xf32>
    %129 = arith.addf %128, %127 : vector<8x32xf32>
    %130 = arith.divf %128, %129 : vector<8x32xf32>
    %131 = arith.mulf %124, %92 : vector<8x32xf32>
    %132 = arith.mulf %119, %125 : vector<8x32xf32>
    %133 = arith.addf %131, %132 : vector<8x32xf32>
    %134 = math.tanh %133 : vector<8x32xf32>
    %135 = arith.mulf %130, %134 : vector<8x32xf32>
    %c3_i32 = arith.constant 3 : i32
    %136 = arith.index_cast %c3_i32 : i32 to index
    %c0_43 = arith.constant 0 : index
    %c0_44 = arith.constant 0 : index
    %c0_45 = arith.constant 0 : index
    %137 = vector.load %arg2[%136, %c0_43, %c0_44, %c0_45] : memref<8x4x8x32xf32, #tpu.memory_space<vmem>>, vector<1x4x8x32xf32>
    %138 = vector.shape_cast %137 : vector<1x4x8x32xf32> to vector<4x8x32xf32>
    %139 = vector.extract_strided_slice %138 {offsets = [0, 0, 0], sizes = [1, 8, 32], strides = [1, 1, 1]} : vector<4x8x32xf32> to vector<1x8x32xf32>
    %140 = vector.shape_cast %139 : vector<1x8x32xf32> to vector<8x32xf32>
    %141 = vector.extract_strided_slice %138 {offsets = [1, 0, 0], sizes = [1, 8, 32], strides = [1, 1, 1]} : vector<4x8x32xf32> to vector<1x8x32xf32>
    %142 = vector.shape_cast %141 : vector<1x8x32xf32> to vector<8x32xf32>
    %143 = vector.extract_strided_slice %138 {offsets = [2, 0, 0], sizes = [1, 8, 32], strides = [1, 1, 1]} : vector<4x8x32xf32> to vector<1x8x32xf32>
    %144 = vector.shape_cast %143 : vector<1x8x32xf32> to vector<8x32xf32>
    %145 = vector.extract_strided_slice %138 {offsets = [3, 0, 0], sizes = [1, 8, 32], strides = [1, 1, 1]} : vector<4x8x32xf32> to vector<1x8x32xf32>
    %146 = vector.shape_cast %145 : vector<1x8x32xf32> to vector<8x32xf32>
    %147 = arith.truncf %135 : vector<8x32xf32> to vector<8x32xbf16>
    %cst_46 = arith.constant dense<0.000000e+00> : vector<8x32xf32>
    %148 = tpu.matmul %147, %4, %cst_46 {dimension_numbers = #tpu.dot_dimension_numbers<[1], [0], [0], [1], [0, 0, 1, 1], [], []>} : vector<8x32xbf16>, vector<32x32xbf16>, vector<8x32xf32> -> vector<8x32xf32>
    %149 = arith.addf %140, %148 : vector<8x32xf32>
    %cst_47 = arith.constant dense<0.000000e+00> : vector<8x32xf32>
    %150 = tpu.matmul %147, %6, %cst_47 {dimension_numbers = #tpu.dot_dimension_numbers<[1], [0], [0], [1], [0, 0, 1, 1], [], []>} : vector<8x32xbf16>, vector<32x32xbf16>, vector<8x32xf32> -> vector<8x32xf32>
    %151 = arith.addf %142, %150 : vector<8x32xf32>
    %cst_48 = arith.constant dense<0.000000e+00> : vector<8x32xf32>
    %152 = tpu.matmul %147, %8, %cst_48 {dimension_numbers = #tpu.dot_dimension_numbers<[1], [0], [0], [1], [0, 0, 1, 1], [], []>} : vector<8x32xbf16>, vector<32x32xbf16>, vector<8x32xf32> -> vector<8x32xf32>
    %153 = arith.addf %144, %152 : vector<8x32xf32>
    %cst_49 = arith.constant dense<0.000000e+00> : vector<8x32xf32>
    %154 = tpu.matmul %147, %10, %cst_49 {dimension_numbers = #tpu.dot_dimension_numbers<[1], [0], [0], [1], [0, 0, 1, 1], [], []>} : vector<8x32xbf16>, vector<32x32xbf16>, vector<8x32xf32> -> vector<8x32xf32>
    %155 = arith.addf %146, %154 : vector<8x32xf32>
    %156 = arith.negf %149 : vector<8x32xf32>
    %157 = math.exp %156 : vector<8x32xf32>
    %cst_50 = arith.constant 1.000000e+00 : f32
    %158 = vector.broadcast %cst_50 : f32 to vector<8x32xf32>
    %159 = arith.addf %158, %157 : vector<8x32xf32>
    %160 = arith.divf %158, %159 : vector<8x32xf32>
    %161 = arith.negf %151 : vector<8x32xf32>
    %162 = math.exp %161 : vector<8x32xf32>
    %cst_51 = arith.constant 1.000000e+00 : f32
    %163 = vector.broadcast %cst_51 : f32 to vector<8x32xf32>
    %164 = arith.addf %163, %162 : vector<8x32xf32>
    %165 = arith.divf %163, %164 : vector<8x32xf32>
    %166 = math.tanh %153 : vector<8x32xf32>
    %167 = arith.negf %155 : vector<8x32xf32>
    %168 = math.exp %167 : vector<8x32xf32>
    %cst_52 = arith.constant 1.000000e+00 : f32
    %169 = vector.broadcast %cst_52 : f32 to vector<8x32xf32>
    %170 = arith.addf %169, %168 : vector<8x32xf32>
    %171 = arith.divf %169, %170 : vector<8x32xf32>
    %172 = arith.mulf %165, %133 : vector<8x32xf32>
    %173 = arith.mulf %160, %166 : vector<8x32xf32>
    %174 = arith.addf %172, %173 : vector<8x32xf32>
    %175 = math.tanh %174 : vector<8x32xf32>
    %176 = arith.mulf %171, %175 : vector<8x32xf32>
    %c4_i32 = arith.constant 4 : i32
    %177 = arith.index_cast %c4_i32 : i32 to index
    %c0_53 = arith.constant 0 : index
    %c0_54 = arith.constant 0 : index
    %c0_55 = arith.constant 0 : index
    %178 = vector.load %arg2[%177, %c0_53, %c0_54, %c0_55] : memref<8x4x8x32xf32, #tpu.memory_space<vmem>>, vector<1x4x8x32xf32>
    %179 = vector.shape_cast %178 : vector<1x4x8x32xf32> to vector<4x8x32xf32>
    %180 = vector.extract_strided_slice %179 {offsets = [0, 0, 0], sizes = [1, 8, 32], strides = [1, 1, 1]} : vector<4x8x32xf32> to vector<1x8x32xf32>
    %181 = vector.shape_cast %180 : vector<1x8x32xf32> to vector<8x32xf32>
    %182 = vector.extract_strided_slice %179 {offsets = [1, 0, 0], sizes = [1, 8, 32], strides = [1, 1, 1]} : vector<4x8x32xf32> to vector<1x8x32xf32>
    %183 = vector.shape_cast %182 : vector<1x8x32xf32> to vector<8x32xf32>
    %184 = vector.extract_strided_slice %179 {offsets = [2, 0, 0], sizes = [1, 8, 32], strides = [1, 1, 1]} : vector<4x8x32xf32> to vector<1x8x32xf32>
    %185 = vector.shape_cast %184 : vector<1x8x32xf32> to vector<8x32xf32>
    %186 = vector.extract_strided_slice %179 {offsets = [3, 0, 0], sizes = [1, 8, 32], strides = [1, 1, 1]} : vector<4x8x32xf32> to vector<1x8x32xf32>
    %187 = vector.shape_cast %186 : vector<1x8x32xf32> to vector<8x32xf32>
    %188 = arith.truncf %176 : vector<8x32xf32> to vector<8x32xbf16>
    %cst_56 = arith.constant dense<0.000000e+00> : vector<8x32xf32>
    %189 = tpu.matmul %188, %4, %cst_56 {dimension_numbers = #tpu.dot_dimension_numbers<[1], [0], [0], [1], [0, 0, 1, 1], [], []>} : vector<8x32xbf16>, vector<32x32xbf16>, vector<8x32xf32> -> vector<8x32xf32>
    %190 = arith.addf %181, %189 : vector<8x32xf32>
    %cst_57 = arith.constant dense<0.000000e+00> : vector<8x32xf32>
    %191 = tpu.matmul %188, %6, %cst_57 {dimension_numbers = #tpu.dot_dimension_numbers<[1], [0], [0], [1], [0, 0, 1, 1], [], []>} : vector<8x32xbf16>, vector<32x32xbf16>, vector<8x32xf32> -> vector<8x32xf32>
    %192 = arith.addf %183, %191 : vector<8x32xf32>
    %cst_58 = arith.constant dense<0.000000e+00> : vector<8x32xf32>
    %193 = tpu.matmul %188, %8, %cst_58 {dimension_numbers = #tpu.dot_dimension_numbers<[1], [0], [0], [1], [0, 0, 1, 1], [], []>} : vector<8x32xbf16>, vector<32x32xbf16>, vector<8x32xf32> -> vector<8x32xf32>
    %194 = arith.addf %185, %193 : vector<8x32xf32>
    %cst_59 = arith.constant dense<0.000000e+00> : vector<8x32xf32>
    %195 = tpu.matmul %188, %10, %cst_59 {dimension_numbers = #tpu.dot_dimension_numbers<[1], [0], [0], [1], [0, 0, 1, 1], [], []>} : vector<8x32xbf16>, vector<32x32xbf16>, vector<8x32xf32> -> vector<8x32xf32>
    %196 = arith.addf %187, %195 : vector<8x32xf32>
    %197 = arith.negf %190 : vector<8x32xf32>
    %198 = math.exp %197 : vector<8x32xf32>
    %cst_60 = arith.constant 1.000000e+00 : f32
    %199 = vector.broadcast %cst_60 : f32 to vector<8x32xf32>
    %200 = arith.addf %199, %198 : vector<8x32xf32>
    %201 = arith.divf %199, %200 : vector<8x32xf32>
    %202 = arith.negf %192 : vector<8x32xf32>
    %203 = math.exp %202 : vector<8x32xf32>
    %cst_61 = arith.constant 1.000000e+00 : f32
    %204 = vector.broadcast %cst_61 : f32 to vector<8x32xf32>
    %205 = arith.addf %204, %203 : vector<8x32xf32>
    %206 = arith.divf %204, %205 : vector<8x32xf32>
    %207 = math.tanh %194 : vector<8x32xf32>
    %208 = arith.negf %196 : vector<8x32xf32>
    %209 = math.exp %208 : vector<8x32xf32>
    %cst_62 = arith.constant 1.000000e+00 : f32
    %210 = vector.broadcast %cst_62 : f32 to vector<8x32xf32>
    %211 = arith.addf %210, %209 : vector<8x32xf32>
    %212 = arith.divf %210, %211 : vector<8x32xf32>
    %213 = arith.mulf %206, %174 : vector<8x32xf32>
    %214 = arith.mulf %201, %207 : vector<8x32xf32>
    %215 = arith.addf %213, %214 : vector<8x32xf32>
    %216 = math.tanh %215 : vector<8x32xf32>
    %217 = arith.mulf %212, %216 : vector<8x32xf32>
    %c5_i32 = arith.constant 5 : i32
    %218 = arith.index_cast %c5_i32 : i32 to index
    %c0_63 = arith.constant 0 : index
    %c0_64 = arith.constant 0 : index
    %c0_65 = arith.constant 0 : index
    %219 = vector.load %arg2[%218, %c0_63, %c0_64, %c0_65] : memref<8x4x8x32xf32, #tpu.memory_space<vmem>>, vector<1x4x8x32xf32>
    %220 = vector.shape_cast %219 : vector<1x4x8x32xf32> to vector<4x8x32xf32>
    %221 = vector.extract_strided_slice %220 {offsets = [0, 0, 0], sizes = [1, 8, 32], strides = [1, 1, 1]} : vector<4x8x32xf32> to vector<1x8x32xf32>
    %222 = vector.shape_cast %221 : vector<1x8x32xf32> to vector<8x32xf32>
    %223 = vector.extract_strided_slice %220 {offsets = [1, 0, 0], sizes = [1, 8, 32], strides = [1, 1, 1]} : vector<4x8x32xf32> to vector<1x8x32xf32>
    %224 = vector.shape_cast %223 : vector<1x8x32xf32> to vector<8x32xf32>
    %225 = vector.extract_strided_slice %220 {offsets = [2, 0, 0], sizes = [1, 8, 32], strides = [1, 1, 1]} : vector<4x8x32xf32> to vector<1x8x32xf32>
    %226 = vector.shape_cast %225 : vector<1x8x32xf32> to vector<8x32xf32>
    %227 = vector.extract_strided_slice %220 {offsets = [3, 0, 0], sizes = [1, 8, 32], strides = [1, 1, 1]} : vector<4x8x32xf32> to vector<1x8x32xf32>
    %228 = vector.shape_cast %227 : vector<1x8x32xf32> to vector<8x32xf32>
    %229 = arith.truncf %217 : vector<8x32xf32> to vector<8x32xbf16>
    %cst_66 = arith.constant dense<0.000000e+00> : vector<8x32xf32>
    %230 = tpu.matmul %229, %4, %cst_66 {dimension_numbers = #tpu.dot_dimension_numbers<[1], [0], [0], [1], [0, 0, 1, 1], [], []>} : vector<8x32xbf16>, vector<32x32xbf16>, vector<8x32xf32> -> vector<8x32xf32>
    %231 = arith.addf %222, %230 : vector<8x32xf32>
    %cst_67 = arith.constant dense<0.000000e+00> : vector<8x32xf32>
    %232 = tpu.matmul %229, %6, %cst_67 {dimension_numbers = #tpu.dot_dimension_numbers<[1], [0], [0], [1], [0, 0, 1, 1], [], []>} : vector<8x32xbf16>, vector<32x32xbf16>, vector<8x32xf32> -> vector<8x32xf32>
    %233 = arith.addf %224, %232 : vector<8x32xf32>
    %cst_68 = arith.constant dense<0.000000e+00> : vector<8x32xf32>
    %234 = tpu.matmul %229, %8, %cst_68 {dimension_numbers = #tpu.dot_dimension_numbers<[1], [0], [0], [1], [0, 0, 1, 1], [], []>} : vector<8x32xbf16>, vector<32x32xbf16>, vector<8x32xf32> -> vector<8x32xf32>
    %235 = arith.addf %226, %234 : vector<8x32xf32>
    %cst_69 = arith.constant dense<0.000000e+00> : vector<8x32xf32>
    %236 = tpu.matmul %229, %10, %cst_69 {dimension_numbers = #tpu.dot_dimension_numbers<[1], [0], [0], [1], [0, 0, 1, 1], [], []>} : vector<8x32xbf16>, vector<32x32xbf16>, vector<8x32xf32> -> vector<8x32xf32>
    %237 = arith.addf %228, %236 : vector<8x32xf32>
    %238 = arith.negf %231 : vector<8x32xf32>
    %239 = math.exp %238 : vector<8x32xf32>
    %cst_70 = arith.constant 1.000000e+00 : f32
    %240 = vector.broadcast %cst_70 : f32 to vector<8x32xf32>
    %241 = arith.addf %240, %239 : vector<8x32xf32>
    %242 = arith.divf %240, %241 : vector<8x32xf32>
    %243 = arith.negf %233 : vector<8x32xf32>
    %244 = math.exp %243 : vector<8x32xf32>
    %cst_71 = arith.constant 1.000000e+00 : f32
    %245 = vector.broadcast %cst_71 : f32 to vector<8x32xf32>
    %246 = arith.addf %245, %244 : vector<8x32xf32>
    %247 = arith.divf %245, %246 : vector<8x32xf32>
    %248 = math.tanh %235 : vector<8x32xf32>
    %249 = arith.negf %237 : vector<8x32xf32>
    %250 = math.exp %249 : vector<8x32xf32>
    %cst_72 = arith.constant 1.000000e+00 : f32
    %251 = vector.broadcast %cst_72 : f32 to vector<8x32xf32>
    %252 = arith.addf %251, %250 : vector<8x32xf32>
    %253 = arith.divf %251, %252 : vector<8x32xf32>
    %254 = arith.mulf %247, %215 : vector<8x32xf32>
    %255 = arith.mulf %242, %248 : vector<8x32xf32>
    %256 = arith.addf %254, %255 : vector<8x32xf32>
    %257 = math.tanh %256 : vector<8x32xf32>
    %258 = arith.mulf %253, %257 : vector<8x32xf32>
    %c6_i32 = arith.constant 6 : i32
    %259 = arith.index_cast %c6_i32 : i32 to index
    %c0_73 = arith.constant 0 : index
    %c0_74 = arith.constant 0 : index
    %c0_75 = arith.constant 0 : index
    %260 = vector.load %arg2[%259, %c0_73, %c0_74, %c0_75] : memref<8x4x8x32xf32, #tpu.memory_space<vmem>>, vector<1x4x8x32xf32>
    %261 = vector.shape_cast %260 : vector<1x4x8x32xf32> to vector<4x8x32xf32>
    %262 = vector.extract_strided_slice %261 {offsets = [0, 0, 0], sizes = [1, 8, 32], strides = [1, 1, 1]} : vector<4x8x32xf32> to vector<1x8x32xf32>
    %263 = vector.shape_cast %262 : vector<1x8x32xf32> to vector<8x32xf32>
    %264 = vector.extract_strided_slice %261 {offsets = [1, 0, 0], sizes = [1, 8, 32], strides = [1, 1, 1]} : vector<4x8x32xf32> to vector<1x8x32xf32>
    %265 = vector.shape_cast %264 : vector<1x8x32xf32> to vector<8x32xf32>
    %266 = vector.extract_strided_slice %261 {offsets = [2, 0, 0], sizes = [1, 8, 32], strides = [1, 1, 1]} : vector<4x8x32xf32> to vector<1x8x32xf32>
    %267 = vector.shape_cast %266 : vector<1x8x32xf32> to vector<8x32xf32>
    %268 = vector.extract_strided_slice %261 {offsets = [3, 0, 0], sizes = [1, 8, 32], strides = [1, 1, 1]} : vector<4x8x32xf32> to vector<1x8x32xf32>
    %269 = vector.shape_cast %268 : vector<1x8x32xf32> to vector<8x32xf32>
    %270 = arith.truncf %258 : vector<8x32xf32> to vector<8x32xbf16>
    %cst_76 = arith.constant dense<0.000000e+00> : vector<8x32xf32>
    %271 = tpu.matmul %270, %4, %cst_76 {dimension_numbers = #tpu.dot_dimension_numbers<[1], [0], [0], [1], [0, 0, 1, 1], [], []>} : vector<8x32xbf16>, vector<32x32xbf16>, vector<8x32xf32> -> vector<8x32xf32>
    %272 = arith.addf %263, %271 : vector<8x32xf32>
    %cst_77 = arith.constant dense<0.000000e+00> : vector<8x32xf32>
    %273 = tpu.matmul %270, %6, %cst_77 {dimension_numbers = #tpu.dot_dimension_numbers<[1], [0], [0], [1], [0, 0, 1, 1], [], []>} : vector<8x32xbf16>, vector<32x32xbf16>, vector<8x32xf32> -> vector<8x32xf32>
    %274 = arith.addf %265, %273 : vector<8x32xf32>
    %cst_78 = arith.constant dense<0.000000e+00> : vector<8x32xf32>
    %275 = tpu.matmul %270, %8, %cst_78 {dimension_numbers = #tpu.dot_dimension_numbers<[1], [0], [0], [1], [0, 0, 1, 1], [], []>} : vector<8x32xbf16>, vector<32x32xbf16>, vector<8x32xf32> -> vector<8x32xf32>
    %276 = arith.addf %267, %275 : vector<8x32xf32>
    %cst_79 = arith.constant dense<0.000000e+00> : vector<8x32xf32>
    %277 = tpu.matmul %270, %10, %cst_79 {dimension_numbers = #tpu.dot_dimension_numbers<[1], [0], [0], [1], [0, 0, 1, 1], [], []>} : vector<8x32xbf16>, vector<32x32xbf16>, vector<8x32xf32> -> vector<8x32xf32>
    %278 = arith.addf %269, %277 : vector<8x32xf32>
    %279 = arith.negf %272 : vector<8x32xf32>
    %280 = math.exp %279 : vector<8x32xf32>
    %cst_80 = arith.constant 1.000000e+00 : f32
    %281 = vector.broadcast %cst_80 : f32 to vector<8x32xf32>
    %282 = arith.addf %281, %280 : vector<8x32xf32>
    %283 = arith.divf %281, %282 : vector<8x32xf32>
    %284 = arith.negf %274 : vector<8x32xf32>
    %285 = math.exp %284 : vector<8x32xf32>
    %cst_81 = arith.constant 1.000000e+00 : f32
    %286 = vector.broadcast %cst_81 : f32 to vector<8x32xf32>
    %287 = arith.addf %286, %285 : vector<8x32xf32>
    %288 = arith.divf %286, %287 : vector<8x32xf32>
    %289 = math.tanh %276 : vector<8x32xf32>
    %290 = arith.negf %278 : vector<8x32xf32>
    %291 = math.exp %290 : vector<8x32xf32>
    %cst_82 = arith.constant 1.000000e+00 : f32
    %292 = vector.broadcast %cst_82 : f32 to vector<8x32xf32>
    %293 = arith.addf %292, %291 : vector<8x32xf32>
    %294 = arith.divf %292, %293 : vector<8x32xf32>
    %295 = arith.mulf %288, %256 : vector<8x32xf32>
    %296 = arith.mulf %283, %289 : vector<8x32xf32>
    %297 = arith.addf %295, %296 : vector<8x32xf32>
    %298 = math.tanh %297 : vector<8x32xf32>
    %299 = arith.mulf %294, %298 : vector<8x32xf32>
    %c7_i32 = arith.constant 7 : i32
    %300 = arith.index_cast %c7_i32 : i32 to index
    %c0_83 = arith.constant 0 : index
    %c0_84 = arith.constant 0 : index
    %c0_85 = arith.constant 0 : index
    %301 = vector.load %arg2[%300, %c0_83, %c0_84, %c0_85] : memref<8x4x8x32xf32, #tpu.memory_space<vmem>>, vector<1x4x8x32xf32>
    %302 = vector.shape_cast %301 : vector<1x4x8x32xf32> to vector<4x8x32xf32>
    %303 = vector.extract_strided_slice %302 {offsets = [0, 0, 0], sizes = [1, 8, 32], strides = [1, 1, 1]} : vector<4x8x32xf32> to vector<1x8x32xf32>
    %304 = vector.shape_cast %303 : vector<1x8x32xf32> to vector<8x32xf32>
    %305 = vector.extract_strided_slice %302 {offsets = [1, 0, 0], sizes = [1, 8, 32], strides = [1, 1, 1]} : vector<4x8x32xf32> to vector<1x8x32xf32>
    %306 = vector.shape_cast %305 : vector<1x8x32xf32> to vector<8x32xf32>
    %307 = vector.extract_strided_slice %302 {offsets = [2, 0, 0], sizes = [1, 8, 32], strides = [1, 1, 1]} : vector<4x8x32xf32> to vector<1x8x32xf32>
    %308 = vector.shape_cast %307 : vector<1x8x32xf32> to vector<8x32xf32>
    %309 = vector.extract_strided_slice %302 {offsets = [3, 0, 0], sizes = [1, 8, 32], strides = [1, 1, 1]} : vector<4x8x32xf32> to vector<1x8x32xf32>
    %310 = vector.shape_cast %309 : vector<1x8x32xf32> to vector<8x32xf32>
    %311 = arith.truncf %299 : vector<8x32xf32> to vector<8x32xbf16>
    %cst_86 = arith.constant dense<0.000000e+00> : vector<8x32xf32>
    %312 = tpu.matmul %311, %4, %cst_86 {dimension_numbers = #tpu.dot_dimension_numbers<[1], [0], [0], [1], [0, 0, 1, 1], [], []>} : vector<8x32xbf16>, vector<32x32xbf16>, vector<8x32xf32> -> vector<8x32xf32>
    %313 = arith.addf %304, %312 : vector<8x32xf32>
    %cst_87 = arith.constant dense<0.000000e+00> : vector<8x32xf32>
    %314 = tpu.matmul %311, %6, %cst_87 {dimension_numbers = #tpu.dot_dimension_numbers<[1], [0], [0], [1], [0, 0, 1, 1], [], []>} : vector<8x32xbf16>, vector<32x32xbf16>, vector<8x32xf32> -> vector<8x32xf32>
    %315 = arith.addf %306, %314 : vector<8x32xf32>
    %cst_88 = arith.constant dense<0.000000e+00> : vector<8x32xf32>
    %316 = tpu.matmul %311, %8, %cst_88 {dimension_numbers = #tpu.dot_dimension_numbers<[1], [0], [0], [1], [0, 0, 1, 1], [], []>} : vector<8x32xbf16>, vector<32x32xbf16>, vector<8x32xf32> -> vector<8x32xf32>
    %317 = arith.addf %308, %316 : vector<8x32xf32>
    %cst_89 = arith.constant dense<0.000000e+00> : vector<8x32xf32>
    %318 = tpu.matmul %311, %10, %cst_89 {dimension_numbers = #tpu.dot_dimension_numbers<[1], [0], [0], [1], [0, 0, 1, 1], [], []>} : vector<8x32xbf16>, vector<32x32xbf16>, vector<8x32xf32> -> vector<8x32xf32>
    %319 = arith.addf %310, %318 : vector<8x32xf32>
    %320 = arith.negf %313 : vector<8x32xf32>
    %321 = math.exp %320 : vector<8x32xf32>
    %cst_90 = arith.constant 1.000000e+00 : f32
    %322 = vector.broadcast %cst_90 : f32 to vector<8x32xf32>
    %323 = arith.addf %322, %321 : vector<8x32xf32>
    %324 = arith.divf %322, %323 : vector<8x32xf32>
    %325 = arith.negf %315 : vector<8x32xf32>
    %326 = math.exp %325 : vector<8x32xf32>
    %cst_91 = arith.constant 1.000000e+00 : f32
    %327 = vector.broadcast %cst_91 : f32 to vector<8x32xf32>
    %328 = arith.addf %327, %326 : vector<8x32xf32>
    %329 = arith.divf %327, %328 : vector<8x32xf32>
    %330 = math.tanh %317 : vector<8x32xf32>
    %331 = arith.negf %319 : vector<8x32xf32>
    %332 = math.exp %331 : vector<8x32xf32>
    %cst_92 = arith.constant 1.000000e+00 : f32
    %333 = vector.broadcast %cst_92 : f32 to vector<8x32xf32>
    %334 = arith.addf %333, %332 : vector<8x32xf32>
    %335 = arith.divf %333, %334 : vector<8x32xf32>
    %336 = arith.mulf %329, %297 : vector<8x32xf32>
    %337 = arith.mulf %324, %330 : vector<8x32xf32>
    %338 = arith.addf %336, %337 : vector<8x32xf32>
    %339 = math.tanh %338 : vector<8x32xf32>
    %340 = arith.mulf %335, %339 : vector<8x32xf32>
    %c8_i32 = arith.constant 8 : i32
    %c0_93 = arith.constant 0 : index
    %c0_94 = arith.constant 0 : index
    %341 = vector.load %arg5[%c0_93, %c0_94] : memref<8x32xf32, #tpu.memory_space<vmem>>, vector<8x32xf32>
    tpu.vector_store %arg5[%c0_93, %c0_94], %340 {strides = array<i32>} : memref<8x32xf32, #tpu.memory_space<vmem>>, vector<8x32xf32>,
    %c0_95 = arith.constant 0 : index
    %c0_96 = arith.constant 0 : index
    %342 = vector.load %arg6[%c0_95, %c0_96] : memref<8x32xf32, #tpu.memory_space<vmem>>, vector<8x32xf32>
    tpu.vector_store %arg6[%c0_95, %c0_96], %338 {strides = array<i32>} : memref<8x32xf32, #tpu.memory_space<vmem>>, vector<8x32xf32>,
    %c0_i32_97 = arith.constant 0 : i32
    %343 = arith.cmpi eq, %arg1, %c0_i32_97 : i32
    %344 = arith.extui %343 : i1 to i32
    %c0_i32_98 = arith.constant 0 : i32
    %345 = arith.cmpi ne, %344, %c0_i32_98 : i32
    scf.if %345 {
      %c0_99 = arith.constant 0 : index
      %c0_100 = arith.constant 0 : index
      %346 = vector.load %arg4[%c0_99, %c0_100] : memref<8x32xf32, #tpu.memory_space<vmem>>, vector<8x32xf32>
      tpu.vector_store %arg4[%c0_99, %c0_100], %340 {strides = array<i32>} : memref<8x32xf32, #tpu.memory_space<vmem>>, vector<8x32xf32>,
    } else {
    }
    return
  }
  func.func @transform_0(%arg0: i32, %arg1: i32) -> (i32, i32, i32, i32) {
    %c0_i32 = arith.constant 0 : i32
    %c0_i32_0 = arith.constant 0 : i32
    %c0_i32_1 = arith.constant 0 : i32
    return %arg1, %c0_i32, %arg0, %c0_i32_0 : i32, i32, i32, i32
  }
  func.func @transform_1(%arg0: i32, %arg1: i32) -> (i32, i32, i32) {
    %c0_i32 = arith.constant 0 : i32
    %c0_i32_0 = arith.constant 0 : i32
    %c0_i32_1 = arith.constant 0 : i32
    %c0_i32_2 = arith.constant 0 : i32
    return %c0_i32, %c0_i32_0, %c0_i32_1 : i32, i32, i32
  }
  func.func @transform_2(%arg0: i32, %arg1: i32) -> (i32, i32) {
    %c0_i32 = arith.constant 0 : i32
    %c0_i32_0 = arith.constant 0 : i32
    return %arg0, %c0_i32 : i32, i32
  }
}

module attributes {stable_mosaic.version = 11 : i64} {
  func.func @_lstm_decoder_kernel(%arg0: i32, %arg1: i32, %arg2: memref<4x8x4xf32, #tpu.memory_space<vmem>>, %arg3: memref<4x4x4xbf16, #tpu.memory_space<vmem>>, %arg4: memref<8x8x4xf32, #tpu.memory_space<vmem>>, %arg5: memref<8x4xf32, #tpu.memory_space<vmem>>, %arg6: memref<8x4xf32, #tpu.memory_space<vmem>>) attributes {dimension_semantics = [#tpu.dimension_semantics<parallel>, #tpu.dimension_semantics<arbitrary>], iteration_bounds = array<i64: 1, 1>, scalar_prefetch = 0 : i64, scratch_operands = 2 : i64, tpu.core_type = #tpu.core_type<tc>, window_params = [{transform_indices = @transform_0, window_bounds = array<i64: 4, 8, 4>}, {pipeline_mode = #tpu.pipeline_mode<synchronous>, transform_indices = @transform_1, window_bounds = array<i64: 4, 4, 4>}, {transform_indices = @transform_2, window_bounds = array<i64: 8, 8, 4>}]} {
    %c0_i32 = arith.constant 0 : i32
    %0 = arith.cmpi eq, %arg1, %c0_i32 : i32
    %1 = arith.extui %0 : i1 to i32
    %c0_i32_0 = arith.constant 0 : i32
    %2 = arith.cmpi ne, %1, %c0_i32_0 : i32
    scf.if %2 {
      %cst_92 = arith.constant 0.000000e+00 : f32
      %296 = vector.broadcast %cst_92 : f32 to vector<8x4xf32>
      %c0_93 = arith.constant 0 : index
      %c0_94 = arith.constant 0 : index
      %297 = vector.load %arg5[%c0_93, %c0_94] : memref<8x4xf32, #tpu.memory_space<vmem>>, vector<8x4xf32>
      tpu.vector_store %arg5[%c0_93, %c0_94], %296 {strides = array<i32>} : memref<8x4xf32, #tpu.memory_space<vmem>>, vector<8x4xf32>,
      %cst_95 = arith.constant 0.000000e+00 : f32
      %298 = vector.broadcast %cst_95 : f32 to vector<8x4xf32>
      %c0_96 = arith.constant 0 : index
      %c0_97 = arith.constant 0 : index
      %299 = vector.load %arg6[%c0_96, %c0_97] : memref<8x4xf32, #tpu.memory_space<vmem>>, vector<8x4xf32>
      tpu.vector_store %arg6[%c0_96, %c0_97], %298 {strides = array<i32>} : memref<8x4xf32, #tpu.memory_space<vmem>>, vector<8x4xf32>,
    } else {
    }
    %c0 = arith.constant 0 : index
    %c0_1 = arith.constant 0 : index
    %c0_2 = arith.constant 0 : index
    %3 = vector.load %arg3[%c0, %c0_1, %c0_2] : memref<4x4x4xbf16, #tpu.memory_space<vmem>>, vector<1x4x4xbf16>
    %4 = vector.shape_cast %3 : vector<1x4x4xbf16> to vector<4x4xbf16>
    %c1 = arith.constant 1 : index
    %c0_3 = arith.constant 0 : index
    %c0_4 = arith.constant 0 : index
    %5 = vector.load %arg3[%c1, %c0_3, %c0_4] : memref<4x4x4xbf16, #tpu.memory_space<vmem>>, vector<1x4x4xbf16>
    %6 = vector.shape_cast %5 : vector<1x4x4xbf16> to vector<4x4xbf16>
    %c2 = arith.constant 2 : index
    %c0_5 = arith.constant 0 : index
    %c0_6 = arith.constant 0 : index
    %7 = vector.load %arg3[%c2, %c0_5, %c0_6] : memref<4x4x4xbf16, #tpu.memory_space<vmem>>, vector<1x4x4xbf16>
    %8 = vector.shape_cast %7 : vector<1x4x4xbf16> to vector<4x4xbf16>
    %c3 = arith.constant 3 : index
    %c0_7 = arith.constant 0 : index
    %c0_8 = arith.constant 0 : index
    %9 = vector.load %arg3[%c3, %c0_7, %c0_8] : memref<4x4x4xbf16, #tpu.memory_space<vmem>>, vector<1x4x4xbf16>
    %10 = vector.shape_cast %9 : vector<1x4x4xbf16> to vector<4x4xbf16>
    %c0_9 = arith.constant 0 : index
    %c0_10 = arith.constant 0 : index
    %c0_11 = arith.constant 0 : index
    %11 = vector.load %arg2[%c0_9, %c0_10, %c0_11] : memref<4x8x4xf32, #tpu.memory_space<vmem>>, vector<4x8x4xf32>
    %12 = vector.extract_strided_slice %11 {offsets = [0, 0, 0], sizes = [1, 8, 4], strides = [1, 1, 1]} : vector<4x8x4xf32> to vector<1x8x4xf32>
    %13 = vector.shape_cast %12 : vector<1x8x4xf32> to vector<8x4xf32>
    %14 = vector.extract_strided_slice %11 {offsets = [1, 0, 0], sizes = [1, 8, 4], strides = [1, 1, 1]} : vector<4x8x4xf32> to vector<1x8x4xf32>
    %15 = vector.shape_cast %14 : vector<1x8x4xf32> to vector<8x4xf32>
    %16 = vector.extract_strided_slice %11 {offsets = [2, 0, 0], sizes = [1, 8, 4], strides = [1, 1, 1]} : vector<4x8x4xf32> to vector<1x8x4xf32>
    %17 = vector.shape_cast %16 : vector<1x8x4xf32> to vector<8x4xf32>
    %18 = vector.extract_strided_slice %11 {offsets = [3, 0, 0], sizes = [1, 8, 4], strides = [1, 1, 1]} : vector<4x8x4xf32> to vector<1x8x4xf32>
    %19 = vector.shape_cast %18 : vector<1x8x4xf32> to vector<8x4xf32>
    %c0_12 = arith.constant 0 : index
    %c0_13 = arith.constant 0 : index
    %20 = vector.load %arg5[%c0_12, %c0_13] : memref<8x4xf32, #tpu.memory_space<vmem>>, vector<8x4xf32>
    %c0_14 = arith.constant 0 : index
    %c0_15 = arith.constant 0 : index
    %21 = vector.load %arg6[%c0_14, %c0_15] : memref<8x4xf32, #tpu.memory_space<vmem>>, vector<8x4xf32>
    %c0_i32_16 = arith.constant 0 : i32
    %22 = arith.truncf %20 : vector<8x4xf32> to vector<8x4xbf16>
    %cst = arith.constant dense<0.000000e+00> : vector<8x4xf32>
    %23 = tpu.matmul %22, %4, %cst {dimension_numbers = #tpu.dot_dimension_numbers<[1], [0], [0], [1], [0, 0, 1, 1], [], []>} : vector<8x4xbf16>, vector<4x4xbf16>, vector<8x4xf32> -> vector<8x4xf32>
    %24 = arith.addf %13, %23 : vector<8x4xf32>
    %cst_17 = arith.constant dense<0.000000e+00> : vector<8x4xf32>
    %25 = tpu.matmul %22, %6, %cst_17 {dimension_numbers = #tpu.dot_dimension_numbers<[1], [0], [0], [1], [0, 0, 1, 1], [], []>} : vector<8x4xbf16>, vector<4x4xbf16>, vector<8x4xf32> -> vector<8x4xf32>
    %26 = arith.addf %15, %25 : vector<8x4xf32>
    %cst_18 = arith.constant dense<0.000000e+00> : vector<8x4xf32>
    %27 = tpu.matmul %22, %8, %cst_18 {dimension_numbers = #tpu.dot_dimension_numbers<[1], [0], [0], [1], [0, 0, 1, 1], [], []>} : vector<8x4xbf16>, vector<4x4xbf16>, vector<8x4xf32> -> vector<8x4xf32>
    %28 = arith.addf %17, %27 : vector<8x4xf32>
    %cst_19 = arith.constant dense<0.000000e+00> : vector<8x4xf32>
    %29 = tpu.matmul %22, %10, %cst_19 {dimension_numbers = #tpu.dot_dimension_numbers<[1], [0], [0], [1], [0, 0, 1, 1], [], []>} : vector<8x4xbf16>, vector<4x4xbf16>, vector<8x4xf32> -> vector<8x4xf32>
    %30 = arith.addf %19, %29 : vector<8x4xf32>
    %31 = arith.negf %24 : vector<8x4xf32>
    %32 = math.exp %31 : vector<8x4xf32>
    %cst_20 = arith.constant 1.000000e+00 : f32
    %33 = vector.broadcast %cst_20 : f32 to vector<8x4xf32>
    %34 = arith.addf %33, %32 : vector<8x4xf32>
    %35 = arith.divf %33, %34 : vector<8x4xf32>
    %36 = arith.negf %26 : vector<8x4xf32>
    %37 = math.exp %36 : vector<8x4xf32>
    %cst_21 = arith.constant 1.000000e+00 : f32
    %38 = vector.broadcast %cst_21 : f32 to vector<8x4xf32>
    %39 = arith.addf %38, %37 : vector<8x4xf32>
    %40 = arith.divf %38, %39 : vector<8x4xf32>
    %41 = math.tanh %28 : vector<8x4xf32>
    %42 = arith.negf %30 : vector<8x4xf32>
    %43 = math.exp %42 : vector<8x4xf32>
    %cst_22 = arith.constant 1.000000e+00 : f32
    %44 = vector.broadcast %cst_22 : f32 to vector<8x4xf32>
    %45 = arith.addf %44, %43 : vector<8x4xf32>
    %46 = arith.divf %44, %45 : vector<8x4xf32>
    %47 = arith.mulf %40, %21 : vector<8x4xf32>
    %48 = arith.mulf %35, %41 : vector<8x4xf32>
    %49 = arith.addf %47, %48 : vector<8x4xf32>
    %50 = math.tanh %49 : vector<8x4xf32>
    %51 = arith.mulf %46, %50 : vector<8x4xf32>
    %52 = arith.index_cast %c0_i32_16 : i32 to index
    %c0_23 = arith.constant 0 : index
    %c0_24 = arith.constant 0 : index
    %53 = vector.load %arg4[%52, %c0_23, %c0_24] : memref<8x8x4xf32, #tpu.memory_space<vmem>>, vector<1x8x4xf32>
    %54 = vector.shape_cast %53 : vector<1x8x4xf32> to vector<8x4xf32>
    %55 = vector.shape_cast %51 : vector<8x4xf32> to vector<1x8x4xf32>
    tpu.vector_store %arg4[%52, %c0_23, %c0_24], %55 {strides = array<i32>} : memref<8x8x4xf32, #tpu.memory_space<vmem>>, vector<1x8x4xf32>,
    %c1_i32 = arith.constant 1 : i32
    %56 = arith.truncf %51 : vector<8x4xf32> to vector<8x4xbf16>
    %cst_25 = arith.constant dense<0.000000e+00> : vector<8x4xf32>
    %57 = tpu.matmul %56, %4, %cst_25 {dimension_numbers = #tpu.dot_dimension_numbers<[1], [0], [0], [1], [0, 0, 1, 1], [], []>} : vector<8x4xbf16>, vector<4x4xbf16>, vector<8x4xf32> -> vector<8x4xf32>
    %58 = arith.addf %13, %57 : vector<8x4xf32>
    %cst_26 = arith.constant dense<0.000000e+00> : vector<8x4xf32>
    %59 = tpu.matmul %56, %6, %cst_26 {dimension_numbers = #tpu.dot_dimension_numbers<[1], [0], [0], [1], [0, 0, 1, 1], [], []>} : vector<8x4xbf16>, vector<4x4xbf16>, vector<8x4xf32> -> vector<8x4xf32>
    %60 = arith.addf %15, %59 : vector<8x4xf32>
    %cst_27 = arith.constant dense<0.000000e+00> : vector<8x4xf32>
    %61 = tpu.matmul %56, %8, %cst_27 {dimension_numbers = #tpu.dot_dimension_numbers<[1], [0], [0], [1], [0, 0, 1, 1], [], []>} : vector<8x4xbf16>, vector<4x4xbf16>, vector<8x4xf32> -> vector<8x4xf32>
    %62 = arith.addf %17, %61 : vector<8x4xf32>
    %cst_28 = arith.constant dense<0.000000e+00> : vector<8x4xf32>
    %63 = tpu.matmul %56, %10, %cst_28 {dimension_numbers = #tpu.dot_dimension_numbers<[1], [0], [0], [1], [0, 0, 1, 1], [], []>} : vector<8x4xbf16>, vector<4x4xbf16>, vector<8x4xf32> -> vector<8x4xf32>
    %64 = arith.addf %19, %63 : vector<8x4xf32>
    %65 = arith.negf %58 : vector<8x4xf32>
    %66 = math.exp %65 : vector<8x4xf32>
    %cst_29 = arith.constant 1.000000e+00 : f32
    %67 = vector.broadcast %cst_29 : f32 to vector<8x4xf32>
    %68 = arith.addf %67, %66 : vector<8x4xf32>
    %69 = arith.divf %67, %68 : vector<8x4xf32>
    %70 = arith.negf %60 : vector<8x4xf32>
    %71 = math.exp %70 : vector<8x4xf32>
    %cst_30 = arith.constant 1.000000e+00 : f32
    %72 = vector.broadcast %cst_30 : f32 to vector<8x4xf32>
    %73 = arith.addf %72, %71 : vector<8x4xf32>
    %74 = arith.divf %72, %73 : vector<8x4xf32>
    %75 = math.tanh %62 : vector<8x4xf32>
    %76 = arith.negf %64 : vector<8x4xf32>
    %77 = math.exp %76 : vector<8x4xf32>
    %cst_31 = arith.constant 1.000000e+00 : f32
    %78 = vector.broadcast %cst_31 : f32 to vector<8x4xf32>
    %79 = arith.addf %78, %77 : vector<8x4xf32>
    %80 = arith.divf %78, %79 : vector<8x4xf32>
    %81 = arith.mulf %74, %49 : vector<8x4xf32>
    %82 = arith.mulf %69, %75 : vector<8x4xf32>
    %83 = arith.addf %81, %82 : vector<8x4xf32>
    %84 = math.tanh %83 : vector<8x4xf32>
    %85 = arith.mulf %80, %84 : vector<8x4xf32>
    %86 = arith.index_cast %c1_i32 : i32 to index
    %c0_32 = arith.constant 0 : index
    %c0_33 = arith.constant 0 : index
    %87 = vector.load %arg4[%86, %c0_32, %c0_33] : memref<8x8x4xf32, #tpu.memory_space<vmem>>, vector<1x8x4xf32>
    %88 = vector.shape_cast %87 : vector<1x8x4xf32> to vector<8x4xf32>
    %89 = vector.shape_cast %85 : vector<8x4xf32> to vector<1x8x4xf32>
    tpu.vector_store %arg4[%86, %c0_32, %c0_33], %89 {strides = array<i32>} : memref<8x8x4xf32, #tpu.memory_space<vmem>>, vector<1x8x4xf32>,
    %c2_i32 = arith.constant 2 : i32
    %90 = arith.truncf %85 : vector<8x4xf32> to vector<8x4xbf16>
    %cst_34 = arith.constant dense<0.000000e+00> : vector<8x4xf32>
    %91 = tpu.matmul %90, %4, %cst_34 {dimension_numbers = #tpu.dot_dimension_numbers<[1], [0], [0], [1], [0, 0, 1, 1], [], []>} : vector<8x4xbf16>, vector<4x4xbf16>, vector<8x4xf32> -> vector<8x4xf32>
    %92 = arith.addf %13, %91 : vector<8x4xf32>
    %cst_35 = arith.constant dense<0.000000e+00> : vector<8x4xf32>
    %93 = tpu.matmul %90, %6, %cst_35 {dimension_numbers = #tpu.dot_dimension_numbers<[1], [0], [0], [1], [0, 0, 1, 1], [], []>} : vector<8x4xbf16>, vector<4x4xbf16>, vector<8x4xf32> -> vector<8x4xf32>
    %94 = arith.addf %15, %93 : vector<8x4xf32>
    %cst_36 = arith.constant dense<0.000000e+00> : vector<8x4xf32>
    %95 = tpu.matmul %90, %8, %cst_36 {dimension_numbers = #tpu.dot_dimension_numbers<[1], [0], [0], [1], [0, 0, 1, 1], [], []>} : vector<8x4xbf16>, vector<4x4xbf16>, vector<8x4xf32> -> vector<8x4xf32>
    %96 = arith.addf %17, %95 : vector<8x4xf32>
    %cst_37 = arith.constant dense<0.000000e+00> : vector<8x4xf32>
    %97 = tpu.matmul %90, %10, %cst_37 {dimension_numbers = #tpu.dot_dimension_numbers<[1], [0], [0], [1], [0, 0, 1, 1], [], []>} : vector<8x4xbf16>, vector<4x4xbf16>, vector<8x4xf32> -> vector<8x4xf32>
    %98 = arith.addf %19, %97 : vector<8x4xf32>
    %99 = arith.negf %92 : vector<8x4xf32>
    %100 = math.exp %99 : vector<8x4xf32>
    %cst_38 = arith.constant 1.000000e+00 : f32
    %101 = vector.broadcast %cst_38 : f32 to vector<8x4xf32>
    %102 = arith.addf %101, %100 : vector<8x4xf32>
    %103 = arith.divf %101, %102 : vector<8x4xf32>
    %104 = arith.negf %94 : vector<8x4xf32>
    %105 = math.exp %104 : vector<8x4xf32>
    %cst_39 = arith.constant 1.000000e+00 : f32
    %106 = vector.broadcast %cst_39 : f32 to vector<8x4xf32>
    %107 = arith.addf %106, %105 : vector<8x4xf32>
    %108 = arith.divf %106, %107 : vector<8x4xf32>
    %109 = math.tanh %96 : vector<8x4xf32>
    %110 = arith.negf %98 : vector<8x4xf32>
    %111 = math.exp %110 : vector<8x4xf32>
    %cst_40 = arith.constant 1.000000e+00 : f32
    %112 = vector.broadcast %cst_40 : f32 to vector<8x4xf32>
    %113 = arith.addf %112, %111 : vector<8x4xf32>
    %114 = arith.divf %112, %113 : vector<8x4xf32>
    %115 = arith.mulf %108, %83 : vector<8x4xf32>
    %116 = arith.mulf %103, %109 : vector<8x4xf32>
    %117 = arith.addf %115, %116 : vector<8x4xf32>
    %118 = math.tanh %117 : vector<8x4xf32>
    %119 = arith.mulf %114, %118 : vector<8x4xf32>
    %120 = arith.index_cast %c2_i32 : i32 to index
    %c0_41 = arith.constant 0 : index
    %c0_42 = arith.constant 0 : index
    %121 = vector.load %arg4[%120, %c0_41, %c0_42] : memref<8x8x4xf32, #tpu.memory_space<vmem>>, vector<1x8x4xf32>
    %122 = vector.shape_cast %121 : vector<1x8x4xf32> to vector<8x4xf32>
    %123 = vector.shape_cast %119 : vector<8x4xf32> to vector<1x8x4xf32>
    tpu.vector_store %arg4[%120, %c0_41, %c0_42], %123 {strides = array<i32>} : memref<8x8x4xf32, #tpu.memory_space<vmem>>, vector<1x8x4xf32>,
    %c3_i32 = arith.constant 3 : i32
    %124 = arith.truncf %119 : vector<8x4xf32> to vector<8x4xbf16>
    %cst_43 = arith.constant dense<0.000000e+00> : vector<8x4xf32>
    %125 = tpu.matmul %124, %4, %cst_43 {dimension_numbers = #tpu.dot_dimension_numbers<[1], [0], [0], [1], [0, 0, 1, 1], [], []>} : vector<8x4xbf16>, vector<4x4xbf16>, vector<8x4xf32> -> vector<8x4xf32>
    %126 = arith.addf %13, %125 : vector<8x4xf32>
    %cst_44 = arith.constant dense<0.000000e+00> : vector<8x4xf32>
    %127 = tpu.matmul %124, %6, %cst_44 {dimension_numbers = #tpu.dot_dimension_numbers<[1], [0], [0], [1], [0, 0, 1, 1], [], []>} : vector<8x4xbf16>, vector<4x4xbf16>, vector<8x4xf32> -> vector<8x4xf32>
    %128 = arith.addf %15, %127 : vector<8x4xf32>
    %cst_45 = arith.constant dense<0.000000e+00> : vector<8x4xf32>
    %129 = tpu.matmul %124, %8, %cst_45 {dimension_numbers = #tpu.dot_dimension_numbers<[1], [0], [0], [1], [0, 0, 1, 1], [], []>} : vector<8x4xbf16>, vector<4x4xbf16>, vector<8x4xf32> -> vector<8x4xf32>
    %130 = arith.addf %17, %129 : vector<8x4xf32>
    %cst_46 = arith.constant dense<0.000000e+00> : vector<8x4xf32>
    %131 = tpu.matmul %124, %10, %cst_46 {dimension_numbers = #tpu.dot_dimension_numbers<[1], [0], [0], [1], [0, 0, 1, 1], [], []>} : vector<8x4xbf16>, vector<4x4xbf16>, vector<8x4xf32> -> vector<8x4xf32>
    %132 = arith.addf %19, %131 : vector<8x4xf32>
    %133 = arith.negf %126 : vector<8x4xf32>
    %134 = math.exp %133 : vector<8x4xf32>
    %cst_47 = arith.constant 1.000000e+00 : f32
    %135 = vector.broadcast %cst_47 : f32 to vector<8x4xf32>
    %136 = arith.addf %135, %134 : vector<8x4xf32>
    %137 = arith.divf %135, %136 : vector<8x4xf32>
    %138 = arith.negf %128 : vector<8x4xf32>
    %139 = math.exp %138 : vector<8x4xf32>
    %cst_48 = arith.constant 1.000000e+00 : f32
    %140 = vector.broadcast %cst_48 : f32 to vector<8x4xf32>
    %141 = arith.addf %140, %139 : vector<8x4xf32>
    %142 = arith.divf %140, %141 : vector<8x4xf32>
    %143 = math.tanh %130 : vector<8x4xf32>
    %144 = arith.negf %132 : vector<8x4xf32>
    %145 = math.exp %144 : vector<8x4xf32>
    %cst_49 = arith.constant 1.000000e+00 : f32
    %146 = vector.broadcast %cst_49 : f32 to vector<8x4xf32>
    %147 = arith.addf %146, %145 : vector<8x4xf32>
    %148 = arith.divf %146, %147 : vector<8x4xf32>
    %149 = arith.mulf %142, %117 : vector<8x4xf32>
    %150 = arith.mulf %137, %143 : vector<8x4xf32>
    %151 = arith.addf %149, %150 : vector<8x4xf32>
    %152 = math.tanh %151 : vector<8x4xf32>
    %153 = arith.mulf %148, %152 : vector<8x4xf32>
    %154 = arith.index_cast %c3_i32 : i32 to index
    %c0_50 = arith.constant 0 : index
    %c0_51 = arith.constant 0 : index
    %155 = vector.load %arg4[%154, %c0_50, %c0_51] : memref<8x8x4xf32, #tpu.memory_space<vmem>>, vector<1x8x4xf32>
    %156 = vector.shape_cast %155 : vector<1x8x4xf32> to vector<8x4xf32>
    %157 = vector.shape_cast %153 : vector<8x4xf32> to vector<1x8x4xf32>
    tpu.vector_store %arg4[%154, %c0_50, %c0_51], %157 {strides = array<i32>} : memref<8x8x4xf32, #tpu.memory_space<vmem>>, vector<1x8x4xf32>,
    %c4_i32 = arith.constant 4 : i32
    %158 = arith.truncf %153 : vector<8x4xf32> to vector<8x4xbf16>
    %cst_52 = arith.constant dense<0.000000e+00> : vector<8x4xf32>
    %159 = tpu.matmul %158, %4, %cst_52 {dimension_numbers = #tpu.dot_dimension_numbers<[1], [0], [0], [1], [0, 0, 1, 1], [], []>} : vector<8x4xbf16>, vector<4x4xbf16>, vector<8x4xf32> -> vector<8x4xf32>
    %160 = arith.addf %13, %159 : vector<8x4xf32>
    %cst_53 = arith.constant dense<0.000000e+00> : vector<8x4xf32>
    %161 = tpu.matmul %158, %6, %cst_53 {dimension_numbers = #tpu.dot_dimension_numbers<[1], [0], [0], [1], [0, 0, 1, 1], [], []>} : vector<8x4xbf16>, vector<4x4xbf16>, vector<8x4xf32> -> vector<8x4xf32>
    %162 = arith.addf %15, %161 : vector<8x4xf32>
    %cst_54 = arith.constant dense<0.000000e+00> : vector<8x4xf32>
    %163 = tpu.matmul %158, %8, %cst_54 {dimension_numbers = #tpu.dot_dimension_numbers<[1], [0], [0], [1], [0, 0, 1, 1], [], []>} : vector<8x4xbf16>, vector<4x4xbf16>, vector<8x4xf32> -> vector<8x4xf32>
    %164 = arith.addf %17, %163 : vector<8x4xf32>
    %cst_55 = arith.constant dense<0.000000e+00> : vector<8x4xf32>
    %165 = tpu.matmul %158, %10, %cst_55 {dimension_numbers = #tpu.dot_dimension_numbers<[1], [0], [0], [1], [0, 0, 1, 1], [], []>} : vector<8x4xbf16>, vector<4x4xbf16>, vector<8x4xf32> -> vector<8x4xf32>
    %166 = arith.addf %19, %165 : vector<8x4xf32>
    %167 = arith.negf %160 : vector<8x4xf32>
    %168 = math.exp %167 : vector<8x4xf32>
    %cst_56 = arith.constant 1.000000e+00 : f32
    %169 = vector.broadcast %cst_56 : f32 to vector<8x4xf32>
    %170 = arith.addf %169, %168 : vector<8x4xf32>
    %171 = arith.divf %169, %170 : vector<8x4xf32>
    %172 = arith.negf %162 : vector<8x4xf32>
    %173 = math.exp %172 : vector<8x4xf32>
    %cst_57 = arith.constant 1.000000e+00 : f32
    %174 = vector.broadcast %cst_57 : f32 to vector<8x4xf32>
    %175 = arith.addf %174, %173 : vector<8x4xf32>
    %176 = arith.divf %174, %175 : vector<8x4xf32>
    %177 = math.tanh %164 : vector<8x4xf32>
    %178 = arith.negf %166 : vector<8x4xf32>
    %179 = math.exp %178 : vector<8x4xf32>
    %cst_58 = arith.constant 1.000000e+00 : f32
    %180 = vector.broadcast %cst_58 : f32 to vector<8x4xf32>
    %181 = arith.addf %180, %179 : vector<8x4xf32>
    %182 = arith.divf %180, %181 : vector<8x4xf32>
    %183 = arith.mulf %176, %151 : vector<8x4xf32>
    %184 = arith.mulf %171, %177 : vector<8x4xf32>
    %185 = arith.addf %183, %184 : vector<8x4xf32>
    %186 = math.tanh %185 : vector<8x4xf32>
    %187 = arith.mulf %182, %186 : vector<8x4xf32>
    %188 = arith.index_cast %c4_i32 : i32 to index
    %c0_59 = arith.constant 0 : index
    %c0_60 = arith.constant 0 : index
    %189 = vector.load %arg4[%188, %c0_59, %c0_60] : memref<8x8x4xf32, #tpu.memory_space<vmem>>, vector<1x8x4xf32>
    %190 = vector.shape_cast %189 : vector<1x8x4xf32> to vector<8x4xf32>
    %191 = vector.shape_cast %187 : vector<8x4xf32> to vector<1x8x4xf32>
    tpu.vector_store %arg4[%188, %c0_59, %c0_60], %191 {strides = array<i32>} : memref<8x8x4xf32, #tpu.memory_space<vmem>>, vector<1x8x4xf32>,
    %c5_i32 = arith.constant 5 : i32
    %192 = arith.truncf %187 : vector<8x4xf32> to vector<8x4xbf16>
    %cst_61 = arith.constant dense<0.000000e+00> : vector<8x4xf32>
    %193 = tpu.matmul %192, %4, %cst_61 {dimension_numbers = #tpu.dot_dimension_numbers<[1], [0], [0], [1], [0, 0, 1, 1], [], []>} : vector<8x4xbf16>, vector<4x4xbf16>, vector<8x4xf32> -> vector<8x4xf32>
    %194 = arith.addf %13, %193 : vector<8x4xf32>
    %cst_62 = arith.constant dense<0.000000e+00> : vector<8x4xf32>
    %195 = tpu.matmul %192, %6, %cst_62 {dimension_numbers = #tpu.dot_dimension_numbers<[1], [0], [0], [1], [0, 0, 1, 1], [], []>} : vector<8x4xbf16>, vector<4x4xbf16>, vector<8x4xf32> -> vector<8x4xf32>
    %196 = arith.addf %15, %195 : vector<8x4xf32>
    %cst_63 = arith.constant dense<0.000000e+00> : vector<8x4xf32>
    %197 = tpu.matmul %192, %8, %cst_63 {dimension_numbers = #tpu.dot_dimension_numbers<[1], [0], [0], [1], [0, 0, 1, 1], [], []>} : vector<8x4xbf16>, vector<4x4xbf16>, vector<8x4xf32> -> vector<8x4xf32>
    %198 = arith.addf %17, %197 : vector<8x4xf32>
    %cst_64 = arith.constant dense<0.000000e+00> : vector<8x4xf32>
    %199 = tpu.matmul %192, %10, %cst_64 {dimension_numbers = #tpu.dot_dimension_numbers<[1], [0], [0], [1], [0, 0, 1, 1], [], []>} : vector<8x4xbf16>, vector<4x4xbf16>, vector<8x4xf32> -> vector<8x4xf32>
    %200 = arith.addf %19, %199 : vector<8x4xf32>
    %201 = arith.negf %194 : vector<8x4xf32>
    %202 = math.exp %201 : vector<8x4xf32>
    %cst_65 = arith.constant 1.000000e+00 : f32
    %203 = vector.broadcast %cst_65 : f32 to vector<8x4xf32>
    %204 = arith.addf %203, %202 : vector<8x4xf32>
    %205 = arith.divf %203, %204 : vector<8x4xf32>
    %206 = arith.negf %196 : vector<8x4xf32>
    %207 = math.exp %206 : vector<8x4xf32>
    %cst_66 = arith.constant 1.000000e+00 : f32
    %208 = vector.broadcast %cst_66 : f32 to vector<8x4xf32>
    %209 = arith.addf %208, %207 : vector<8x4xf32>
    %210 = arith.divf %208, %209 : vector<8x4xf32>
    %211 = math.tanh %198 : vector<8x4xf32>
    %212 = arith.negf %200 : vector<8x4xf32>
    %213 = math.exp %212 : vector<8x4xf32>
    %cst_67 = arith.constant 1.000000e+00 : f32
    %214 = vector.broadcast %cst_67 : f32 to vector<8x4xf32>
    %215 = arith.addf %214, %213 : vector<8x4xf32>
    %216 = arith.divf %214, %215 : vector<8x4xf32>
    %217 = arith.mulf %210, %185 : vector<8x4xf32>
    %218 = arith.mulf %205, %211 : vector<8x4xf32>
    %219 = arith.addf %217, %218 : vector<8x4xf32>
    %220 = math.tanh %219 : vector<8x4xf32>
    %221 = arith.mulf %216, %220 : vector<8x4xf32>
    %222 = arith.index_cast %c5_i32 : i32 to index
    %c0_68 = arith.constant 0 : index
    %c0_69 = arith.constant 0 : index
    %223 = vector.load %arg4[%222, %c0_68, %c0_69] : memref<8x8x4xf32, #tpu.memory_space<vmem>>, vector<1x8x4xf32>
    %224 = vector.shape_cast %223 : vector<1x8x4xf32> to vector<8x4xf32>
    %225 = vector.shape_cast %221 : vector<8x4xf32> to vector<1x8x4xf32>
    tpu.vector_store %arg4[%222, %c0_68, %c0_69], %225 {strides = array<i32>} : memref<8x8x4xf32, #tpu.memory_space<vmem>>, vector<1x8x4xf32>,
    %c6_i32 = arith.constant 6 : i32
    %226 = arith.truncf %221 : vector<8x4xf32> to vector<8x4xbf16>
    %cst_70 = arith.constant dense<0.000000e+00> : vector<8x4xf32>
    %227 = tpu.matmul %226, %4, %cst_70 {dimension_numbers = #tpu.dot_dimension_numbers<[1], [0], [0], [1], [0, 0, 1, 1], [], []>} : vector<8x4xbf16>, vector<4x4xbf16>, vector<8x4xf32> -> vector<8x4xf32>
    %228 = arith.addf %13, %227 : vector<8x4xf32>
    %cst_71 = arith.constant dense<0.000000e+00> : vector<8x4xf32>
    %229 = tpu.matmul %226, %6, %cst_71 {dimension_numbers = #tpu.dot_dimension_numbers<[1], [0], [0], [1], [0, 0, 1, 1], [], []>} : vector<8x4xbf16>, vector<4x4xbf16>, vector<8x4xf32> -> vector<8x4xf32>
    %230 = arith.addf %15, %229 : vector<8x4xf32>
    %cst_72 = arith.constant dense<0.000000e+00> : vector<8x4xf32>
    %231 = tpu.matmul %226, %8, %cst_72 {dimension_numbers = #tpu.dot_dimension_numbers<[1], [0], [0], [1], [0, 0, 1, 1], [], []>} : vector<8x4xbf16>, vector<4x4xbf16>, vector<8x4xf32> -> vector<8x4xf32>
    %232 = arith.addf %17, %231 : vector<8x4xf32>
    %cst_73 = arith.constant dense<0.000000e+00> : vector<8x4xf32>
    %233 = tpu.matmul %226, %10, %cst_73 {dimension_numbers = #tpu.dot_dimension_numbers<[1], [0], [0], [1], [0, 0, 1, 1], [], []>} : vector<8x4xbf16>, vector<4x4xbf16>, vector<8x4xf32> -> vector<8x4xf32>
    %234 = arith.addf %19, %233 : vector<8x4xf32>
    %235 = arith.negf %228 : vector<8x4xf32>
    %236 = math.exp %235 : vector<8x4xf32>
    %cst_74 = arith.constant 1.000000e+00 : f32
    %237 = vector.broadcast %cst_74 : f32 to vector<8x4xf32>
    %238 = arith.addf %237, %236 : vector<8x4xf32>
    %239 = arith.divf %237, %238 : vector<8x4xf32>
    %240 = arith.negf %230 : vector<8x4xf32>
    %241 = math.exp %240 : vector<8x4xf32>
    %cst_75 = arith.constant 1.000000e+00 : f32
    %242 = vector.broadcast %cst_75 : f32 to vector<8x4xf32>
    %243 = arith.addf %242, %241 : vector<8x4xf32>
    %244 = arith.divf %242, %243 : vector<8x4xf32>
    %245 = math.tanh %232 : vector<8x4xf32>
    %246 = arith.negf %234 : vector<8x4xf32>
    %247 = math.exp %246 : vector<8x4xf32>
    %cst_76 = arith.constant 1.000000e+00 : f32
    %248 = vector.broadcast %cst_76 : f32 to vector<8x4xf32>
    %249 = arith.addf %248, %247 : vector<8x4xf32>
    %250 = arith.divf %248, %249 : vector<8x4xf32>
    %251 = arith.mulf %244, %219 : vector<8x4xf32>
    %252 = arith.mulf %239, %245 : vector<8x4xf32>
    %253 = arith.addf %251, %252 : vector<8x4xf32>
    %254 = math.tanh %253 : vector<8x4xf32>
    %255 = arith.mulf %250, %254 : vector<8x4xf32>
    %256 = arith.index_cast %c6_i32 : i32 to index
    %c0_77 = arith.constant 0 : index
    %c0_78 = arith.constant 0 : index
    %257 = vector.load %arg4[%256, %c0_77, %c0_78] : memref<8x8x4xf32, #tpu.memory_space<vmem>>, vector<1x8x4xf32>
    %258 = vector.shape_cast %257 : vector<1x8x4xf32> to vector<8x4xf32>
    %259 = vector.shape_cast %255 : vector<8x4xf32> to vector<1x8x4xf32>
    tpu.vector_store %arg4[%256, %c0_77, %c0_78], %259 {strides = array<i32>} : memref<8x8x4xf32, #tpu.memory_space<vmem>>, vector<1x8x4xf32>,
    %c7_i32 = arith.constant 7 : i32
    %260 = arith.truncf %255 : vector<8x4xf32> to vector<8x4xbf16>
    %cst_79 = arith.constant dense<0.000000e+00> : vector<8x4xf32>
    %261 = tpu.matmul %260, %4, %cst_79 {dimension_numbers = #tpu.dot_dimension_numbers<[1], [0], [0], [1], [0, 0, 1, 1], [], []>} : vector<8x4xbf16>, vector<4x4xbf16>, vector<8x4xf32> -> vector<8x4xf32>
    %262 = arith.addf %13, %261 : vector<8x4xf32>
    %cst_80 = arith.constant dense<0.000000e+00> : vector<8x4xf32>
    %263 = tpu.matmul %260, %6, %cst_80 {dimension_numbers = #tpu.dot_dimension_numbers<[1], [0], [0], [1], [0, 0, 1, 1], [], []>} : vector<8x4xbf16>, vector<4x4xbf16>, vector<8x4xf32> -> vector<8x4xf32>
    %264 = arith.addf %15, %263 : vector<8x4xf32>
    %cst_81 = arith.constant dense<0.000000e+00> : vector<8x4xf32>
    %265 = tpu.matmul %260, %8, %cst_81 {dimension_numbers = #tpu.dot_dimension_numbers<[1], [0], [0], [1], [0, 0, 1, 1], [], []>} : vector<8x4xbf16>, vector<4x4xbf16>, vector<8x4xf32> -> vector<8x4xf32>
    %266 = arith.addf %17, %265 : vector<8x4xf32>
    %cst_82 = arith.constant dense<0.000000e+00> : vector<8x4xf32>
    %267 = tpu.matmul %260, %10, %cst_82 {dimension_numbers = #tpu.dot_dimension_numbers<[1], [0], [0], [1], [0, 0, 1, 1], [], []>} : vector<8x4xbf16>, vector<4x4xbf16>, vector<8x4xf32> -> vector<8x4xf32>
    %268 = arith.addf %19, %267 : vector<8x4xf32>
    %269 = arith.negf %262 : vector<8x4xf32>
    %270 = math.exp %269 : vector<8x4xf32>
    %cst_83 = arith.constant 1.000000e+00 : f32
    %271 = vector.broadcast %cst_83 : f32 to vector<8x4xf32>
    %272 = arith.addf %271, %270 : vector<8x4xf32>
    %273 = arith.divf %271, %272 : vector<8x4xf32>
    %274 = arith.negf %264 : vector<8x4xf32>
    %275 = math.exp %274 : vector<8x4xf32>
    %cst_84 = arith.constant 1.000000e+00 : f32
    %276 = vector.broadcast %cst_84 : f32 to vector<8x4xf32>
    %277 = arith.addf %276, %275 : vector<8x4xf32>
    %278 = arith.divf %276, %277 : vector<8x4xf32>
    %279 = math.tanh %266 : vector<8x4xf32>
    %280 = arith.negf %268 : vector<8x4xf32>
    %281 = math.exp %280 : vector<8x4xf32>
    %cst_85 = arith.constant 1.000000e+00 : f32
    %282 = vector.broadcast %cst_85 : f32 to vector<8x4xf32>
    %283 = arith.addf %282, %281 : vector<8x4xf32>
    %284 = arith.divf %282, %283 : vector<8x4xf32>
    %285 = arith.mulf %278, %253 : vector<8x4xf32>
    %286 = arith.mulf %273, %279 : vector<8x4xf32>
    %287 = arith.addf %285, %286 : vector<8x4xf32>
    %288 = math.tanh %287 : vector<8x4xf32>
    %289 = arith.mulf %284, %288 : vector<8x4xf32>
    %290 = arith.index_cast %c7_i32 : i32 to index
    %c0_86 = arith.constant 0 : index
    %c0_87 = arith.constant 0 : index
    %291 = vector.load %arg4[%290, %c0_86, %c0_87] : memref<8x8x4xf32, #tpu.memory_space<vmem>>, vector<1x8x4xf32>
    %292 = vector.shape_cast %291 : vector<1x8x4xf32> to vector<8x4xf32>
    %293 = vector.shape_cast %289 : vector<8x4xf32> to vector<1x8x4xf32>
    tpu.vector_store %arg4[%290, %c0_86, %c0_87], %293 {strides = array<i32>} : memref<8x8x4xf32, #tpu.memory_space<vmem>>, vector<1x8x4xf32>,
    %c8_i32 = arith.constant 8 : i32
    %c0_88 = arith.constant 0 : index
    %c0_89 = arith.constant 0 : index
    %294 = vector.load %arg5[%c0_88, %c0_89] : memref<8x4xf32, #tpu.memory_space<vmem>>, vector<8x4xf32>
    tpu.vector_store %arg5[%c0_88, %c0_89], %289 {strides = array<i32>} : memref<8x4xf32, #tpu.memory_space<vmem>>, vector<8x4xf32>,
    %c0_90 = arith.constant 0 : index
    %c0_91 = arith.constant 0 : index
    %295 = vector.load %arg6[%c0_90, %c0_91] : memref<8x4xf32, #tpu.memory_space<vmem>>, vector<8x4xf32>
    tpu.vector_store %arg6[%c0_90, %c0_91], %287 {strides = array<i32>} : memref<8x4xf32, #tpu.memory_space<vmem>>, vector<8x4xf32>,
    return
  }
  func.func @transform_0(%arg0: i32, %arg1: i32) -> (i32, i32, i32) {
    %c0_i32 = arith.constant 0 : i32
    %c0_i32_0 = arith.constant 0 : i32
    %c0_i32_1 = arith.constant 0 : i32
    return %c0_i32, %arg0, %c0_i32_0 : i32, i32, i32
  }
  func.func @transform_1(%arg0: i32, %arg1: i32) -> (i32, i32, i32) {
    %c0_i32 = arith.constant 0 : i32
    %c0_i32_0 = arith.constant 0 : i32
    %c0_i32_1 = arith.constant 0 : i32
    %c0_i32_2 = arith.constant 0 : i32
    return %c0_i32, %c0_i32_0, %c0_i32_1 : i32, i32, i32
  }
  func.func @transform_2(%arg0: i32, %arg1: i32) -> (i32, i32, i32) {
    %c0_i32 = arith.constant 0 : i32
    %c0_i32_0 = arith.constant 0 : i32
    return %arg1, %arg0, %c0_i32 : i32, i32, i32
  }
}

</mosaic_0001>

<llo_original>
// kernel: timeseries_autoencoder_forward.2
$region0: #{timeseries_autoencoder_forward.2}
  #allocation0 [shape = 'u32[]', space=smem, size = 0x4, offset = 0x4, fixed_abs, tag = 'smem constant byte address 0x4 - core index']
  #allocation1 [shape = 'u32[144,128]{1,0:T(1,128)}', space=vmem, size = 0x12000, scoped, tag = 'internal scratch']
  #allocation2 [shape = 'f32[8,32]{1,0:T(8,128)}', space=vmem, size = 0x1000, scoped, tag = 'scratch operand']
  #allocation3 [shape = 'f32[8,32]{1,0:T(8,128)}', space=vmem, size = 0x1000, scoped, tag = 'scratch operand']
  %s0 = inlined_call_operand.vmem [shape: f32[8,4,8,32], index: 0, kind: input, shape index: {}]
  %s1 = inlined_call_operand.vmem [shape: bf16[4,32,32], index: 1, kind: input, shape index: {}]
  %s2 = inlined_call_operand.vmem [shape: f32[8,32], index: 2, kind: output, shape index: {}]
  %s3 = sld [smem:[#allocation0]]
  $region26: #{timeseries_autoencoder_forward.2} parent=0
    _
  %s5 = ssub.s32 1, %s3
  %s6 = scalar_select 0, %s5, %s3
  // Predicated region
  $region2: #{timeseries_autoencoder_forward.2} parent=0 // pred_check
    _
  $region3: #{timeseries_autoencoder_forward.2} parent=0 // pred_check_branch
    %8 = sbr.rel (0) target = $region5
  $region4: #{timeseries_autoencoder_forward.2} parent=0 // pred_region
    _
  $region5: #{timeseries_autoencoder_forward.2} parent=0 // pred_fallthru
    _
  // Predicated region
  $region6: #{timeseries_autoencoder_forward.2} parent=0 // pred_check
    _
  $region7: #{timeseries_autoencoder_forward.2} parent=0 // pred_check_branch
    %10 = sbr.rel (0) target = $region9
  $region8: #{timeseries_autoencoder_forward.2} parent=0 // pred_region
    _
  $region9: #{timeseries_autoencoder_forward.2} parent=0 // pred_fallthru
    _
  %p12 = scmp.eq.s32.totalorder 0, 0
  // Predicated region
  $region10: #{timeseries_autoencoder_forward.2} parent=0 // pred_check
    %p13 = pneg %p12
  $region11: #{timeseries_autoencoder_forward.2} parent=0 // pred_check_branch
    %15 = sbr.rel (%p13) target = $region13
  $region12: #{timeseries_autoencoder_forward.2} parent=0 // pred_region
    %vm16 = vcmask 261120
    %17 = vst.msk [vmem:[#allocation2] sm:$0xff] %vm16, 0.0
    %18 = vst.msk [vmem:[#allocation3] sm:$0xff] %vm16, 0.0
  $region13: #{timeseries_autoencoder_forward.2} parent=0 // pred_fallthru
    _
  %v19 = vld [vmem:[%s1] sm:$0xf]
  %v20 = vld [vmem:[%s1 + $0x4] sm:$0xf]
  %v21 = vld [vmem:[%s1 + $0x8] sm:$0xf]
  %v22 = vld [vmem:[%s1 + $0xc] sm:$0xf]
  %s23 = scalar_lea.vmem %s1, 16
  %v24 = vld [vmem:[%s23] sm:$0xf]
  %v25 = vld [vmem:[%s23 + $0x4] sm:$0xf]
  %v26 = vld [vmem:[%s23 + $0x8] sm:$0xf]
  %v27 = vld [vmem:[%s23 + $0xc] sm:$0xf]
  %s28 = scalar_lea.vmem %s1, 32
  %v29 = vld [vmem:[%s28] sm:$0xf]
  %v30 = vld [vmem:[%s28 + $0x4] sm:$0xf]
  %v31 = vld [vmem:[%s28 + $0x8] sm:$0xf]
  %v32 = vld [vmem:[%s28 + $0xc] sm:$0xf]
  %s33 = scalar_lea.vmem %s1, 48
  %v34 = vld [vmem:[%s33] sm:$0xf]
  %v35 = vld [vmem:[%s33 + $0x4] sm:$0xf]
  %v36 = vld [vmem:[%s33 + $0x8] sm:$0xf]
  %v37 = vld [vmem:[%s33 + $0xc] sm:$0xf]
  %v38 = vld [vmem:[#allocation2] sm:$0xff]
  %v39 = vld [vmem:[#allocation3] sm:$0xff]
  %v40 = vld [vmem:[%s0] sm:$0xff]
  %v41 = vld [vmem:[%s0 + $0x8] sm:$0xff]
  %v42 = vld [vmem:[%s0 + $0x10] sm:$0xff]
  %v43 = vld [vmem:[%s0 + $0x18] sm:$0xff]
  %v44 = vpack.c.bf16 %v38, %v38
  %v49 = vunpack.c.l.b16 %v19
  %v50 = vunpack.c.l.b16 %v20
  %v51 = vunpack.c.l.b16 %v21
  %v52 = vunpack.c.l.b16 %v22
  %v53 = vpack.c.b16 %v50, %v49
  %v54 = vpack.c.b16 %v52, %v51
  %vm57 = vcmask 261120
  %v59 = vsel %vm57, %v44, 0
  %61 = vmatprep.subr.bf16.mxu0 0
  %62 = vmatpush1.bf16.msra.mxu0 %v53
  %63 = vmatprep.subr.bf16.mxu0 0
  %64 = vmatpush1.bf16.msra.mxu0 %v54
  %65 = vmatprep.subr.bf16.mxu0 0
  %66 = vmatpush1.bf16.msra.mxu0 0
  %67 = vmatprep.subr.bf16.mxu0 0
  %68 = vmatpush1.bf16.msra.mxu0 0
  %69 = vmatprep.subr.bf16.mxu0 0
  %70 = vmatpush1.bf16.msra.mxu0 0
  %71 = vmatprep.subr.bf16.mxu0 0
  %72 = vmatpush1.bf16.msra.mxu0 0
  %73 = vmatprep.subr.bf16.mxu0 0
  %74 = vmatpush1.bf16.msra.mxu0 0
  %75 = vmatprep.subr.bf16.mxu0 0
  %76 = vmatpush1.bf16.msra.mxu0 0
  %77 = vmatprep.subr.bf16.mxu0 0
  %78 = vmatpush1.bf16.msra.mxu0 0
  %79 = vmatprep.subr.bf16.mxu0 0
  %80 = vmatpush1.bf16.msra.mxu0 0
  %81 = vmatprep.subr.bf16.mxu0 0
  %82 = vmatpush1.bf16.msra.mxu0 0
  %83 = vmatprep.subr.bf16.mxu0 0
  %84 = vmatpush1.bf16.msra.mxu0 0
  %85 = vmatprep.subr.bf16.mxu0 0
  %86 = vmatpush1.bf16.msra.mxu0 0
  %87 = vmatprep.subr.bf16.mxu0 0
  %88 = vmatpush1.bf16.msra.mxu0 0
  %89 = vmatprep.subr.bf16.mxu0 0
  %90 = vmatpush1.bf16.msra.mxu0 0
  %91 = vmatprep.subr.bf16.mxu0 0
  %92 = vmatpush1.bf16.msra.mxu0 0
  %93 = vmatprep.mubr.bf16.mxu0 0
  %94 = vmatmul.mubr.bf16.gmra.mrb[0].mxu0 %v59
  %v95 = vpop.f32.mrb[0].mxu0
  %v96 = vadd.f32 0.0, %v95
  %v97 = vpop.f32.mrb[0].mxu0
  %v98 = vpop.f32.mrb[0].mxu0
  %v99 = vpop.f32.mrb[0].mxu0
  %100 = vdwg.mxu0
  %v101 = vadd.f32 %v40, %v96
  %v106 = vunpack.c.l.b16 %v24
  %v107 = vunpack.c.l.b16 %v25
  %v108 = vunpack.c.l.b16 %v26
  %v109 = vunpack.c.l.b16 %v27
  %v110 = vpack.c.b16 %v107, %v106
  %v111 = vpack.c.b16 %v109, %v108
  %114 = vmatprep.subr.bf16.mxu0 0
  %115 = vmatpush1.bf16.msra.mxu0 %v110
  %116 = vmatprep.subr.bf16.mxu0 0
  %117 = vmatpush1.bf16.msra.mxu0 %v111
  %118 = vmatprep.subr.bf16.mxu0 0
  %119 = vmatpush1.bf16.msra.mxu0 0
  %120 = vmatprep.subr.bf16.mxu0 0
  %121 = vmatpush1.bf16.msra.mxu0 0
  %122 = vmatprep.subr.bf16.mxu0 0
  %123 = vmatpush1.bf16.msra.mxu0 0
  %124 = vmatprep.subr.bf16.mxu0 0
  %125 = vmatpush1.bf16.msra.mxu0 0
  %126 = vmatprep.subr.bf16.mxu0 0
  %127 = vmatpush1.bf16.msra.mxu0 0
  %128 = vmatprep.subr.bf16.mxu0 0
  %129 = vmatpush1.bf16.msra.mxu0 0
  %130 = vmatprep.subr.bf16.mxu0 0
  %131 = vmatpush1.bf16.msra.mxu0 0
  %132 = vmatprep.subr.bf16.mxu0 0
  %133 = vmatpush1.bf16.msra.mxu0 0
  %134 = vmatprep.subr.bf16.mxu0 0
  %135 = vmatpush1.bf16.msra.mxu0 0
  %136 = vmatprep.subr.bf16.mxu0 0
  %137 = vmatpush1.bf16.msra.mxu0 0
  %138 = vmatprep.subr.bf16.mxu0 0
  %139 = vmatpush1.bf16.msra.mxu0 0
  %140 = vmatprep.subr.bf16.mxu0 0
  %141 = vmatpush1.bf16.msra.mxu0 0
  %142 = vmatprep.subr.bf16.mxu0 0
  %143 = vmatpush1.bf16.msra.mxu0 0
  %144 = vmatprep.subr.bf16.mxu0 0
  %145 = vmatpush1.bf16.msra.mxu0 0
  %146 = vmatprep.mubr.bf16.mxu0 0
  %147 = vmatmul.mubr.bf16.gmra.mrb[0].mxu0 %v59
  %v148 = vpop.f32.mrb[0].mxu0
  %v149 = vadd.f32 0.0, %v148
  %v150 = vpop.f32.mrb[0].mxu0
  %v151 = vpop.f32.mrb[0].mxu0
  %v152 = vpop.f32.mrb[0].mxu0
  %153 = vdwg.mxu0
  %v154 = vadd.f32 %v41, %v149
  %v159 = vunpack.c.l.b16 %v29
  %v160 = vunpack.c.l.b16 %v30
  %v161 = vunpack.c.l.b16 %v31
  %v162 = vunpack.c.l.b16 %v32
  %v163 = vpack.c.b16 %v160, %v159
  %v164 = vpack.c.b16 %v162, %v161
  %167 = vmatprep.subr.bf16.mxu0 0
  %168 = vmatpush1.bf16.msra.mxu0 %v163
  %169 = vmatprep.subr.bf16.mxu0 0
  %170 = vmatpush1.bf16.msra.mxu0 %v164
  %171 = vmatprep.subr.bf16.mxu0 0
  %172 = vmatpush1.bf16.msra.mxu0 0
  %173 = vmatprep.subr.bf16.mxu0 0
  %174 = vmatpush1.bf16.msra.mxu0 0
  %175 = vmatprep.subr.bf16.mxu0 0
  %176 = vmatpush1.bf16.msra.mxu0 0
  %177 = vmatprep.subr.bf16.mxu0 0
  %178 = vmatpush1.bf16.msra.mxu0 0
  %179 = vmatprep.subr.bf16.mxu0 0
  %180 = vmatpush1.bf16.msra.mxu0 0
  %181 = vmatprep.subr.bf16.mxu0 0
  %182 = vmatpush1.bf16.msra.mxu0 0
  %183 = vmatprep.subr.bf16.mxu0 0
  %184 = vmatpush1.bf16.msra.mxu0 0
  %185 = vmatprep.subr.bf16.mxu0 0
  %186 = vmatpush1.bf16.msra.mxu0 0
  %187 = vmatprep.subr.bf16.mxu0 0
  %188 = vmatpush1.bf16.msra.mxu0 0
  %189 = vmatprep.subr.bf16.mxu0 0
  %190 = vmatpush1.bf16.msra.mxu0 0
  %191 = vmatprep.subr.bf16.mxu0 0
  %192 = vmatpush1.bf16.msra.mxu0 0
  %193 = vmatprep.subr.bf16.mxu0 0
  %194 = vmatpush1.bf16.msra.mxu0 0
  %195 = vmatprep.subr.bf16.mxu0 0
  %196 = vmatpush1.bf16.msra.mxu0 0
  %197 = vmatprep.subr.bf16.mxu0 0
  %198 = vmatpush1.bf16.msra.mxu0 0
  %199 = vmatprep.mubr.bf16.mxu0 0
  %200 = vmatmul.mubr.bf16.gmra.mrb[0].mxu0 %v59
  %v201 = vpop.f32.mrb[0].mxu0
  %v202 = vadd.f32 0.0, %v201
  %v203 = vpop.f32.mrb[0].mxu0
  %v204 = vpop.f32.mrb[0].mxu0
  %v205 = vpop.f32.mrb[0].mxu0
  %206 = vdwg.mxu0
  %v207 = vadd.f32 %v42, %v202
  %v212 = vunpack.c.l.b16 %v34
  %v213 = vunpack.c.l.b16 %v35
  %v214 = vunpack.c.l.b16 %v36
  %v215 = vunpack.c.l.b16 %v37
  %v216 = vpack.c.b16 %v213, %v212
  %v217 = vpack.c.b16 %v215, %v214
  %220 = vmatprep.subr.bf16.mxu0 0
  %221 = vmatpush1.bf16.msra.mxu0 %v216
  %222 = vmatprep.subr.bf16.mxu0 0
  %223 = vmatpush1.bf16.msra.mxu0 %v217
  %224 = vmatprep.subr.bf16.mxu0 0
  %225 = vmatpush1.bf16.msra.mxu0 0
  %226 = vmatprep.subr.bf16.mxu0 0
  %227 = vmatpush1.bf16.msra.mxu0 0
  %228 = vmatprep.subr.bf16.mxu0 0
  %229 = vmatpush1.bf16.msra.mxu0 0
  %230 = vmatprep.subr.bf16.mxu0 0
  %231 = vmatpush1.bf16.msra.mxu0 0
  %232 = vmatprep.subr.bf16.mxu0 0
  %233 = vmatpush1.bf16.msra.mxu0 0
  %234 = vmatprep.subr.bf16.mxu0 0
  %235 = vmatpush1.bf16.msra.mxu0 0
  %236 = vmatprep.subr.bf16.mxu0 0
  %237 = vmatpush1.bf16.msra.mxu0 0
  %238 = vmatprep.subr.bf16.mxu0 0
  %239 = vmatpush1.bf16.msra.mxu0 0
  %240 = vmatprep.subr.bf16.mxu0 0
  %241 = vmatpush1.bf16.msra.mxu0 0
  %242 = vmatprep.subr.bf16.mxu0 0
  %243 = vmatpush1.bf16.msra.mxu0 0
  %244 = vmatprep.subr.bf16.mxu0 0
  %245 = vmatpush1.bf16.msra.mxu0 0
  %246 = vmatprep.subr.bf16.mxu0 0
  %247 = vmatpush1.bf16.msra.mxu0 0
  %248 = vmatprep.subr.bf16.mxu0 0
  %249 = vmatpush1.bf16.msra.mxu0 0
  %250 = vmatprep.subr.bf16.mxu0 0
  %251 = vmatpush1.bf16.msra.mxu0 0
  %252 = vmatprep.mubr.bf16.mxu0 0
  %253 = vmatmul.mubr.bf16.gmra.mrb[0].mxu0 %v59
  %v254 = vpop.f32.mrb[0].mxu0
  %v255 = vadd.f32 0.0, %v254
  %v256 = vpop.f32.mrb[0].mxu0
  %v257 = vpop.f32.mrb[0].mxu0
  %v258 = vpop.f32.mrb[0].mxu0
  %259 = vdwg.mxu0
  %v260 = vadd.f32 %v43, %v255
  %v261 = vxor.u32 %v101, 2147483648
  %v262 = vmul.f32 %v261, 1.442695
  %v263 = vpow.pop %v262
  %v264 = vadd.f32 %v263, 1.0
  %v265 = vrcp.pop %v264
  %v266 = vmul.f32 1.0, %v265
  %v267 = vxor.u32 %v154, 2147483648
  %v268 = vmul.f32 %v267, 1.442695
  %v269 = vpow.pop %v268
  %v270 = vadd.f32 %v269, 1.0
  %v271 = vrcp.pop %v270
  %v272 = vmul.f32 1.0, %v271
  %v273 = vtanh.pop %v207
  %v274 = vxor.u32 %v260, 2147483648
  %v275 = vmul.f32 %v274, 1.442695
  %v276 = vpow.pop %v275
  %v277 = vadd.f32 %v276, 1.0
  %v278 = vrcp.pop %v277
  %v279 = vmul.f32 1.0, %v278
  %v280 = vmul.f32 %v272, %v39
  %v281 = vmul.f32 %v266, %v273
  %v282 = vadd.f32 %v280, %v281
  %v283 = vtanh.pop %v282
  %v284 = vmul.f32 %v279, %v283
  %s285 = scalar_lea.vmem %s0, 32
  %v286 = vld [vmem:[%s285] sm:$0xff]
  %v287 = vld [vmem:[%s285 + $0x8] sm:$0xff]
  %v288 = vld [vmem:[%s285 + $0x10] sm:$0xff]
  %v289 = vld [vmem:[%s285 + $0x18] sm:$0xff]
  %v290 = vpack.c.bf16 %v284, %v284
  %v292 = vsel %vm57, %v290, 0
  %294 = vmatprep.subr.bf16.mxu0 0
  %295 = vmatpush1.bf16.msra.mxu0 %v53
  %296 = vmatprep.subr.bf16.mxu0 0
  %297 = vmatpush1.bf16.msra.mxu0 %v54
  %298 = vmatprep.subr.bf16.mxu0 0
  %299 = vmatpush1.bf16.msra.mxu0 0
  %300 = vmatprep.subr.bf16.mxu0 0
  %301 = vmatpush1.bf16.msra.mxu0 0
  %302 = vmatprep.subr.bf16.mxu0 0
  %303 = vmatpush1.bf16.msra.mxu0 0
  %304 = vmatprep.subr.bf16.mxu0 0
  %305 = vmatpush1.bf16.msra.mxu0 0
  %306 = vmatprep.subr.bf16.mxu0 0
  %307 = vmatpush1.bf16.msra.mxu0 0
  %308 = vmatprep.subr.bf16.mxu0 0
  %309 = vmatpush1.bf16.msra.mxu0 0
  %310 = vmatprep.subr.bf16.mxu0 0
  %311 = vmatpush1.bf16.msra.mxu0 0
  %312 = vmatprep.subr.bf16.mxu0 0
  %313 = vmatpush1.bf16.msra.mxu0 0
  %314 = vmatprep.subr.bf16.mxu0 0
  %315 = vmatpush1.bf16.msra.mxu0 0
  %316 = vmatprep.subr.bf16.mxu0 0
  %317 = vmatpush1.bf16.msra.mxu0 0
  %318 = vmatprep.subr.bf16.mxu0 0
  %319 = vmatpush1.bf16.msra.mxu0 0
  %320 = vmatprep.subr.bf16.mxu0 0
  %321 = vmatpush1.bf16.msra.mxu0 0
  %322 = vmatprep.subr.bf16.mxu0 0
  %323 = vmatpush1.bf16.msra.mxu0 0
  %324 = vmatprep.subr.bf16.mxu0 0
  %325 = vmatpush1.bf16.msra.mxu0 0
  %326 = vmatprep.mubr.bf16.mxu0 0
  %327 = vmatmul.mubr.bf16.gmra.mrb[0].mxu0 %v292
  %v328 = vpop.f32.mrb[0].mxu0
  %v329 = vadd.f32 0.0, %v328
  %v330 = vpop.f32.mrb[0].mxu0
  %v331 = vpop.f32.mrb[0].mxu0
  %v332 = vpop.f32.mrb[0].mxu0
  %333 = vdwg.mxu0
  %v334 = vadd.f32 %v286, %v329
  %335 = vmatprep.subr.bf16.mxu0 0
  %336 = vmatpush1.bf16.msra.mxu0 %v110
  %337 = vmatprep.subr.bf16.mxu0 0
  %338 = vmatpush1.bf16.msra.mxu0 %v111
  %339 = vmatprep.subr.bf16.mxu0 0
  %340 = vmatpush1.bf16.msra.mxu0 0
  %341 = vmatprep.subr.bf16.mxu0 0
  %342 = vmatpush1.bf16.msra.mxu0 0
  %343 = vmatprep.subr.bf16.mxu0 0
  %344 = vmatpush1.bf16.msra.mxu0 0
  %345 = vmatprep.subr.bf16.mxu0 0
  %346 = vmatpush1.bf16.msra.mxu0 0
  %347 = vmatprep.subr.bf16.mxu0 0
  %348 = vmatpush1.bf16.msra.mxu0 0
  %349 = vmatprep.subr.bf16.mxu0 0
  %350 = vmatpush1.bf16.msra.mxu0 0
  %351 = vmatprep.subr.bf16.mxu0 0
  %352 = vmatpush1.bf16.msra.mxu0 0
  %353 = vmatprep.subr.bf16.mxu0 0
  %354 = vmatpush1.bf16.msra.mxu0 0
  %355 = vmatprep.subr.bf16.mxu0 0
  %356 = vmatpush1.bf16.msra.mxu0 0
  %357 = vmatprep.subr.bf16.mxu0 0
  %358 = vmatpush1.bf16.msra.mxu0 0
  %359 = vmatprep.subr.bf16.mxu0 0
  %360 = vmatpush1.bf16.msra.mxu0 0
  %361 = vmatprep.subr.bf16.mxu0 0
  %362 = vmatpush1.bf16.msra.mxu0 0
  %363 = vmatprep.subr.bf16.mxu0 0
  %364 = vmatpush1.bf16.msra.mxu0 0
  %365 = vmatprep.subr.bf16.mxu0 0
  %366 = vmatpush1.bf16.msra.mxu0 0
  %367 = vmatprep.mubr.bf16.mxu0 0
  %368 = vmatmul.mubr.bf16.gmra.mrb[0].mxu0 %v292
  %v369 = vpop.f32.mrb[0].mxu0
  %v370 = vadd.f32 0.0, %v369
  %v371 = vpop.f32.mrb[0].mxu0
  %v372 = vpop.f32.mrb[0].mxu0
  %v373 = vpop.f32.mrb[0].mxu0
  %374 = vdwg.mxu0
  %v375 = vadd.f32 %v287, %v370
  %376 = vmatprep.subr.bf16.mxu0 0
  %377 = vmatpush1.bf16.msra.mxu0 %v163
  %378 = vmatprep.subr.bf16.mxu0 0
  %379 = vmatpush1.bf16.msra.mxu0 %v164
  %380 = vmatprep.subr.bf16.mxu0 0
  %381 = vmatpush1.bf16.msra.mxu0 0
  %382 = vmatprep.subr.bf16.mxu0 0
  %383 = vmatpush1.bf16.msra.mxu0 0
  %384 = vmatprep.subr.bf16.mxu0 0
  %385 = vmatpush1.bf16.msra.mxu0 0
  %386 = vmatprep.subr.bf16.mxu0 0
  %387 = vmatpush1.bf16.msra.mxu0 0
  %388 = vmatprep.subr.bf16.mxu0 0
  %389 = vmatpush1.bf16.msra.mxu0 0
  %390 = vmatprep.subr.bf16.mxu0 0
  %391 = vmatpush1.bf16.msra.mxu0 0
  %392 = vmatprep.subr.bf16.mxu0 0
  %393 = vmatpush1.bf16.msra.mxu0 0
  %394 = vmatprep.subr.bf16.mxu0 0
  %395 = vmatpush1.bf16.msra.mxu0 0
  %396 = vmatprep.subr.bf16.mxu0 0
  %397 = vmatpush1.bf16.msra.mxu0 0
  %398 = vmatprep.subr.bf16.mxu0 0
  %399 = vmatpush1.bf16.msra.mxu0 0
  %400 = vmatprep.subr.bf16.mxu0 0
  %401 = vmatpush1.bf16.msra.mxu0 0
  %402 = vmatprep.subr.bf16.mxu0 0
  %403 = vmatpush1.bf16.msra.mxu0 0
  %404 = vmatprep.subr.bf16.mxu0 0
  %405 = vmatpush1.bf16.msra.mxu0 0
  %406 = vmatprep.subr.bf16.mxu0 0
  %407 = vmatpush1.bf16.msra.mxu0 0
  %408 = vmatprep.mubr.bf16.mxu0 0
  %409 = vmatmul.mubr.bf16.gmra.mrb[0].mxu0 %v292
  %v410 = vpop.f32.mrb[0].mxu0
  %v411 = vadd.f32 0.0, %v410
  %v412 = vpop.f32.mrb[0].mxu0
  %v413 = vpop.f32.mrb[0].mxu0
  %v414 = vpop.f32.mrb[0].mxu0
  %415 = vdwg.mxu0
  %v416 = vadd.f32 %v288, %v411
  %417 = vmatprep.subr.bf16.mxu0 0
  %418 = vmatpush1.bf16.msra.mxu0 %v216
  %419 = vmatprep.subr.bf16.mxu0 0
  %420 = vmatpush1.bf16.msra.mxu0 %v217
  %421 = vmatprep.subr.bf16.mxu0 0
  %422 = vmatpush1.bf16.msra.mxu0 0
  %423 = vmatprep.subr.bf16.mxu0 0
  %424 = vmatpush1.bf16.msra.mxu0 0
  %425 = vmatprep.subr.bf16.mxu0 0
  %426 = vmatpush1.bf16.msra.mxu0 0
  %427 = vmatprep.subr.bf16.mxu0 0
  %428 = vmatpush1.bf16.msra.mxu0 0
  %429 = vmatprep.subr.bf16.mxu0 0
  %430 = vmatpush1.bf16.msra.mxu0 0
  %431 = vmatprep.subr.bf16.mxu0 0
  %432 = vmatpush1.bf16.msra.mxu0 0
  %433 = vmatprep.subr.bf16.mxu0 0
  %434 = vmatpush1.bf16.msra.mxu0 0
  %435 = vmatprep.subr.bf16.mxu0 0
  %436 = vmatpush1.bf16.msra.mxu0 0
  %437 = vmatprep.subr.bf16.mxu0 0
  %438 = vmatpush1.bf16.msra.mxu0 0
  %439 = vmatprep.subr.bf16.mxu0 0
  %440 = vmatpush1.bf16.msra.mxu0 0
  %441 = vmatprep.subr.bf16.mxu0 0
  %442 = vmatpush1.bf16.msra.mxu0 0
  %443 = vmatprep.subr.bf16.mxu0 0
  %444 = vmatpush1.bf16.msra.mxu0 0
  %445 = vmatprep.subr.bf16.mxu0 0
  %446 = vmatpush1.bf16.msra.mxu0 0
  %447 = vmatprep.subr.bf16.mxu0 0
  %448 = vmatpush1.bf16.msra.mxu0 0
  %449 = vmatprep.mubr.bf16.mxu0 0
  %450 = vmatmul.mubr.bf16.gmra.mrb[0].mxu0 %v292
  %v451 = vpop.f32.mrb[0].mxu0
  %v452 = vadd.f32 0.0, %v451
  %v453 = vpop.f32.mrb[0].mxu0
  %v454 = vpop.f32.mrb[0].mxu0
  %v455 = vpop.f32.mrb[0].mxu0
  %456 = vdwg.mxu0
  %v457 = vadd.f32 %v289, %v452
  %v458 = vxor.u32 %v334, 2147483648
  %v459 = vmul.f32 %v458, 1.442695
  %v460 = vpow.pop %v459
  %v461 = vadd.f32 %v460, 1.0
  %v462 = vrcp.pop %v461
  %v463 = vmul.f32 1.0, %v462
  %v464 = vxor.u32 %v375, 2147483648
  %v465 = vmul.f32 %v464, 1.442695
  %v466 = vpow.pop %v465
  %v467 = vadd.f32 %v466, 1.0
  %v468 = vrcp.pop %v467
  %v469 = vmul.f32 1.0, %v468
  %v470 = vtanh.pop %v416
  %v471 = vxor.u32 %v457, 2147483648
  %v472 = vmul.f32 %v471, 1.442695
  %v473 = vpow.pop %v472
  %v474 = vadd.f32 %v473, 1.0
  %v475 = vrcp.pop %v474
  %v476 = vmul.f32 1.0, %v475
  %v477 = vmul.f32 %v469, %v282
  %v478 = vmul.f32 %v463, %v470
  %v479 = vadd.f32 %v477, %v478
  %v480 = vtanh.pop %v479
  %v481 = vmul.f32 %v476, %v480
  %s482 = scalar_lea.vmem %s0, 64
  %v483 = vld [vmem:[%s482] sm:$0xff]
  %v484 = vld [vmem:[%s482 + $0x8] sm:$0xff]
  %v485 = vld [vmem:[%s482 + $0x10] sm:$0xff]
  %v486 = vld [vmem:[%s482 + $0x18] sm:$0xff]
  %v487 = vpack.c.bf16 %v481, %v481
  %v489 = vsel %vm57, %v487, 0
  %491 = vmatprep.subr.bf16.mxu0 0
  %492 = vmatpush1.bf16.msra.mxu0 %v53
  %493 = vmatprep.subr.bf16.mxu0 0
  %494 = vmatpush1.bf16.msra.mxu0 %v54
  %495 = vmatprep.subr.bf16.mxu0 0
  %496 = vmatpush1.bf16.msra.mxu0 0
  %497 = vmatprep.subr.bf16.mxu0 0
  %498 = vmatpush1.bf16.msra.mxu0 0
  %499 = vmatprep.subr.bf16.mxu0 0
  %500 = vmatpush1.bf16.msra.mxu0 0
  %501 = vmatprep.subr.bf16.mxu0 0
  %502 = vmatpush1.bf16.msra.mxu0 0
  %503 = vmatprep.subr.bf16.mxu0 0
  %504 = vmatpush1.bf16.msra.mxu0 0
  %505 = vmatprep.subr.bf16.mxu0 0
  %506 = vmatpush1.bf16.msra.mxu0 0
  %507 = vmatprep.subr.bf16.mxu0 0
  %508 = vmatpush1.bf16.msra.mxu0 0
  %509 = vmatprep.subr.bf16.mxu0 0
  %510 = vmatpush1.bf16.msra.mxu0 0
  %511 = vmatprep.subr.bf16.mxu0 0
  %512 = vmatpush1.bf16.msra.mxu0 0
  %513 = vmatprep.subr.bf16.mxu0 0
  %514 = vmatpush1.bf16.msra.mxu0 0
  %515 = vmatprep.subr.bf16.mxu0 0
  %516 = vmatpush1.bf16.msra.mxu0 0
  %517 = vmatprep.subr.bf16.mxu0 0
  %518 = vmatpush1.bf16.msra.mxu0 0
  %519 = vmatprep.subr.bf16.mxu0 0
  %520 = vmatpush1.bf16.msra.mxu0 0
  %521 = vmatprep.subr.bf16.mxu0 0
  %522 = vmatpush1.bf16.msra.mxu0 0
  %523 = vmatprep.mubr.bf16.mxu0 0
  %524 = vmatmul.mubr.bf16.gmra.mrb[0].mxu0 %v489
  %v525 = vpop.f32.mrb[0].mxu0
  %v526 = vadd.f32 0.0, %v525
  %v527 = vpop.f32.mrb[0].mxu0
  %v528 = vpop.f32.mrb[0].mxu0
  %v529 = vpop.f32.mrb[0].mxu0
  %530 = vdwg.mxu0
  %v531 = vadd.f32 %v483, %v526
  %532 = vmatprep.subr.bf16.mxu0 0
  %533 = vmatpush1.bf16.msra.mxu0 %v110
  %534 = vmatprep.subr.bf16.mxu0 0
  %535 = vmatpush1.bf16.msra.mxu0 %v111
  %536 = vmatprep.subr.bf16.mxu0 0
  %537 = vmatpush1.bf16.msra.mxu0 0
  %538 = vmatprep.subr.bf16.mxu0 0
  %539 = vmatpush1.bf16.msra.mxu0 0
  %540 = vmatprep.subr.bf16.mxu0 0
  %541 = vmatpush1.bf16.msra.mxu0 0
  %542 = vmatprep.subr.bf16.mxu0 0
  %543 = vmatpush1.bf16.msra.mxu0 0
  %544 = vmatprep.subr.bf16.mxu0 0
  %545 = vmatpush1.bf16.msra.mxu0 0
  %546 = vmatprep.subr.bf16.mxu0 0
  %547 = vmatpush1.bf16.msra.mxu0 0
  %548 = vmatprep.subr.bf16.mxu0 0
  %549 = vmatpush1.bf16.msra.mxu0 0
  %550 = vmatprep.subr.bf16.mxu0 0
  %551 = vmatpush1.bf16.msra.mxu0 0
  %552 = vmatprep.subr.bf16.mxu0 0
  %553 = vmatpush1.bf16.msra.mxu0 0
  %554 = vmatprep.subr.bf16.mxu0 0
  %555 = vmatpush1.bf16.msra.mxu0 0
  %556 = vmatprep.subr.bf16.mxu0 0
  %557 = vmatpush1.bf16.msra.mxu0 0
  %558 = vmatprep.subr.bf16.mxu0 0
  %559 = vmatpush1.bf16.msra.mxu0 0
  %560 = vmatprep.subr.bf16.mxu0 0
  %561 = vmatpush1.bf16.msra.mxu0 0
  %562 = vmatprep.subr.bf16.mxu0 0
  %563 = vmatpush1.bf16.msra.mxu0 0
  %564 = vmatprep.mubr.bf16.mxu0 0
  %565 = vmatmul.mubr.bf16.gmra.mrb[0].mxu0 %v489
  %v566 = vpop.f32.mrb[0].mxu0
  %v567 = vadd.f32 0.0, %v566
  %v568 = vpop.f32.mrb[0].mxu0
  %v569 = vpop.f32.mrb[0].mxu0
  %v570 = vpop.f32.mrb[0].mxu0
  %571 = vdwg.mxu0
  %v572 = vadd.f32 %v484, %v567
  %573 = vmatprep.subr.bf16.mxu0 0
  %574 = vmatpush1.bf16.msra.mxu0 %v163
  %575 = vmatprep.subr.bf16.mxu0 0
  %576 = vmatpush1.bf16.msra.mxu0 %v164
  %577 = vmatprep.subr.bf16.mxu0 0
  %578 = vmatpush1.bf16.msra.mxu0 0
  %579 = vmatprep.subr.bf16.mxu0 0
  %580 = vmatpush1.bf16.msra.mxu0 0
  %581 = vmatprep.subr.bf16.mxu0 0
  %582 = vmatpush1.bf16.msra.mxu0 0
  %583 = vmatprep.subr.bf16.mxu0 0
  %584 = vmatpush1.bf16.msra.mxu0 0
  %585 = vmatprep.subr.bf16.mxu0 0
  %586 = vmatpush1.bf16.msra.mxu0 0
  %587 = vmatprep.subr.bf16.mxu0 0
  %588 = vmatpush1.bf16.msra.mxu0 0
  %589 = vmatprep.subr.bf16.mxu0 0
  %590 = vmatpush1.bf16.msra.mxu0 0
  %591 = vmatprep.subr.bf16.mxu0 0
  %592 = vmatpush1.bf16.msra.mxu0 0
  %593 = vmatprep.subr.bf16.mxu0 0
  %594 = vmatpush1.bf16.msra.mxu0 0
  %595 = vmatprep.subr.bf16.mxu0 0
  %596 = vmatpush1.bf16.msra.mxu0 0
  %597 = vmatprep.subr.bf16.mxu0 0
  %598 = vmatpush1.bf16.msra.mxu0 0
  %599 = vmatprep.subr.bf16.mxu0 0
  %600 = vmatpush1.bf16.msra.mxu0 0
  %601 = vmatprep.subr.bf16.mxu0 0
  %602 = vmatpush1.bf16.msra.mxu0 0
  %603 = vmatprep.subr.bf16.mxu0 0
  %604 = vmatpush1.bf16.msra.mxu0 0
  %605 = vmatprep.mubr.bf16.mxu0 0
  %606 = vmatmul.mubr.bf16.gmra.mrb[0].mxu0 %v489
  %v607 = vpop.f32.mrb[0].mxu0
  %v608 = vadd.f32 0.0, %v607
  %v609 = vpop.f32.mrb[0].mxu0
  %v610 = vpop.f32.mrb[0].mxu0
  %v611 = vpop.f32.mrb[0].mxu0
  %612 = vdwg.mxu0
  %v613 = vadd.f32 %v485, %v608
  %614 = vmatprep.subr.bf16.mxu0 0
  %615 = vmatpush1.bf16.msra.mxu0 %v216
  %616 = vmatprep.subr.bf16.mxu0 0
  %617 = vmatpush1.bf16.msra.mxu0 %v217
  %618 = vmatprep.subr.bf16.mxu0 0
  %619 = vmatpush1.bf16.msra.mxu0 0
  %620 = vmatprep.subr.bf16.mxu0 0
  %621 = vmatpush1.bf16.msra.mxu0 0
  %622 = vmatprep.subr.bf16.mxu0 0
  %623 = vmatpush1.bf16.msra.mxu0 0
  %624 = vmatprep.subr.bf16.mxu0 0
  %625 = vmatpush1.bf16.msra.mxu0 0
  %626 = vmatprep.subr.bf16.mxu0 0
  %627 = vmatpush1.bf16.msra.mxu0 0
  %628 = vmatprep.subr.bf16.mxu0 0
  %629 = vmatpush1.bf16.msra.mxu0 0
  %630 = vmatprep.subr.bf16.mxu0 0
  %631 = vmatpush1.bf16.msra.mxu0 0
  %632 = vmatprep.subr.bf16.mxu0 0
  %633 = vmatpush1.bf16.msra.mxu0 0
  %634 = vmatprep.subr.bf16.mxu0 0
  %635 = vmatpush1.bf16.msra.mxu0 0
  %636 = vmatprep.subr.bf16.mxu0 0
  %637 = vmatpush1.bf16.msra.mxu0 0
  %638 = vmatprep.subr.bf16.mxu0 0
  %639 = vmatpush1.bf16.msra.mxu0 0
  %640 = vmatprep.subr.bf16.mxu0 0
  %641 = vmatpush1.bf16.msra.mxu0 0
  %642 = vmatprep.subr.bf16.mxu0 0
  %643 = vmatpush1.bf16.msra.mxu0 0
  %644 = vmatprep.subr.bf16.mxu0 0
  %645 = vmatpush1.bf16.msra.mxu0 0
  %646 = vmatprep.mubr.bf16.mxu0 0
  %647 = vmatmul.mubr.bf16.gmra.mrb[0].mxu0 %v489
  %v648 = vpop.f32.mrb[0].mxu0
  %v649 = vadd.f32 0.0, %v648
  %v650 = vpop.f32.mrb[0].mxu0
  %v651 = vpop.f32.mrb[0].mxu0
  %v652 = vpop.f32.mrb[0].mxu0
  %653 = vdwg.mxu0
  %v654 = vadd.f32 %v486, %v649
  %v655 = vxor.u32 %v531, 2147483648
  %v656 = vmul.f32 %v655, 1.442695
  %v657 = vpow.pop %v656
  %v658 = vadd.f32 %v657, 1.0
  %v659 = vrcp.pop %v658
  %v660 = vmul.f32 1.0, %v659
  %v661 = vxor.u32 %v572, 2147483648
  %v662 = vmul.f32 %v661, 1.442695
  %v663 = vpow.pop %v662
  %v664 = vadd.f32 %v663, 1.0
  %v665 = vrcp.pop %v664
  %v666 = vmul.f32 1.0, %v665
  %v667 = vtanh.pop %v613
  %v668 = vxor.u32 %v654, 2147483648
  %v669 = vmul.f32 %v668, 1.442695
  %v670 = vpow.pop %v669
  %v671 = vadd.f32 %v670, 1.0
  %v672 = vrcp.pop %v671
  %v673 = vmul.f32 1.0, %v672
  %v674 = vmul.f32 %v666, %v479
  %v675 = vmul.f32 %v660, %v667
  %v676 = vadd.f32 %v674, %v675
  %v677 = vtanh.pop %v676
  %v678 = vmul.f32 %v673, %v677
  %s679 = scalar_lea.vmem %s0, 96
  %v680 = vld [vmem:[%s679] sm:$0xff]
  %v681 = vld [vmem:[%s679 + $0x8] sm:$0xff]
  %v682 = vld [vmem:[%s679 + $0x10] sm:$0xff]
  %v683 = vld [vmem:[%s679 + $0x18] sm:$0xff]
  %v684 = vpack.c.bf16 %v678, %v678
  %v686 = vsel %vm57, %v684, 0
  %688 = vmatprep.subr.bf16.mxu0 0
  %689 = vmatpush1.bf16.msra.mxu0 %v53
  %690 = vmatprep.subr.bf16.mxu0 0
  %691 = vmatpush1.bf16.msra.mxu0 %v54
  %692 = vmatprep.subr.bf16.mxu0 0
  %693 = vmatpush1.bf16.msra.mxu0 0
  %694 = vmatprep.subr.bf16.mxu0 0
  %695 = vmatpush1.bf16.msra.mxu0 0
  %696 = vmatprep.subr.bf16.mxu0 0
  %697 = vmatpush1.bf16.msra.mxu0 0
  %698 = vmatprep.subr.bf16.mxu0 0
  %699 = vmatpush1.bf16.msra.mxu0 0
  %700 = vmatprep.subr.bf16.mxu0 0
  %701 = vmatpush1.bf16.msra.mxu0 0
  %702 = vmatprep.subr.bf16.mxu0 0
  %703 = vmatpush1.bf16.msra.mxu0 0
  %704 = vmatprep.subr.bf16.mxu0 0
  %705 = vmatpush1.bf16.msra.mxu0 0
  %706 = vmatprep.subr.bf16.mxu0 0
  %707 = vmatpush1.bf16.msra.mxu0 0
  %708 = vmatprep.subr.bf16.mxu0 0
  %709 = vmatpush1.bf16.msra.mxu0 0
  %710 = vmatprep.subr.bf16.mxu0 0
  %711 = vmatpush1.bf16.msra.mxu0 0
  %712 = vmatprep.subr.bf16.mxu0 0
  %713 = vmatpush1.bf16.msra.mxu0 0
  %714 = vmatprep.subr.bf16.mxu0 0
  %715 = vmatpush1.bf16.msra.mxu0 0
  %716 = vmatprep.subr.bf16.mxu0 0
  %717 = vmatpush1.bf16.msra.mxu0 0
  %718 = vmatprep.subr.bf16.mxu0 0
  %719 = vmatpush1.bf16.msra.mxu0 0
  %720 = vmatprep.mubr.bf16.mxu0 0
  %721 = vmatmul.mubr.bf16.gmra.mrb[0].mxu0 %v686
  %v722 = vpop.f32.mrb[0].mxu0
  %v723 = vadd.f32 0.0, %v722
  %v724 = vpop.f32.mrb[0].mxu0
  %v725 = vpop.f32.mrb[0].mxu0
  %v726 = vpop.f32.mrb[0].mxu0
  %727 = vdwg.mxu0
  %v728 = vadd.f32 %v680, %v723
  %729 = vmatprep.subr.bf16.mxu0 0
  %730 = vmatpush1.bf16.msra.mxu0 %v110
  %731 = vmatprep.subr.bf16.mxu0 0
  %732 = vmatpush1.bf16.msra.mxu0 %v111
  %733 = vmatprep.subr.bf16.mxu0 0
  %734 = vmatpush1.bf16.msra.mxu0 0
  %735 = vmatprep.subr.bf16.mxu0 0
  %736 = vmatpush1.bf16.msra.mxu0 0
  %737 = vmatprep.subr.bf16.mxu0 0
  %738 = vmatpush1.bf16.msra.mxu0 0
  %739 = vmatprep.subr.bf16.mxu0 0
  %740 = vmatpush1.bf16.msra.mxu0 0
  %741 = vmatprep.subr.bf16.mxu0 0
  %742 = vmatpush1.bf16.msra.mxu0 0
  %743 = vmatprep.subr.bf16.mxu0 0
  %744 = vmatpush1.bf16.msra.mxu0 0
  %745 = vmatprep.subr.bf16.mxu0 0
  %746 = vmatpush1.bf16.msra.mxu0 0
  %747 = vmatprep.subr.bf16.mxu0 0
  %748 = vmatpush1.bf16.msra.mxu0 0
  %749 = vmatprep.subr.bf16.mxu0 0
  %750 = vmatpush1.bf16.msra.mxu0 0
  %751 = vmatprep.subr.bf16.mxu0 0
  %752 = vmatpush1.bf16.msra.mxu0 0
  %753 = vmatprep.subr.bf16.mxu0 0
  %754 = vmatpush1.bf16.msra.mxu0 0
  %755 = vmatprep.subr.bf16.mxu0 0
  %756 = vmatpush1.bf16.msra.mxu0 0
  %757 = vmatprep.subr.bf16.mxu0 0
  %758 = vmatpush1.bf16.msra.mxu0 0
  %759 = vmatprep.subr.bf16.mxu0 0
  %760 = vmatpush1.bf16.msra.mxu0 0
  %761 = vmatprep.mubr.bf16.mxu0 0
  %762 = vmatmul.mubr.bf16.gmra.mrb[0].mxu0 %v686
  %v763 = vpop.f32.mrb[0].mxu0
  %v764 = vadd.f32 0.0, %v763
  %v765 = vpop.f32.mrb[0].mxu0
  %v766 = vpop.f32.mrb[0].mxu0
  %v767 = vpop.f32.mrb[0].mxu0
  %768 = vdwg.mxu0
  %v769 = vadd.f32 %v681, %v764
  %770 = vmatprep.subr.bf16.mxu0 0
  %771 = vmatpush1.bf16.msra.mxu0 %v163
  %772 = vmatprep.subr.bf16.mxu0 0
  %773 = vmatpush1.bf16.msra.mxu0 %v164
  %774 = vmatprep.subr.bf16.mxu0 0
  %775 = vmatpush1.bf16.msra.mxu0 0
  %776 = vmatprep.subr.bf16.mxu0 0
  %777 = vmatpush1.bf16.msra.mxu0 0
  %778 = vmatprep.subr.bf16.mxu0 0
  %779 = vmatpush1.bf16.msra.mxu0 0
  %780 = vmatprep.subr.bf16.mxu0 0
  %781 = vmatpush1.bf16.msra.mxu0 0
  %782 = vmatprep.subr.bf16.mxu0 0
  %783 = vmatpush1.bf16.msra.mxu0 0
  %784 = vmatprep.subr.bf16.mxu0 0
  %785 = vmatpush1.bf16.msra.mxu0 0
  %786 = vmatprep.subr.bf16.mxu0 0
  %787 = vmatpush1.bf16.msra.mxu0 0
  %788 = vmatprep.subr.bf16.mxu0 0
  %789 = vmatpush1.bf16.msra.mxu0 0
  %790 = vmatprep.subr.bf16.mxu0 0
  %791 = vmatpush1.bf16.msra.mxu0 0
  %792 = vmatprep.subr.bf16.mxu0 0
  %793 = vmatpush1.bf16.msra.mxu0 0
  %794 = vmatprep.subr.bf16.mxu0 0
  %795 = vmatpush1.bf16.msra.mxu0 0
  %796 = vmatprep.subr.bf16.mxu0 0
  %797 = vmatpush1.bf16.msra.mxu0 0
  %798 = vmatprep.subr.bf16.mxu0 0
  %799 = vmatpush1.bf16.msra.mxu0 0
  %800 = vmatprep.subr.bf16.mxu0 0
  %801 = vmatpush1.bf16.msra.mxu0 0
  %802 = vmatprep.mubr.bf16.mxu0 0
  %803 = vmatmul.mubr.bf16.gmra.mrb[0].mxu0 %v686
  %v804 = vpop.f32.mrb[0].mxu0
  %v805 = vadd.f32 0.0, %v804
  %v806 = vpop.f32.mrb[0].mxu0
  %v807 = vpop.f32.mrb[0].mxu0
  %v808 = vpop.f32.mrb[0].mxu0
  %809 = vdwg.mxu0
  %v810 = vadd.f32 %v682, %v805
  %811 = vmatprep.subr.bf16.mxu0 0
  %812 = vmatpush1.bf16.msra.mxu0 %v216
  %813 = vmatprep.subr.bf16.mxu0 0
  %814 = vmatpush1.bf16.msra.mxu0 %v217
  %815 = vmatprep.subr.bf16.mxu0 0
  %816 = vmatpush1.bf16.msra.mxu0 0
  %817 = vmatprep.subr.bf16.mxu0 0
  %818 = vmatpush1.bf16.msra.mxu0 0
  %819 = vmatprep.subr.bf16.mxu0 0
  %820 = vmatpush1.bf16.msra.mxu0 0
  %821 = vmatprep.subr.bf16.mxu0 0
  %822 = vmatpush1.bf16.msra.mxu0 0
  %823 = vmatprep.subr.bf16.mxu0 0
  %824 = vmatpush1.bf16.msra.mxu0 0
  %825 = vmatprep.subr.bf16.mxu0 0
  %826 = vmatpush1.bf16.msra.mxu0 0
  %827 = vmatprep.subr.bf16.mxu0 0
  %828 = vmatpush1.bf16.msra.mxu0 0
  %829 = vmatprep.subr.bf16.mxu0 0
  %830 = vmatpush1.bf16.msra.mxu0 0
  %831 = vmatprep.subr.bf16.mxu0 0
  %832 = vmatpush1.bf16.msra.mxu0 0
  %833 = vmatprep.subr.bf16.mxu0 0
  %834 = vmatpush1.bf16.msra.mxu0 0
  %835 = vmatprep.subr.bf16.mxu0 0
  %836 = vmatpush1.bf16.msra.mxu0 0
  %837 = vmatprep.subr.bf16.mxu0 0
  %838 = vmatpush1.bf16.msra.mxu0 0
  %839 = vmatprep.subr.bf16.mxu0 0
  %840 = vmatpush1.bf16.msra.mxu0 0
  %841 = vmatprep.subr.bf16.mxu0 0
  %842 = vmatpush1.bf16.msra.mxu0 0
  %843 = vmatprep.mubr.bf16.mxu0 0
  %844 = vmatmul.mubr.bf16.gmra.mrb[0].mxu0 %v686
  %v845 = vpop.f32.mrb[0].mxu0
  %v846 = vadd.f32 0.0, %v845
  %v847 = vpop.f32.mrb[0].mxu0
  %v848 = vpop.f32.mrb[0].mxu0
  %v849 = vpop.f32.mrb[0].mxu0
  %850 = vdwg.mxu0
  %v851 = vadd.f32 %v683, %v846
  %v852 = vxor.u32 %v728, 2147483648
  %v853 = vmul.f32 %v852, 1.442695
  %v854 = vpow.pop %v853
  %v855 = vadd.f32 %v854, 1.0
  %v856 = vrcp.pop %v855
  %v857 = vmul.f32 1.0, %v856
  %v858 = vxor.u32 %v769, 2147483648
  %v859 = vmul.f32 %v858, 1.442695
  %v860 = vpow.pop %v859
  %v861 = vadd.f32 %v860, 1.0
  %v862 = vrcp.pop %v861
  %v863 = vmul.f32 1.0, %v862
  %v864 = vtanh.pop %v810
  %v865 = vxor.u32 %v851, 2147483648
  %v866 = vmul.f32 %v865, 1.442695
  %v867 = vpow.pop %v866
  %v868 = vadd.f32 %v867, 1.0
  %v869 = vrcp.pop %v868
  %v870 = vmul.f32 1.0, %v869
  %v871 = vmul.f32 %v863, %v676
  %v872 = vmul.f32 %v857, %v864
  %v873 = vadd.f32 %v871, %v872
  %v874 = vtanh.pop %v873
  %v875 = vmul.f32 %v870, %v874
  %s876 = scalar_lea.vmem %s0, 128
  %v877 = vld [vmem:[%s876] sm:$0xff]
  %v878 = vld [vmem:[%s876 + $0x8] sm:$0xff]
  %v879 = vld [vmem:[%s876 + $0x10] sm:$0xff]
  %v880 = vld [vmem:[%s876 + $0x18] sm:$0xff]
  %v881 = vpack.c.bf16 %v875, %v875
  %v883 = vsel %vm57, %v881, 0
  %885 = vmatprep.subr.bf16.mxu0 0
  %886 = vmatpush1.bf16.msra.mxu0 %v53
  %887 = vmatprep.subr.bf16.mxu0 0
  %888 = vmatpush1.bf16.msra.mxu0 %v54
  %889 = vmatprep.subr.bf16.mxu0 0
  %890 = vmatpush1.bf16.msra.mxu0 0
  %891 = vmatprep.subr.bf16.mxu0 0
  %892 = vmatpush1.bf16.msra.mxu0 0
  %893 = vmatprep.subr.bf16.mxu0 0
  %894 = vmatpush1.bf16.msra.mxu0 0
  %895 = vmatprep.subr.bf16.mxu0 0
  %896 = vmatpush1.bf16.msra.mxu0 0
  %897 = vmatprep.subr.bf16.mxu0 0
  %898 = vmatpush1.bf16.msra.mxu0 0
  %899 = vmatprep.subr.bf16.mxu0 0
  %900 = vmatpush1.bf16.msra.mxu0 0
  %901 = vmatprep.subr.bf16.mxu0 0
  %902 = vmatpush1.bf16.msra.mxu0 0
  %903 = vmatprep.subr.bf16.mxu0 0
  %904 = vmatpush1.bf16.msra.mxu0 0
  %905 = vmatprep.subr.bf16.mxu0 0
  %906 = vmatpush1.bf16.msra.mxu0 0
  %907 = vmatprep.subr.bf16.mxu0 0
  %908 = vmatpush1.bf16.msra.mxu0 0
  %909 = vmatprep.subr.bf16.mxu0 0
  %910 = vmatpush1.bf16.msra.mxu0 0
  %911 = vmatprep.subr.bf16.mxu0 0
  %912 = vmatpush1.bf16.msra.mxu0 0
  %913 = vmatprep.subr.bf16.mxu0 0
  %914 = vmatpush1.bf16.msra.mxu0 0
  %915 = vmatprep.subr.bf16.mxu0 0
  %916 = vmatpush1.bf16.msra.mxu0 0
  %917 = vmatprep.mubr.bf16.mxu0 0
  %918 = vmatmul.mubr.bf16.gmra.mrb[0].mxu0 %v883
  %v919 = vpop.f32.mrb[0].mxu0
  %v920 = vadd.f32 0.0, %v919
  %v921 = vpop.f32.mrb[0].mxu0
  %v922 = vpop.f32.mrb[0].mxu0
  %v923 = vpop.f32.mrb[0].mxu0
  %924 = vdwg.mxu0
  %v925 = vadd.f32 %v877, %v920
  %926 = vmatprep.subr.bf16.mxu0 0
  %927 = vmatpush1.bf16.msra.mxu0 %v110
  %928 = vmatprep.subr.bf16.mxu0 0
  %929 = vmatpush1.bf16.msra.mxu0 %v111
  %930 = vmatprep.subr.bf16.mxu0 0
  %931 = vmatpush1.bf16.msra.mxu0 0
  %932 = vmatprep.subr.bf16.mxu0 0
  %933 = vmatpush1.bf16.msra.mxu0 0
  %934 = vmatprep.subr.bf16.mxu0 0
  %935 = vmatpush1.bf16.msra.mxu0 0
  %936 = vmatprep.subr.bf16.mxu0 0
  %937 = vmatpush1.bf16.msra.mxu0 0
  %938 = vmatprep.subr.bf16.mxu0 0
  %939 = vmatpush1.bf16.msra.mxu0 0
  %940 = vmatprep.subr.bf16.mxu0 0
  %941 = vmatpush1.bf16.msra.mxu0 0
  %942 = vmatprep.subr.bf16.mxu0 0
  %943 = vmatpush1.bf16.msra.mxu0 0
  %944 = vmatprep.subr.bf16.mxu0 0
  %945 = vmatpush1.bf16.msra.mxu0 0
  %946 = vmatprep.subr.bf16.mxu0 0
  %947 = vmatpush1.bf16.msra.mxu0 0
  %948 = vmatprep.subr.bf16.mxu0 0
  %949 = vmatpush1.bf16.msra.mxu0 0
  %950 = vmatprep.subr.bf16.mxu0 0
  %951 = vmatpush1.bf16.msra.mxu0 0
  %952 = vmatprep.subr.bf16.mxu0 0
  %953 = vmatpush1.bf16.msra.mxu0 0
  %954 = vmatprep.subr.bf16.mxu0 0
  %955 = vmatpush1.bf16.msra.mxu0 0
  %956 = vmatprep.subr.bf16.mxu0 0
  %957 = vmatpush1.bf16.msra.mxu0 0
  %958 = vmatprep.mubr.bf16.mxu0 0
  %959 = vmatmul.mubr.bf16.gmra.mrb[0].mxu0 %v883
  %v960 = vpop.f32.mrb[0].mxu0
  %v961 = vadd.f32 0.0, %v960
  %v962 = vpop.f32.mrb[0].mxu0
  %v963 = vpop.f32.mrb[0].mxu0
  %v964 = vpop.f32.mrb[0].mxu0
  %965 = vdwg.mxu0
  %v966 = vadd.f32 %v878, %v961
  %967 = vmatprep.subr.bf16.mxu0 0
  %968 = vmatpush1.bf16.msra.mxu0 %v163
  %969 = vmatprep.subr.bf16.mxu0 0
  %970 = vmatpush1.bf16.msra.mxu0 %v164
  %971 = vmatprep.subr.bf16.mxu0 0
  %972 = vmatpush1.bf16.msra.mxu0 0
  %973 = vmatprep.subr.bf16.mxu0 0
  %974 = vmatpush1.bf16.msra.mxu0 0
  %975 = vmatprep.subr.bf16.mxu0 0
  %976 = vmatpush1.bf16.msra.mxu0 0
  %977 = vmatprep.subr.bf16.mxu0 0
  %978 = vmatpush1.bf16.msra.mxu0 0
  %979 = vmatprep.subr.bf16.mxu0 0
  %980 = vmatpush1.bf16.msra.mxu0 0
  %981 = vmatprep.subr.bf16.mxu0 0
  %982 = vmatpush1.bf16.msra.mxu0 0
  %983 = vmatprep.subr.bf16.mxu0 0
  %984 = vmatpush1.bf16.msra.mxu0 0
  %985 = vmatprep.subr.bf16.mxu0 0
  %986 = vmatpush1.bf16.msra.mxu0 0
  %987 = vmatprep.subr.bf16.mxu0 0
  %988 = vmatpush1.bf16.msra.mxu0 0
  %989 = vmatprep.subr.bf16.mxu0 0
  %990 = vmatpush1.bf16.msra.mxu0 0
  %991 = vmatprep.subr.bf16.mxu0 0
  %992 = vmatpush1.bf16.msra.mxu0 0
  %993 = vmatprep.subr.bf16.mxu0 0
  %994 = vmatpush1.bf16.msra.mxu0 0
  %995 = vmatprep.subr.bf16.mxu0 0
  %996 = vmatpush1.bf16.msra.mxu0 0
  %997 = vmatprep.subr.bf16.mxu0 0
  %998 = vmatpush1.bf16.msra.mxu0 0
  %999 = vmatprep.mubr.bf16.mxu0 0
  %1000 = vmatmul.mubr.bf16.gmra.mrb[0].mxu0 %v883
  %v1001 = vpop.f32.mrb[0].mxu0
  %v1002 = vadd.f32 0.0, %v1001
  %v1003 = vpop.f32.mrb[0].mxu0
  %v1004 = vpop.f32.mrb[0].mxu0
  %v1005 = vpop.f32.mrb[0].mxu0
  %1006 = vdwg.mxu0
  %v1007 = vadd.f32 %v879, %v1002
  %1008 = vmatprep.subr.bf16.mxu0 0
  %1009 = vmatpush1.bf16.msra.mxu0 %v216
  %1010 = vmatprep.subr.bf16.mxu0 0
  %1011 = vmatpush1.bf16.msra.mxu0 %v217
  %1012 = vmatprep.subr.bf16.mxu0 0
  %1013 = vmatpush1.bf16.msra.mxu0 0
  %1014 = vmatprep.subr.bf16.mxu0 0
  %1015 = vmatpush1.bf16.msra.mxu0 0
  %1016 = vmatprep.subr.bf16.mxu0 0
  %1017 = vmatpush1.bf16.msra.mxu0 0
  %1018 = vmatprep.subr.bf16.mxu0 0
  %1019 = vmatpush1.bf16.msra.mxu0 0
  %1020 = vmatprep.subr.bf16.mxu0 0
  %1021 = vmatpush1.bf16.msra.mxu0 0
  %1022 = vmatprep.subr.bf16.mxu0 0
  %1023 = vmatpush1.bf16.msra.mxu0 0
  %1024 = vmatprep.subr.bf16.mxu0 0
  %1025 = vmatpush1.bf16.msra.mxu0 0
  %1026 = vmatprep.subr.bf16.mxu0 0
  %1027 = vmatpush1.bf16.msra.mxu0 0
  %1028 = vmatprep.subr.bf16.mxu0 0
  %1029 = vmatpush1.bf16.msra.mxu0 0
  %1030 = vmatprep.subr.bf16.mxu0 0
  %1031 = vmatpush1.bf16.msra.mxu0 0
  %1032 = vmatprep.subr.bf16.mxu0 0
  %1033 = vmatpush1.bf16.msra.mxu0 0
  %1034 = vmatprep.subr.bf16.mxu0 0
  %1035 = vmatpush1.bf16.msra.mxu0 0
  %1036 = vmatprep.subr.bf16.mxu0 0
  %1037 = vmatpush1.bf16.msra.mxu0 0
  %1038 = vmatprep.subr.bf16.mxu0 0
  %1039 = vmatpush1.bf16.msra.mxu0 0
  %1040 = vmatprep.mubr.bf16.mxu0 0
  %1041 = vmatmul.mubr.bf16.gmra.mrb[0].mxu0 %v883
  %v1042 = vpop.f32.mrb[0].mxu0
  %v1043 = vadd.f32 0.0, %v1042
  %v1044 = vpop.f32.mrb[0].mxu0
  %v1045 = vpop.f32.mrb[0].mxu0
  %v1046 = vpop.f32.mrb[0].mxu0
  %1047 = vdwg.mxu0
  %v1048 = vadd.f32 %v880, %v1043
  %v1049 = vxor.u32 %v925, 2147483648
  %v1050 = vmul.f32 %v1049, 1.442695
  %v1051 = vpow.pop %v1050
  %v1052 = vadd.f32 %v1051, 1.0
  %v1053 = vrcp.pop %v1052
  %v1054 = vmul.f32 1.0, %v1053
  %v1055 = vxor.u32 %v966, 2147483648
  %v1056 = vmul.f32 %v1055, 1.442695
  %v1057 = vpow.pop %v1056
  %v1058 = vadd.f32 %v1057, 1.0
  %v1059 = vrcp.pop %v1058
  %v1060 = vmul.f32 1.0, %v1059
  %v1061 = vtanh.pop %v1007
  %v1062 = vxor.u32 %v1048, 2147483648
  %v1063 = vmul.f32 %v1062, 1.442695
  %v1064 = vpow.pop %v1063
  %v1065 = vadd.f32 %v1064, 1.0
  %v1066 = vrcp.pop %v1065
  %v1067 = vmul.f32 1.0, %v1066
  %v1068 = vmul.f32 %v1060, %v873
  %v1069 = vmul.f32 %v1054, %v1061
  %v1070 = vadd.f32 %v1068, %v1069
  %v1071 = vtanh.pop %v1070
  %v1072 = vmul.f32 %v1067, %v1071
  %s1073 = scalar_lea.vmem %s0, 160
  %v1074 = vld [vmem:[%s1073] sm:$0xff]
  %v1075 = vld [vmem:[%s1073 + $0x8] sm:$0xff]
  %v1076 = vld [vmem:[%s1073 + $0x10] sm:$0xff]
  %v1077 = vld [vmem:[%s1073 + $0x18] sm:$0xff]
  %v1078 = vpack.c.bf16 %v1072, %v1072
  %v1080 = vsel %vm57, %v1078, 0
  %1082 = vmatprep.subr.bf16.mxu0 0
  %1083 = vmatpush1.bf16.msra.mxu0 %v53
  %1084 = vmatprep.subr.bf16.mxu0 0
  %1085 = vmatpush1.bf16.msra.mxu0 %v54
  %1086 = vmatprep.subr.bf16.mxu0 0
  %1087 = vmatpush1.bf16.msra.mxu0 0
  %1088 = vmatprep.subr.bf16.mxu0 0
  %1089 = vmatpush1.bf16.msra.mxu0 0
  %1090 = vmatprep.subr.bf16.mxu0 0
  %1091 = vmatpush1.bf16.msra.mxu0 0
  %1092 = vmatprep.subr.bf16.mxu0 0
  %1093 = vmatpush1.bf16.msra.mxu0 0
  %1094 = vmatprep.subr.bf16.mxu0 0
  %1095 = vmatpush1.bf16.msra.mxu0 0
  %1096 = vmatprep.subr.bf16.mxu0 0
  %1097 = vmatpush1.bf16.msra.mxu0 0
  %1098 = vmatprep.subr.bf16.mxu0 0
  %1099 = vmatpush1.bf16.msra.mxu0 0
  %1100 = vmatprep.subr.bf16.mxu0 0
  %1101 = vmatpush1.bf16.msra.mxu0 0
  %1102 = vmatprep.subr.bf16.mxu0 0
  %1103 = vmatpush1.bf16.msra.mxu0 0
  %1104 = vmatprep.subr.bf16.mxu0 0
  %1105 = vmatpush1.bf16.msra.mxu0 0
  %1106 = vmatprep.subr.bf16.mxu0 0
  %1107 = vmatpush1.bf16.msra.mxu0 0
  %1108 = vmatprep.subr.bf16.mxu0 0
  %1109 = vmatpush1.bf16.msra.mxu0 0
  %1110 = vmatprep.subr.bf16.mxu0 0
  %1111 = vmatpush1.bf16.msra.mxu0 0
  %1112 = vmatprep.subr.bf16.mxu0 0
  %1113 = vmatpush1.bf16.msra.mxu0 0
  %1114 = vmatprep.mubr.bf16.mxu0 0
  %1115 = vmatmul.mubr.bf16.gmra.mrb[0].mxu0 %v1080
  %v1116 = vpop.f32.mrb[0].mxu0
  %v1117 = vadd.f32 0.0, %v1116
  %v1118 = vpop.f32.mrb[0].mxu0
  %v1119 = vpop.f32.mrb[0].mxu0
  %v1120 = vpop.f32.mrb[0].mxu0
  %1121 = vdwg.mxu0
  %v1122 = vadd.f32 %v1074, %v1117
  %1123 = vmatprep.subr.bf16.mxu0 0
  %1124 = vmatpush1.bf16.msra.mxu0 %v110
  %1125 = vmatprep.subr.bf16.mxu0 0
  %1126 = vmatpush1.bf16.msra.mxu0 %v111
  %1127 = vmatprep.subr.bf16.mxu0 0
  %1128 = vmatpush1.bf16.msra.mxu0 0
  %1129 = vmatprep.subr.bf16.mxu0 0
  %1130 = vmatpush1.bf16.msra.mxu0 0
  %1131 = vmatprep.subr.bf16.mxu0 0
  %1132 = vmatpush1.bf16.msra.mxu0 0
  %1133 = vmatprep.subr.bf16.mxu0 0
  %1134 = vmatpush1.bf16.msra.mxu0 0
  %1135 = vmatprep.subr.bf16.mxu0 0
  %1136 = vmatpush1.bf16.msra.mxu0 0
  %1137 = vmatprep.subr.bf16.mxu0 0
  %1138 = vmatpush1.bf16.msra.mxu0 0
  %1139 = vmatprep.subr.bf16.mxu0 0
  %1140 = vmatpush1.bf16.msra.mxu0 0
  %1141 = vmatprep.subr.bf16.mxu0 0
  %1142 = vmatpush1.bf16.msra.mxu0 0
  %1143 = vmatprep.subr.bf16.mxu0 0
  %1144 = vmatpush1.bf16.msra.mxu0 0
  %1145 = vmatprep.subr.bf16.mxu0 0
  %1146 = vmatpush1.bf16.msra.mxu0 0
  %1147 = vmatprep.subr.bf16.mxu0 0
  %1148 = vmatpush1.bf16.msra.mxu0 0
  %1149 = vmatprep.subr.bf16.mxu0 0
  %1150 = vmatpush1.bf16.msra.mxu0 0
  %1151 = vmatprep.subr.bf16.mxu0 0
  %1152 = vmatpush1.bf16.msra.mxu0 0
  %1153 = vmatprep.subr.bf16.mxu0 0
  %1154 = vmatpush1.bf16.msra.mxu0 0
  %1155 = vmatprep.mubr.bf16.mxu0 0
  %1156 = vmatmul.mubr.bf16.gmra.mrb[0].mxu0 %v1080
  %v1157 = vpop.f32.mrb[0].mxu0
  %v1158 = vadd.f32 0.0, %v1157
  %v1159 = vpop.f32.mrb[0].mxu0
  %v1160 = vpop.f32.mrb[0].mxu0
  %v1161 = vpop.f32.mrb[0].mxu0
  %1162 = vdwg.mxu0
  %v1163 = vadd.f32 %v1075, %v1158
  %1164 = vmatprep.subr.bf16.mxu0 0
  %1165 = vmatpush1.bf16.msra.mxu0 %v163
  %1166 = vmatprep.subr.bf16.mxu0 0
  %1167 = vmatpush1.bf16.msra.mxu0 %v164
  %1168 = vmatprep.subr.bf16.mxu0 0
  %1169 = vmatpush1.bf16.msra.mxu0 0
  %1170 = vmatprep.subr.bf16.mxu0 0
  %1171 = vmatpush1.bf16.msra.mxu0 0
  %1172 = vmatprep.subr.bf16.mxu0 0
  %1173 = vmatpush1.bf16.msra.mxu0 0
  %1174 = vmatprep.subr.bf16.mxu0 0
  %1175 = vmatpush1.bf16.msra.mxu0 0
  %1176 = vmatprep.subr.bf16.mxu0 0
  %1177 = vmatpush1.bf16.msra.mxu0 0
  %1178 = vmatprep.subr.bf16.mxu0 0
  %1179 = vmatpush1.bf16.msra.mxu0 0
  %1180 = vmatprep.subr.bf16.mxu0 0
  %1181 = vmatpush1.bf16.msra.mxu0 0
  %1182 = vmatprep.subr.bf16.mxu0 0
  %1183 = vmatpush1.bf16.msra.mxu0 0
  %1184 = vmatprep.subr.bf16.mxu0 0
  %1185 = vmatpush1.bf16.msra.mxu0 0
  %1186 = vmatprep.subr.bf16.mxu0 0
  %1187 = vmatpush1.bf16.msra.mxu0 0
  %1188 = vmatprep.subr.bf16.mxu0 0
  %1189 = vmatpush1.bf16.msra.mxu0 0
  %1190 = vmatprep.subr.bf16.mxu0 0
  %1191 = vmatpush1.bf16.msra.mxu0 0
  %1192 = vmatprep.subr.bf16.mxu0 0
  %1193 = vmatpush1.bf16.msra.mxu0 0
  %1194 = vmatprep.subr.bf16.mxu0 0
  %1195 = vmatpush1.bf16.msra.mxu0 0
  %1196 = vmatprep.mubr.bf16.mxu0 0
  %1197 = vmatmul.mubr.bf16.gmra.mrb[0].mxu0 %v1080
  %v1198 = vpop.f32.mrb[0].mxu0
  %v1199 = vadd.f32 0.0, %v1198
  %v1200 = vpop.f32.mrb[0].mxu0
  %v1201 = vpop.f32.mrb[0].mxu0
  %v1202 = vpop.f32.mrb[0].mxu0
  %1203 = vdwg.mxu0
  %v1204 = vadd.f32 %v1076, %v1199
  %1205 = vmatprep.subr.bf16.mxu0 0
  %1206 = vmatpush1.bf16.msra.mxu0 %v216
  %1207 = vmatprep.subr.bf16.mxu0 0
  %1208 = vmatpush1.bf16.msra.mxu0 %v217
  %1209 = vmatprep.subr.bf16.mxu0 0
  %1210 = vmatpush1.bf16.msra.mxu0 0
  %1211 = vmatprep.subr.bf16.mxu0 0
  %1212 = vmatpush1.bf16.msra.mxu0 0
  %1213 = vmatprep.subr.bf16.mxu0 0
  %1214 = vmatpush1.bf16.msra.mxu0 0
  %1215 = vmatprep.subr.bf16.mxu0 0
  %1216 = vmatpush1.bf16.msra.mxu0 0
  %1217 = vmatprep.subr.bf16.mxu0 0
  %1218 = vmatpush1.bf16.msra.mxu0 0
  %1219 = vmatprep.subr.bf16.mxu0 0
  %1220 = vmatpush1.bf16.msra.mxu0 0
  %1221 = vmatprep.subr.bf16.mxu0 0
  %1222 = vmatpush1.bf16.msra.mxu0 0
  %1223 = vmatprep.subr.bf16.mxu0 0
  %1224 = vmatpush1.bf16.msra.mxu0 0
  %1225 = vmatprep.subr.bf16.mxu0 0
  %1226 = vmatpush1.bf16.msra.mxu0 0
  %1227 = vmatprep.subr.bf16.mxu0 0
  %1228 = vmatpush1.bf16.msra.mxu0 0
  %1229 = vmatprep.subr.bf16.mxu0 0
  %1230 = vmatpush1.bf16.msra.mxu0 0
  %1231 = vmatprep.subr.bf16.mxu0 0
  %1232 = vmatpush1.bf16.msra.mxu0 0
  %1233 = vmatprep.subr.bf16.mxu0 0
  %1234 = vmatpush1.bf16.msra.mxu0 0
  %1235 = vmatprep.subr.bf16.mxu0 0
  %1236 = vmatpush1.bf16.msra.mxu0 0
  %1237 = vmatprep.mubr.bf16.mxu0 0
  %1238 = vmatmul.mubr.bf16.gmra.mrb[0].mxu0 %v1080
  %v1239 = vpop.f32.mrb[0].mxu0
  %v1240 = vadd.f32 0.0, %v1239
  %v1241 = vpop.f32.mrb[0].mxu0
  %v1242 = vpop.f32.mrb[0].mxu0
  %v1243 = vpop.f32.mrb[0].mxu0
  %1244 = vdwg.mxu0
  %v1245 = vadd.f32 %v1077, %v1240
  %v1246 = vxor.u32 %v1122, 2147483648
  %v1247 = vmul.f32 %v1246, 1.442695
  %v1248 = vpow.pop %v1247
  %v1249 = vadd.f32 %v1248, 1.0
  %v1250 = vrcp.pop %v1249
  %v1251 = vmul.f32 1.0, %v1250
  %v1252 = vxor.u32 %v1163, 2147483648
  %v1253 = vmul.f32 %v1252, 1.442695
  %v1254 = vpow.pop %v1253
  %v1255 = vadd.f32 %v1254, 1.0
  %v1256 = vrcp.pop %v1255
  %v1257 = vmul.f32 1.0, %v1256
  %v1258 = vtanh.pop %v1204
  %v1259 = vxor.u32 %v1245, 2147483648
  %v1260 = vmul.f32 %v1259, 1.442695
  %v1261 = vpow.pop %v1260
  %v1262 = vadd.f32 %v1261, 1.0
  %v1263 = vrcp.pop %v1262
  %v1264 = vmul.f32 1.0, %v1263
  %v1265 = vmul.f32 %v1257, %v1070
  %v1266 = vmul.f32 %v1251, %v1258
  %v1267 = vadd.f32 %v1265, %v1266
  %v1268 = vtanh.pop %v1267
  %v1269 = vmul.f32 %v1264, %v1268
  %s1270 = scalar_lea.vmem %s0, 192
  %v1271 = vld [vmem:[%s1270] sm:$0xff]
  %v1272 = vld [vmem:[%s1270 + $0x8] sm:$0xff]
  %v1273 = vld [vmem:[%s1270 + $0x10] sm:$0xff]
  %v1274 = vld [vmem:[%s1270 + $0x18] sm:$0xff]
  %v1275 = vpack.c.bf16 %v1269, %v1269
  %v1277 = vsel %vm57, %v1275, 0
  %1279 = vmatprep.subr.bf16.mxu0 0
  %1280 = vmatpush1.bf16.msra.mxu0 %v53
  %1281 = vmatprep.subr.bf16.mxu0 0
  %1282 = vmatpush1.bf16.msra.mxu0 %v54
  %1283 = vmatprep.subr.bf16.mxu0 0
  %1284 = vmatpush1.bf16.msra.mxu0 0
  %1285 = vmatprep.subr.bf16.mxu0 0
  %1286 = vmatpush1.bf16.msra.mxu0 0
  %1287 = vmatprep.subr.bf16.mxu0 0
  %1288 = vmatpush1.bf16.msra.mxu0 0
  %1289 = vmatprep.subr.bf16.mxu0 0
  %1290 = vmatpush1.bf16.msra.mxu0 0
  %1291 = vmatprep.subr.bf16.mxu0 0
  %1292 = vmatpush1.bf16.msra.mxu0 0
  %1293 = vmatprep.subr.bf16.mxu0 0
  %1294 = vmatpush1.bf16.msra.mxu0 0
  %1295 = vmatprep.subr.bf16.mxu0 0
  %1296 = vmatpush1.bf16.msra.mxu0 0
  %1297 = vmatprep.subr.bf16.mxu0 0
  %1298 = vmatpush1.bf16.msra.mxu0 0
  %1299 = vmatprep.subr.bf16.mxu0 0
  %1300 = vmatpush1.bf16.msra.mxu0 0
  %1301 = vmatprep.subr.bf16.mxu0 0
  %1302 = vmatpush1.bf16.msra.mxu0 0
  %1303 = vmatprep.subr.bf16.mxu0 0
  %1304 = vmatpush1.bf16.msra.mxu0 0
  %1305 = vmatprep.subr.bf16.mxu0 0
  %1306 = vmatpush1.bf16.msra.mxu0 0
  %1307 = vmatprep.subr.bf16.mxu0 0
  %1308 = vmatpush1.bf16.msra.mxu0 0
  %1309 = vmatprep.subr.bf16.mxu0 0
  %1310 = vmatpush1.bf16.msra.mxu0 0
  %1311 = vmatprep.mubr.bf16.mxu0 0
  %1312 = vmatmul.mubr.bf16.gmra.mrb[0].mxu0 %v1277
  %v1313 = vpop.f32.mrb[0].mxu0
  %v1314 = vadd.f32 0.0, %v1313
  %v1315 = vpop.f32.mrb[0].mxu0
  %v1316 = vpop.f32.mrb[0].mxu0
  %v1317 = vpop.f32.mrb[0].mxu0
  %1318 = vdwg.mxu0
  %v1319 = vadd.f32 %v1271, %v1314
  %1320 = vmatprep.subr.bf16.mxu0 0
  %1321 = vmatpush1.bf16.msra.mxu0 %v110
  %1322 = vmatprep.subr.bf16.mxu0 0
  %1323 = vmatpush1.bf16.msra.mxu0 %v111
  %1324 = vmatprep.subr.bf16.mxu0 0
  %1325 = vmatpush1.bf16.msra.mxu0 0
  %1326 = vmatprep.subr.bf16.mxu0 0
  %1327 = vmatpush1.bf16.msra.mxu0 0
  %1328 = vmatprep.subr.bf16.mxu0 0
  %1329 = vmatpush1.bf16.msra.mxu0 0
  %1330 = vmatprep.subr.bf16.mxu0 0
  %1331 = vmatpush1.bf16.msra.mxu0 0
  %1332 = vmatprep.subr.bf16.mxu0 0
  %1333 = vmatpush1.bf16.msra.mxu0 0
  %1334 = vmatprep.subr.bf16.mxu0 0
  %1335 = vmatpush1.bf16.msra.mxu0 0
  %1336 = vmatprep.subr.bf16.mxu0 0
  %1337 = vmatpush1.bf16.msra.mxu0 0
  %1338 = vmatprep.subr.bf16.mxu0 0
  %1339 = vmatpush1.bf16.msra.mxu0 0
  %1340 = vmatprep.subr.bf16.mxu0 0
  %1341 = vmatpush1.bf16.msra.mxu0 0
  %1342 = vmatprep.subr.bf16.mxu0 0
  %1343 = vmatpush1.bf16.msra.mxu0 0
  %1344 = vmatprep.subr.bf16.mxu0 0
  %1345 = vmatpush1.bf16.msra.mxu0 0
  %1346 = vmatprep.subr.bf16.mxu0 0
  %1347 = vmatpush1.bf16.msra.mxu0 0
  %1348 = vmatprep.subr.bf16.mxu0 0
  %1349 = vmatpush1.bf16.msra.mxu0 0
  %1350 = vmatprep.subr.bf16.mxu0 0
  %1351 = vmatpush1.bf16.msra.mxu0 0
  %1352 = vmatprep.mubr.bf16.mxu0 0
  %1353 = vmatmul.mubr.bf16.gmra.mrb[0].mxu0 %v1277
  %v1354 = vpop.f32.mrb[0].mxu0
  %v1355 = vadd.f32 0.0, %v1354
  %v1356 = vpop.f32.mrb[0].mxu0
  %v1357 = vpop.f32.mrb[0].mxu0
  %v1358 = vpop.f32.mrb[0].mxu0
  %1359 = vdwg.mxu0
  %v1360 = vadd.f32 %v1272, %v1355
  %1361 = vmatprep.subr.bf16.mxu0 0
  %1362 = vmatpush1.bf16.msra.mxu0 %v163
  %1363 = vmatprep.subr.bf16.mxu0 0
  %1364 = vmatpush1.bf16.msra.mxu0 %v164
  %1365 = vmatprep.subr.bf16.mxu0 0
  %1366 = vmatpush1.bf16.msra.mxu0 0
  %1367 = vmatprep.subr.bf16.mxu0 0
  %1368 = vmatpush1.bf16.msra.mxu0 0
  %1369 = vmatprep.subr.bf16.mxu0 0
  %1370 = vmatpush1.bf16.msra.mxu0 0
  %1371 = vmatprep.subr.bf16.mxu0 0
  %1372 = vmatpush1.bf16.msra.mxu0 0
  %1373 = vmatprep.subr.bf16.mxu0 0
  %1374 = vmatpush1.bf16.msra.mxu0 0
  %1375 = vmatprep.subr.bf16.mxu0 0
  %1376 = vmatpush1.bf16.msra.mxu0 0
  %1377 = vmatprep.subr.bf16.mxu0 0
  %1378 = vmatpush1.bf16.msra.mxu0 0
  %1379 = vmatprep.subr.bf16.mxu0 0
  %1380 = vmatpush1.bf16.msra.mxu0 0
  %1381 = vmatprep.subr.bf16.mxu0 0
  %1382 = vmatpush1.bf16.msra.mxu0 0
  %1383 = vmatprep.subr.bf16.mxu0 0
  %1384 = vmatpush1.bf16.msra.mxu0 0
  %1385 = vmatprep.subr.bf16.mxu0 0
  %1386 = vmatpush1.bf16.msra.mxu0 0
  %1387 = vmatprep.subr.bf16.mxu0 0
  %1388 = vmatpush1.bf16.msra.mxu0 0
  %1389 = vmatprep.subr.bf16.mxu0 0
  %1390 = vmatpush1.bf16.msra.mxu0 0
  %1391 = vmatprep.subr.bf16.mxu0 0
  %1392 = vmatpush1.bf16.msra.mxu0 0
  %1393 = vmatprep.mubr.bf16.mxu0 0
  %1394 = vmatmul.mubr.bf16.gmra.mrb[0].mxu0 %v1277
  %v1395 = vpop.f32.mrb[0].mxu0
  %v1396 = vadd.f32 0.0, %v1395
  %v1397 = vpop.f32.mrb[0].mxu0
  %v1398 = vpop.f32.mrb[0].mxu0
  %v1399 = vpop.f32.mrb[0].mxu0
  %1400 = vdwg.mxu0
  %v1401 = vadd.f32 %v1273, %v1396
  %1402 = vmatprep.subr.bf16.mxu0 0
  %1403 = vmatpush1.bf16.msra.mxu0 %v216
  %1404 = vmatprep.subr.bf16.mxu0 0
  %1405 = vmatpush1.bf16.msra.mxu0 %v217
  %1406 = vmatprep.subr.bf16.mxu0 0
  %1407 = vmatpush1.bf16.msra.mxu0 0
  %1408 = vmatprep.subr.bf16.mxu0 0
  %1409 = vmatpush1.bf16.msra.mxu0 0
  %1410 = vmatprep.subr.bf16.mxu0 0
  %1411 = vmatpush1.bf16.msra.mxu0 0
  %1412 = vmatprep.subr.bf16.mxu0 0
  %1413 = vmatpush1.bf16.msra.mxu0 0
  %1414 = vmatprep.subr.bf16.mxu0 0
  %1415 = vmatpush1.bf16.msra.mxu0 0
  %1416 = vmatprep.subr.bf16.mxu0 0
  %1417 = vmatpush1.bf16.msra.mxu0 0
  %1418 = vmatprep.subr.bf16.mxu0 0
  %1419 = vmatpush1.bf16.msra.mxu0 0
  %1420 = vmatprep.subr.bf16.mxu0 0
  %1421 = vmatpush1.bf16.msra.mxu0 0
  %1422 = vmatprep.subr.bf16.mxu0 0
  %1423 = vmatpush1.bf16.msra.mxu0 0
  %1424 = vmatprep.subr.bf16.mxu0 0
  %1425 = vmatpush1.bf16.msra.mxu0 0
  %1426 = vmatprep.subr.bf16.mxu0 0
  %1427 = vmatpush1.bf16.msra.mxu0 0
  %1428 = vmatprep.subr.bf16.mxu0 0
  %1429 = vmatpush1.bf16.msra.mxu0 0
  %1430 = vmatprep.subr.bf16.mxu0 0
  %1431 = vmatpush1.bf16.msra.mxu0 0
  %1432 = vmatprep.subr.bf16.mxu0 0
  %1433 = vmatpush1.bf16.msra.mxu0 0
  %1434 = vmatprep.mubr.bf16.mxu0 0
  %1435 = vmatmul.mubr.bf16.gmra.mrb[0].mxu0 %v1277
  %v1436 = vpop.f32.mrb[0].mxu0
  %v1437 = vadd.f32 0.0, %v1436
  %v1438 = vpop.f32.mrb[0].mxu0
  %v1439 = vpop.f32.mrb[0].mxu0
  %v1440 = vpop.f32.mrb[0].mxu0
  %1441 = vdwg.mxu0
  %v1442 = vadd.f32 %v1274, %v1437
  %v1443 = vxor.u32 %v1319, 2147483648
  %v1444 = vmul.f32 %v1443, 1.442695
  %v1445 = vpow.pop %v1444
  %v1446 = vadd.f32 %v1445, 1.0
  %v1447 = vrcp.pop %v1446
  %v1448 = vmul.f32 1.0, %v1447
  %v1449 = vxor.u32 %v1360, 2147483648
  %v1450 = vmul.f32 %v1449, 1.442695
  %v1451 = vpow.pop %v1450
  %v1452 = vadd.f32 %v1451, 1.0
  %v1453 = vrcp.pop %v1452
  %v1454 = vmul.f32 1.0, %v1453
  %v1455 = vtanh.pop %v1401
  %v1456 = vxor.u32 %v1442, 2147483648
  %v1457 = vmul.f32 %v1456, 1.442695
  %v1458 = vpow.pop %v1457
  %v1459 = vadd.f32 %v1458, 1.0
  %v1460 = vrcp.pop %v1459
  %v1461 = vmul.f32 1.0, %v1460
  %v1462 = vmul.f32 %v1454, %v1267
  %v1463 = vmul.f32 %v1448, %v1455
  %v1464 = vadd.f32 %v1462, %v1463
  %v1465 = vtanh.pop %v1464
  %v1466 = vmul.f32 %v1461, %v1465
  %s1467 = scalar_lea.vmem %s0, 224
  %v1468 = vld [vmem:[%s1467] sm:$0xff]
  %v1469 = vld [vmem:[%s1467 + $0x8] sm:$0xff]
  %v1470 = vld [vmem:[%s1467 + $0x10] sm:$0xff]
  %v1471 = vld [vmem:[%s1467 + $0x18] sm:$0xff]
  %v1472 = vpack.c.bf16 %v1466, %v1466
  %v1474 = vsel %vm57, %v1472, 0
  %1476 = vmatprep.subr.bf16.mxu0 0
  %1477 = vmatpush1.bf16.msra.mxu0 %v53
  %1478 = vmatprep.subr.bf16.mxu0 0
  %1479 = vmatpush1.bf16.msra.mxu0 %v54
  %1480 = vmatprep.subr.bf16.mxu0 0
  %1481 = vmatpush1.bf16.msra.mxu0 0
  %1482 = vmatprep.subr.bf16.mxu0 0
  %1483 = vmatpush1.bf16.msra.mxu0 0
  %1484 = vmatprep.subr.bf16.mxu0 0
  %1485 = vmatpush1.bf16.msra.mxu0 0
  %1486 = vmatprep.subr.bf16.mxu0 0
  %1487 = vmatpush1.bf16.msra.mxu0 0
  %1488 = vmatprep.subr.bf16.mxu0 0
  %1489 = vmatpush1.bf16.msra.mxu0 0
  %1490 = vmatprep.subr.bf16.mxu0 0
  %1491 = vmatpush1.bf16.msra.mxu0 0
  %1492 = vmatprep.subr.bf16.mxu0 0
  %1493 = vmatpush1.bf16.msra.mxu0 0
  %1494 = vmatprep.subr.bf16.mxu0 0
  %1495 = vmatpush1.bf16.msra.mxu0 0
  %1496 = vmatprep.subr.bf16.mxu0 0
  %1497 = vmatpush1.bf16.msra.mxu0 0
  %1498 = vmatprep.subr.bf16.mxu0 0
  %1499 = vmatpush1.bf16.msra.mxu0 0
  %1500 = vmatprep.subr.bf16.mxu0 0
  %1501 = vmatpush1.bf16.msra.mxu0 0
  %1502 = vmatprep.subr.bf16.mxu0 0
  %1503 = vmatpush1.bf16.msra.mxu0 0
  %1504 = vmatprep.subr.bf16.mxu0 0
  %1505 = vmatpush1.bf16.msra.mxu0 0
  %1506 = vmatprep.subr.bf16.mxu0 0
  %1507 = vmatpush1.bf16.msra.mxu0 0
  %1508 = vmatprep.mubr.bf16.mxu0 0
  %1509 = vmatmul.mubr.bf16.gmra.mrb[0].mxu0 %v1474
  %v1510 = vpop.f32.mrb[0].mxu0
  %v1511 = vadd.f32 0.0, %v1510
  %v1512 = vpop.f32.mrb[0].mxu0
  %v1513 = vpop.f32.mrb[0].mxu0
  %v1514 = vpop.f32.mrb[0].mxu0
  %1515 = vdwg.mxu0
  %v1516 = vadd.f32 %v1468, %v1511
  %1517 = vmatprep.subr.bf16.mxu0 0
  %1518 = vmatpush1.bf16.msra.mxu0 %v110
  %1519 = vmatprep.subr.bf16.mxu0 0
  %1520 = vmatpush1.bf16.msra.mxu0 %v111
  %1521 = vmatprep.subr.bf16.mxu0 0
  %1522 = vmatpush1.bf16.msra.mxu0 0
  %1523 = vmatprep.subr.bf16.mxu0 0
  %1524 = vmatpush1.bf16.msra.mxu0 0
  %1525 = vmatprep.subr.bf16.mxu0 0
  %1526 = vmatpush1.bf16.msra.mxu0 0
  %1527 = vmatprep.subr.bf16.mxu0 0
  %1528 = vmatpush1.bf16.msra.mxu0 0
  %1529 = vmatprep.subr.bf16.mxu0 0
  %1530 = vmatpush1.bf16.msra.mxu0 0
  %1531 = vmatprep.subr.bf16.mxu0 0
  %1532 = vmatpush1.bf16.msra.mxu0 0
  %1533 = vmatprep.subr.bf16.mxu0 0
  %1534 = vmatpush1.bf16.msra.mxu0 0
  %1535 = vmatprep.subr.bf16.mxu0 0
  %1536 = vmatpush1.bf16.msra.mxu0 0
  %1537 = vmatprep.subr.bf16.mxu0 0
  %1538 = vmatpush1.bf16.msra.mxu0 0
  %1539 = vmatprep.subr.bf16.mxu0 0
  %1540 = vmatpush1.bf16.msra.mxu0 0
  %1541 = vmatprep.subr.bf16.mxu0 0
  %1542 = vmatpush1.bf16.msra.mxu0 0
  %1543 = vmatprep.subr.bf16.mxu0 0
  %1544 = vmatpush1.bf16.msra.mxu0 0
  %1545 = vmatprep.subr.bf16.mxu0 0
  %1546 = vmatpush1.bf16.msra.mxu0 0
  %1547 = vmatprep.subr.bf16.mxu0 0
  %1548 = vmatpush1.bf16.msra.mxu0 0
  %1549 = vmatprep.mubr.bf16.mxu0 0
  %1550 = vmatmul.mubr.bf16.gmra.mrb[0].mxu0 %v1474
  %v1551 = vpop.f32.mrb[0].mxu0
  %v1552 = vadd.f32 0.0, %v1551
  %v1553 = vpop.f32.mrb[0].mxu0
  %v1554 = vpop.f32.mrb[0].mxu0
  %v1555 = vpop.f32.mrb[0].mxu0
  %1556 = vdwg.mxu0
  %v1557 = vadd.f32 %v1469, %v1552
  %1558 = vmatprep.subr.bf16.mxu0 0
  %1559 = vmatpush1.bf16.msra.mxu0 %v163
  %1560 = vmatprep.subr.bf16.mxu0 0
  %1561 = vmatpush1.bf16.msra.mxu0 %v164
  %1562 = vmatprep.subr.bf16.mxu0 0
  %1563 = vmatpush1.bf16.msra.mxu0 0
  %1564 = vmatprep.subr.bf16.mxu0 0
  %1565 = vmatpush1.bf16.msra.mxu0 0
  %1566 = vmatprep.subr.bf16.mxu0 0
  %1567 = vmatpush1.bf16.msra.mxu0 0
  %1568 = vmatprep.subr.bf16.mxu0 0
  %1569 = vmatpush1.bf16.msra.mxu0 0
  %1570 = vmatprep.subr.bf16.mxu0 0
  %1571 = vmatpush1.bf16.msra.mxu0 0
  %1572 = vmatprep.subr.bf16.mxu0 0
  %1573 = vmatpush1.bf16.msra.mxu0 0
  %1574 = vmatprep.subr.bf16.mxu0 0
  %1575 = vmatpush1.bf16.msra.mxu0 0
  %1576 = vmatprep.subr.bf16.mxu0 0
  %1577 = vmatpush1.bf16.msra.mxu0 0
  %1578 = vmatprep.subr.bf16.mxu0 0
  %1579 = vmatpush1.bf16.msra.mxu0 0
  %1580 = vmatprep.subr.bf16.mxu0 0
  %1581 = vmatpush1.bf16.msra.mxu0 0
  %1582 = vmatprep.subr.bf16.mxu0 0
  %1583 = vmatpush1.bf16.msra.mxu0 0
  %1584 = vmatprep.subr.bf16.mxu0 0
  %1585 = vmatpush1.bf16.msra.mxu0 0
  %1586 = vmatprep.subr.bf16.mxu0 0
  %1587 = vmatpush1.bf16.msra.mxu0 0
  %1588 = vmatprep.subr.bf16.mxu0 0
  %1589 = vmatpush1.bf16.msra.mxu0 0
  %1590 = vmatprep.mubr.bf16.mxu0 0
  %1591 = vmatmul.mubr.bf16.gmra.mrb[0].mxu0 %v1474
  %v1592 = vpop.f32.mrb[0].mxu0
  %v1593 = vadd.f32 0.0, %v1592
  %v1594 = vpop.f32.mrb[0].mxu0
  %v1595 = vpop.f32.mrb[0].mxu0
  %v1596 = vpop.f32.mrb[0].mxu0
  %1597 = vdwg.mxu0
  %v1598 = vadd.f32 %v1470, %v1593
  %1599 = vmatprep.subr.bf16.mxu0 0
  %1600 = vmatpush1.bf16.msra.mxu0 %v216
  %1601 = vmatprep.subr.bf16.mxu0 0
  %1602 = vmatpush1.bf16.msra.mxu0 %v217
  %1603 = vmatprep.subr.bf16.mxu0 0
  %1604 = vmatpush1.bf16.msra.mxu0 0
  %1605 = vmatprep.subr.bf16.mxu0 0
  %1606 = vmatpush1.bf16.msra.mxu0 0
  %1607 = vmatprep.subr.bf16.mxu0 0
  %1608 = vmatpush1.bf16.msra.mxu0 0
  %1609 = vmatprep.subr.bf16.mxu0 0
  %1610 = vmatpush1.bf16.msra.mxu0 0
  %1611 = vmatprep.subr.bf16.mxu0 0
  %1612 = vmatpush1.bf16.msra.mxu0 0
  %1613 = vmatprep.subr.bf16.mxu0 0
  %1614 = vmatpush1.bf16.msra.mxu0 0
  %1615 = vmatprep.subr.bf16.mxu0 0
  %1616 = vmatpush1.bf16.msra.mxu0 0
  %1617 = vmatprep.subr.bf16.mxu0 0
  %1618 = vmatpush1.bf16.msra.mxu0 0
  %1619 = vmatprep.subr.bf16.mxu0 0
  %1620 = vmatpush1.bf16.msra.mxu0 0
  %1621 = vmatprep.subr.bf16.mxu0 0
  %1622 = vmatpush1.bf16.msra.mxu0 0
  %1623 = vmatprep.subr.bf16.mxu0 0
  %1624 = vmatpush1.bf16.msra.mxu0 0
  %1625 = vmatprep.subr.bf16.mxu0 0
  %1626 = vmatpush1.bf16.msra.mxu0 0
  %1627 = vmatprep.subr.bf16.mxu0 0
  %1628 = vmatpush1.bf16.msra.mxu0 0
  %1629 = vmatprep.subr.bf16.mxu0 0
  %1630 = vmatpush1.bf16.msra.mxu0 0
  %1631 = vmatprep.mubr.bf16.mxu0 0
  %1632 = vmatmul.mubr.bf16.gmra.mrb[0].mxu0 %v1474
  %v1633 = vpop.f32.mrb[0].mxu0
  %v1634 = vadd.f32 0.0, %v1633
  %v1635 = vpop.f32.mrb[0].mxu0
  %v1636 = vpop.f32.mrb[0].mxu0
  %v1637 = vpop.f32.mrb[0].mxu0
  %1638 = vdwg.mxu0
  %v1639 = vadd.f32 %v1471, %v1634
  %v1640 = vxor.u32 %v1516, 2147483648
  %v1641 = vmul.f32 %v1640, 1.442695
  %v1642 = vpow.pop %v1641
  %v1643 = vadd.f32 %v1642, 1.0
  %v1644 = vrcp.pop %v1643
  %v1645 = vmul.f32 1.0, %v1644
  %v1646 = vxor.u32 %v1557, 2147483648
  %v1647 = vmul.f32 %v1646, 1.442695
  %v1648 = vpow.pop %v1647
  %v1649 = vadd.f32 %v1648, 1.0
  %v1650 = vrcp.pop %v1649
  %v1651 = vmul.f32 1.0, %v1650
  %v1652 = vtanh.pop %v1598
  %v1653 = vxor.u32 %v1639, 2147483648
  %v1654 = vmul.f32 %v1653, 1.442695
  %v1655 = vpow.pop %v1654
  %v1656 = vadd.f32 %v1655, 1.0
  %v1657 = vrcp.pop %v1656
  %v1658 = vmul.f32 1.0, %v1657
  %v1659 = vmul.f32 %v1651, %v1464
  %v1660 = vmul.f32 %v1645, %v1652
  %v1661 = vadd.f32 %v1659, %v1660
  %v1662 = vtanh.pop %v1661
  %v1663 = vmul.f32 %v1658, %v1662
  %1664 = vst.msk [vmem:[#allocation2] sm:$0xff] %vm57, %v1663
  %1665 = vst.msk [vmem:[#allocation3] sm:$0xff] %vm57, %v1661
  // Predicated region
  $region14: #{timeseries_autoencoder_forward.2} parent=0 // pred_check
    %p1666 = pneg %p12
  $region15: #{timeseries_autoencoder_forward.2} parent=0 // pred_check_branch
    %1668 = sbr.rel (%p1666) target = $region17
  $region16: #{timeseries_autoencoder_forward.2} parent=0 // pred_region
    %1669 = vst.msk [vmem:[%s2] sm:$0xff] %vm57, %v1663
  $region17: #{timeseries_autoencoder_forward.2} parent=0 // pred_fallthru
    _
  // Predicated region
  $region18: #{timeseries_autoencoder_forward.2} parent=0 // pred_check
    _
  $region19: #{timeseries_autoencoder_forward.2} parent=0 // pred_check_branch
    %1671 = sbr.rel (0) target = $region21
  $region20: #{timeseries_autoencoder_forward.2} parent=0 // pred_region
    _
  $region21: #{timeseries_autoencoder_forward.2} parent=0 // pred_fallthru
    _
  // Predicated region
  $region22: #{timeseries_autoencoder_forward.2} parent=0 // pred_check
    _
  $region23: #{timeseries_autoencoder_forward.2} parent=0 // pred_check_branch
    %1673 = sbr.rel (0) target = $region25
  $region24: #{timeseries_autoencoder_forward.2} parent=0 // pred_region
    _
  $region25: #{timeseries_autoencoder_forward.2} parent=0 // pred_fallthru
    _

// kernel: timeseries_autoencoder_forward.3
$region0: #{timeseries_autoencoder_forward.3}
  #allocation0 [shape = 'u32[]', space=smem, size = 0x4, offset = 0x4, fixed_abs, tag = 'smem constant byte address 0x4 - core index']
  #allocation1 [shape = 'u32[144,128]{1,0:T(1,128)}', space=vmem, size = 0x12000, scoped, tag = 'internal scratch']
  #allocation2 [shape = 'f32[8,4]{1,0:T(8,128)}', space=vmem, size = 0x1000, scoped, tag = 'scratch operand']
  #allocation3 [shape = 'f32[8,4]{1,0:T(8,128)}', space=vmem, size = 0x1000, scoped, tag = 'scratch operand']
  %s0 = inlined_call_operand.vmem [shape: f32[4,8,4], index: 0, kind: input, shape index: {}]
  %s1 = inlined_call_operand.vmem [shape: bf16[4,4,4], index: 1, kind: input, shape index: {}]
  %s2 = inlined_call_operand.vmem [shape: f32[8,8,4], index: 2, kind: output, shape index: {}]
  %s3 = sld [smem:[#allocation0]]
  $region22: #{timeseries_autoencoder_forward.3} parent=0
    _
  %s5 = ssub.s32 1, %s3
  %s6 = scalar_select 0, %s5, %s3
  // Predicated region
  $region2: #{timeseries_autoencoder_forward.3} parent=0 // pred_check
    _
  $region3: #{timeseries_autoencoder_forward.3} parent=0 // pred_check_branch
    %8 = sbr.rel (0) target = $region5
  $region4: #{timeseries_autoencoder_forward.3} parent=0 // pred_region
    _
  $region5: #{timeseries_autoencoder_forward.3} parent=0 // pred_fallthru
    _
  // Predicated region
  $region6: #{timeseries_autoencoder_forward.3} parent=0 // pred_check
    _
  $region7: #{timeseries_autoencoder_forward.3} parent=0 // pred_check_branch
    %10 = sbr.rel (0) target = $region9
  $region8: #{timeseries_autoencoder_forward.3} parent=0 // pred_region
    _
  $region9: #{timeseries_autoencoder_forward.3} parent=0 // pred_fallthru
    _
  %p12 = scmp.eq.s32.totalorder 0, 0
  // Predicated region
  $region10: #{timeseries_autoencoder_forward.3} parent=0 // pred_check
    %p13 = pneg %p12
  $region11: #{timeseries_autoencoder_forward.3} parent=0 // pred_check_branch
    %15 = sbr.rel (%p13) target = $region13
  $region12: #{timeseries_autoencoder_forward.3} parent=0 // pred_region
    %vm16 = vcmask 31744
    %17 = vst.msk [vmem:[#allocation2] sm:$0xff] %vm16, 0.0
    %18 = vst.msk [vmem:[#allocation3] sm:$0xff] %vm16, 0.0
  $region13: #{timeseries_autoencoder_forward.3} parent=0 // pred_fallthru
    _
  %v19 = vld [vmem:[%s1] sm:$0x3]
  %s20 = scalar_lea.vmem %s1, 2
  %v21 = vld [vmem:[%s20] sm:$0x3]
  %s22 = scalar_lea.vmem %s1, 4
  %v23 = vld [vmem:[%s22] sm:$0x3]
  %s24 = scalar_lea.vmem %s1, 6
  %v25 = vld [vmem:[%s24] sm:$0x3]
  %v26 = vld [vmem:[%s0] sm:$0xff]
  %v27 = vld [vmem:[%s0 + $0x8] sm:$0xff]
  %v28 = vld [vmem:[%s0 + $0x10] sm:$0xff]
  %v29 = vld [vmem:[%s0 + $0x18] sm:$0xff]
  %v30 = vld [vmem:[#allocation2] sm:$0xff]
  %v31 = vld [vmem:[#allocation3] sm:$0xff]
  %v32 = vpack.c.bf16 %v30, %v30
  %vm33 = vcmask 31744
  %v35 = vsel %vm33, %v32, 0
  %vm37 = vcmask 1041408
  %v39 = vsel %vm37, %v19, 0
  %41 = vmatprep.subr.bf16.mxu0 0
  %42 = vmatpush1.bf16.msra.mxu0 %v39
  %43 = vmatprep.subr.bf16.mxu0 0
  %44 = vmatpush1.bf16.msra.mxu0 0
  %45 = vmatprep.subr.bf16.mxu0 0
  %46 = vmatpush1.bf16.msra.mxu0 0
  %47 = vmatprep.subr.bf16.mxu0 0
  %48 = vmatpush1.bf16.msra.mxu0 0
  %49 = vmatprep.subr.bf16.mxu0 0
  %50 = vmatpush1.bf16.msra.mxu0 0
  %51 = vmatprep.subr.bf16.mxu0 0
  %52 = vmatpush1.bf16.msra.mxu0 0
  %53 = vmatprep.subr.bf16.mxu0 0
  %54 = vmatpush1.bf16.msra.mxu0 0
  %55 = vmatprep.subr.bf16.mxu0 0
  %56 = vmatpush1.bf16.msra.mxu0 0
  %57 = vmatprep.subr.bf16.mxu0 0
  %58 = vmatpush1.bf16.msra.mxu0 0
  %59 = vmatprep.subr.bf16.mxu0 0
  %60 = vmatpush1.bf16.msra.mxu0 0
  %61 = vmatprep.subr.bf16.mxu0 0
  %62 = vmatpush1.bf16.msra.mxu0 0
  %63 = vmatprep.subr.bf16.mxu0 0
  %64 = vmatpush1.bf16.msra.mxu0 0
  %65 = vmatprep.subr.bf16.mxu0 0
  %66 = vmatpush1.bf16.msra.mxu0 0
  %67 = vmatprep.subr.bf16.mxu0 0
  %68 = vmatpush1.bf16.msra.mxu0 0
  %69 = vmatprep.subr.bf16.mxu0 0
  %70 = vmatpush1.bf16.msra.mxu0 0
  %71 = vmatprep.subr.bf16.mxu0 0
  %72 = vmatpush1.bf16.msra.mxu0 0
  %73 = vmatprep.mubr.bf16.mxu0 0
  %74 = vmatmul.mubr.bf16.gmra.mrb[0].mxu0 %v35
  %v75 = vpop.f32.mrb[0].mxu0
  %v76 = vadd.f32 0.0, %v75
  %v77 = vpop.f32.mrb[0].mxu0
  %v78 = vpop.f32.mrb[0].mxu0
  %v79 = vpop.f32.mrb[0].mxu0
  %80 = vdwg.mxu0
  %v81 = vadd.f32 %v26, %v76
  %v83 = vsel %vm37, %v21, 0
  %85 = vmatprep.subr.bf16.mxu0 0
  %86 = vmatpush1.bf16.msra.mxu0 %v83
  %87 = vmatprep.subr.bf16.mxu0 0
  %88 = vmatpush1.bf16.msra.mxu0 0
  %89 = vmatprep.subr.bf16.mxu0 0
  %90 = vmatpush1.bf16.msra.mxu0 0
  %91 = vmatprep.subr.bf16.mxu0 0
  %92 = vmatpush1.bf16.msra.mxu0 0
  %93 = vmatprep.subr.bf16.mxu0 0
  %94 = vmatpush1.bf16.msra.mxu0 0
  %95 = vmatprep.subr.bf16.mxu0 0
  %96 = vmatpush1.bf16.msra.mxu0 0
  %97 = vmatprep.subr.bf16.mxu0 0
  %98 = vmatpush1.bf16.msra.mxu0 0
  %99 = vmatprep.subr.bf16.mxu0 0
  %100 = vmatpush1.bf16.msra.mxu0 0
  %101 = vmatprep.subr.bf16.mxu0 0
  %102 = vmatpush1.bf16.msra.mxu0 0
  %103 = vmatprep.subr.bf16.mxu0 0
  %104 = vmatpush1.bf16.msra.mxu0 0
  %105 = vmatprep.subr.bf16.mxu0 0
  %106 = vmatpush1.bf16.msra.mxu0 0
  %107 = vmatprep.subr.bf16.mxu0 0
  %108 = vmatpush1.bf16.msra.mxu0 0
  %109 = vmatprep.subr.bf16.mxu0 0
  %110 = vmatpush1.bf16.msra.mxu0 0
  %111 = vmatprep.subr.bf16.mxu0 0
  %112 = vmatpush1.bf16.msra.mxu0 0
  %113 = vmatprep.subr.bf16.mxu0 0
  %114 = vmatpush1.bf16.msra.mxu0 0
  %115 = vmatprep.subr.bf16.mxu0 0
  %116 = vmatpush1.bf16.msra.mxu0 0
  %117 = vmatprep.mubr.bf16.mxu0 0
  %118 = vmatmul.mubr.bf16.gmra.mrb[0].mxu0 %v35
  %v119 = vpop.f32.mrb[0].mxu0
  %v120 = vadd.f32 0.0, %v119
  %v121 = vpop.f32.mrb[0].mxu0
  %v122 = vpop.f32.mrb[0].mxu0
  %v123 = vpop.f32.mrb[0].mxu0
  %124 = vdwg.mxu0
  %v125 = vadd.f32 %v27, %v120
  %v127 = vsel %vm37, %v23, 0
  %129 = vmatprep.subr.bf16.mxu0 0
  %130 = vmatpush1.bf16.msra.mxu0 %v127
  %131 = vmatprep.subr.bf16.mxu0 0
  %132 = vmatpush1.bf16.msra.mxu0 0
  %133 = vmatprep.subr.bf16.mxu0 0
  %134 = vmatpush1.bf16.msra.mxu0 0
  %135 = vmatprep.subr.bf16.mxu0 0
  %136 = vmatpush1.bf16.msra.mxu0 0
  %137 = vmatprep.subr.bf16.mxu0 0
  %138 = vmatpush1.bf16.msra.mxu0 0
  %139 = vmatprep.subr.bf16.mxu0 0
  %140 = vmatpush1.bf16.msra.mxu0 0
  %141 = vmatprep.subr.bf16.mxu0 0
  %142 = vmatpush1.bf16.msra.mxu0 0
  %143 = vmatprep.subr.bf16.mxu0 0
  %144 = vmatpush1.bf16.msra.mxu0 0
  %145 = vmatprep.subr.bf16.mxu0 0
  %146 = vmatpush1.bf16.msra.mxu0 0
  %147 = vmatprep.subr.bf16.mxu0 0
  %148 = vmatpush1.bf16.msra.mxu0 0
  %149 = vmatprep.subr.bf16.mxu0 0
  %150 = vmatpush1.bf16.msra.mxu0 0
  %151 = vmatprep.subr.bf16.mxu0 0
  %152 = vmatpush1.bf16.msra.mxu0 0
  %153 = vmatprep.subr.bf16.mxu0 0
  %154 = vmatpush1.bf16.msra.mxu0 0
  %155 = vmatprep.subr.bf16.mxu0 0
  %156 = vmatpush1.bf16.msra.mxu0 0
  %157 = vmatprep.subr.bf16.mxu0 0
  %158 = vmatpush1.bf16.msra.mxu0 0
  %159 = vmatprep.subr.bf16.mxu0 0
  %160 = vmatpush1.bf16.msra.mxu0 0
  %161 = vmatprep.mubr.bf16.mxu0 0
  %162 = vmatmul.mubr.bf16.gmra.mrb[0].mxu0 %v35
  %v163 = vpop.f32.mrb[0].mxu0
  %v164 = vadd.f32 0.0, %v163
  %v165 = vpop.f32.mrb[0].mxu0
  %v166 = vpop.f32.mrb[0].mxu0
  %v167 = vpop.f32.mrb[0].mxu0
  %168 = vdwg.mxu0
  %v169 = vadd.f32 %v28, %v164
  %v171 = vsel %vm37, %v25, 0
  %173 = vmatprep.subr.bf16.mxu0 0
  %174 = vmatpush1.bf16.msra.mxu0 %v171
  %175 = vmatprep.subr.bf16.mxu0 0
  %176 = vmatpush1.bf16.msra.mxu0 0
  %177 = vmatprep.subr.bf16.mxu0 0
  %178 = vmatpush1.bf16.msra.mxu0 0
  %179 = vmatprep.subr.bf16.mxu0 0
  %180 = vmatpush1.bf16.msra.mxu0 0
  %181 = vmatprep.subr.bf16.mxu0 0
  %182 = vmatpush1.bf16.msra.mxu0 0
  %183 = vmatprep.subr.bf16.mxu0 0
  %184 = vmatpush1.bf16.msra.mxu0 0
  %185 = vmatprep.subr.bf16.mxu0 0
  %186 = vmatpush1.bf16.msra.mxu0 0
  %187 = vmatprep.subr.bf16.mxu0 0
  %188 = vmatpush1.bf16.msra.mxu0 0
  %189 = vmatprep.subr.bf16.mxu0 0
  %190 = vmatpush1.bf16.msra.mxu0 0
  %191 = vmatprep.subr.bf16.mxu0 0
  %192 = vmatpush1.bf16.msra.mxu0 0
  %193 = vmatprep.subr.bf16.mxu0 0
  %194 = vmatpush1.bf16.msra.mxu0 0
  %195 = vmatprep.subr.bf16.mxu0 0
  %196 = vmatpush1.bf16.msra.mxu0 0
  %197 = vmatprep.subr.bf16.mxu0 0
  %198 = vmatpush1.bf16.msra.mxu0 0
  %199 = vmatprep.subr.bf16.mxu0 0
  %200 = vmatpush1.bf16.msra.mxu0 0
  %201 = vmatprep.subr.bf16.mxu0 0
  %202 = vmatpush1.bf16.msra.mxu0 0
  %203 = vmatprep.subr.bf16.mxu0 0
  %204 = vmatpush1.bf16.msra.mxu0 0
  %205 = vmatprep.mubr.bf16.mxu0 0
  %206 = vmatmul.mubr.bf16.gmra.mrb[0].mxu0 %v35
  %v207 = vpop.f32.mrb[0].mxu0
  %v208 = vadd.f32 0.0, %v207
  %v209 = vpop.f32.mrb[0].mxu0
  %v210 = vpop.f32.mrb[0].mxu0
  %v211 = vpop.f32.mrb[0].mxu0
  %212 = vdwg.mxu0
  %v213 = vadd.f32 %v29, %v208
  %v214 = vxor.u32 %v81, 2147483648
  %v215 = vmul.f32 %v214, 1.442695
  %v216 = vpow.pop %v215
  %v217 = vadd.f32 %v216, 1.0
  %v218 = vrcp.pop %v217
  %v219 = vmul.f32 1.0, %v218
  %v220 = vxor.u32 %v125, 2147483648
  %v221 = vmul.f32 %v220, 1.442695
  %v222 = vpow.pop %v221
  %v223 = vadd.f32 %v222, 1.0
  %v224 = vrcp.pop %v223
  %v225 = vmul.f32 1.0, %v224
  %v226 = vtanh.pop %v169
  %v227 = vxor.u32 %v213, 2147483648
  %v228 = vmul.f32 %v227, 1.442695
  %v229 = vpow.pop %v228
  %v230 = vadd.f32 %v229, 1.0
  %v231 = vrcp.pop %v230
  %v232 = vmul.f32 1.0, %v231
  %v233 = vmul.f32 %v225, %v31
  %v234 = vmul.f32 %v219, %v226
  %v235 = vadd.f32 %v233, %v234
  %v236 = vtanh.pop %v235
  %v237 = vmul.f32 %v232, %v236
  %238 = vst.msk [vmem:[%s2] sm:$0xff] %vm33, %v237
  %v239 = vpack.c.bf16 %v237, %v237
  %v241 = vsel %vm33, %v239, 0
  %243 = vmatprep.subr.bf16.mxu0 0
  %244 = vmatpush1.bf16.msra.mxu0 %v39
  %245 = vmatprep.subr.bf16.mxu0 0
  %246 = vmatpush1.bf16.msra.mxu0 0
  %247 = vmatprep.subr.bf16.mxu0 0
  %248 = vmatpush1.bf16.msra.mxu0 0
  %249 = vmatprep.subr.bf16.mxu0 0
  %250 = vmatpush1.bf16.msra.mxu0 0
  %251 = vmatprep.subr.bf16.mxu0 0
  %252 = vmatpush1.bf16.msra.mxu0 0
  %253 = vmatprep.subr.bf16.mxu0 0
  %254 = vmatpush1.bf16.msra.mxu0 0
  %255 = vmatprep.subr.bf16.mxu0 0
  %256 = vmatpush1.bf16.msra.mxu0 0
  %257 = vmatprep.subr.bf16.mxu0 0
  %258 = vmatpush1.bf16.msra.mxu0 0
  %259 = vmatprep.subr.bf16.mxu0 0
  %260 = vmatpush1.bf16.msra.mxu0 0
  %261 = vmatprep.subr.bf16.mxu0 0
  %262 = vmatpush1.bf16.msra.mxu0 0
  %263 = vmatprep.subr.bf16.mxu0 0
  %264 = vmatpush1.bf16.msra.mxu0 0
  %265 = vmatprep.subr.bf16.mxu0 0
  %266 = vmatpush1.bf16.msra.mxu0 0
  %267 = vmatprep.subr.bf16.mxu0 0
  %268 = vmatpush1.bf16.msra.mxu0 0
  %269 = vmatprep.subr.bf16.mxu0 0
  %270 = vmatpush1.bf16.msra.mxu0 0
  %271 = vmatprep.subr.bf16.mxu0 0
  %272 = vmatpush1.bf16.msra.mxu0 0
  %273 = vmatprep.subr.bf16.mxu0 0
  %274 = vmatpush1.bf16.msra.mxu0 0
  %275 = vmatprep.mubr.bf16.mxu0 0
  %276 = vmatmul.mubr.bf16.gmra.mrb[0].mxu0 %v241
  %v277 = vpop.f32.mrb[0].mxu0
  %v278 = vadd.f32 0.0, %v277
  %v279 = vpop.f32.mrb[0].mxu0
  %v280 = vpop.f32.mrb[0].mxu0
  %v281 = vpop.f32.mrb[0].mxu0
  %282 = vdwg.mxu0
  %v283 = vadd.f32 %v26, %v278
  %284 = vmatprep.subr.bf16.mxu0 0
  %285 = vmatpush1.bf16.msra.mxu0 %v83
  %286 = vmatprep.subr.bf16.mxu0 0
  %287 = vmatpush1.bf16.msra.mxu0 0
  %288 = vmatprep.subr.bf16.mxu0 0
  %289 = vmatpush1.bf16.msra.mxu0 0
  %290 = vmatprep.subr.bf16.mxu0 0
  %291 = vmatpush1.bf16.msra.mxu0 0
  %292 = vmatprep.subr.bf16.mxu0 0
  %293 = vmatpush1.bf16.msra.mxu0 0
  %294 = vmatprep.subr.bf16.mxu0 0
  %295 = vmatpush1.bf16.msra.mxu0 0
  %296 = vmatprep.subr.bf16.mxu0 0
  %297 = vmatpush1.bf16.msra.mxu0 0
  %298 = vmatprep.subr.bf16.mxu0 0
  %299 = vmatpush1.bf16.msra.mxu0 0
  %300 = vmatprep.subr.bf16.mxu0 0
  %301 = vmatpush1.bf16.msra.mxu0 0
  %302 = vmatprep.subr.bf16.mxu0 0
  %303 = vmatpush1.bf16.msra.mxu0 0
  %304 = vmatprep.subr.bf16.mxu0 0
  %305 = vmatpush1.bf16.msra.mxu0 0
  %306 = vmatprep.subr.bf16.mxu0 0
  %307 = vmatpush1.bf16.msra.mxu0 0
  %308 = vmatprep.subr.bf16.mxu0 0
  %309 = vmatpush1.bf16.msra.mxu0 0
  %310 = vmatprep.subr.bf16.mxu0 0
  %311 = vmatpush1.bf16.msra.mxu0 0
  %312 = vmatprep.subr.bf16.mxu0 0
  %313 = vmatpush1.bf16.msra.mxu0 0
  %314 = vmatprep.subr.bf16.mxu0 0
  %315 = vmatpush1.bf16.msra.mxu0 0
  %316 = vmatprep.mubr.bf16.mxu0 0
  %317 = vmatmul.mubr.bf16.gmra.mrb[0].mxu0 %v241
  %v318 = vpop.f32.mrb[0].mxu0
  %v319 = vadd.f32 0.0, %v318
  %v320 = vpop.f32.mrb[0].mxu0
  %v321 = vpop.f32.mrb[0].mxu0
  %v322 = vpop.f32.mrb[0].mxu0
  %323 = vdwg.mxu0
  %v324 = vadd.f32 %v27, %v319
  %325 = vmatprep.subr.bf16.mxu0 0
  %326 = vmatpush1.bf16.msra.mxu0 %v127
  %327 = vmatprep.subr.bf16.mxu0 0
  %328 = vmatpush1.bf16.msra.mxu0 0
  %329 = vmatprep.subr.bf16.mxu0 0
  %330 = vmatpush1.bf16.msra.mxu0 0
  %331 = vmatprep.subr.bf16.mxu0 0
  %332 = vmatpush1.bf16.msra.mxu0 0
  %333 = vmatprep.subr.bf16.mxu0 0
  %334 = vmatpush1.bf16.msra.mxu0 0
  %335 = vmatprep.subr.bf16.mxu0 0
  %336 = vmatpush1.bf16.msra.mxu0 0
  %337 = vmatprep.subr.bf16.mxu0 0
  %338 = vmatpush1.bf16.msra.mxu0 0
  %339 = vmatprep.subr.bf16.mxu0 0
  %340 = vmatpush1.bf16.msra.mxu0 0
  %341 = vmatprep.subr.bf16.mxu0 0
  %342 = vmatpush1.bf16.msra.mxu0 0
  %343 = vmatprep.subr.bf16.mxu0 0
  %344 = vmatpush1.bf16.msra.mxu0 0
  %345 = vmatprep.subr.bf16.mxu0 0
  %346 = vmatpush1.bf16.msra.mxu0 0
  %347 = vmatprep.subr.bf16.mxu0 0
  %348 = vmatpush1.bf16.msra.mxu0 0
  %349 = vmatprep.subr.bf16.mxu0 0
  %350 = vmatpush1.bf16.msra.mxu0 0
  %351 = vmatprep.subr.bf16.mxu0 0
  %352 = vmatpush1.bf16.msra.mxu0 0
  %353 = vmatprep.subr.bf16.mxu0 0
  %354 = vmatpush1.bf16.msra.mxu0 0
  %355 = vmatprep.subr.bf16.mxu0 0
  %356 = vmatpush1.bf16.msra.mxu0 0
  %357 = vmatprep.mubr.bf16.mxu0 0
  %358 = vmatmul.mubr.bf16.gmra.mrb[0].mxu0 %v241
  %v359 = vpop.f32.mrb[0].mxu0
  %v360 = vadd.f32 0.0, %v359
  %v361 = vpop.f32.mrb[0].mxu0
  %v362 = vpop.f32.mrb[0].mxu0
  %v363 = vpop.f32.mrb[0].mxu0
  %364 = vdwg.mxu0
  %v365 = vadd.f32 %v28, %v360
  %366 = vmatprep.subr.bf16.mxu0 0
  %367 = vmatpush1.bf16.msra.mxu0 %v171
  %368 = vmatprep.subr.bf16.mxu0 0
  %369 = vmatpush1.bf16.msra.mxu0 0
  %370 = vmatprep.subr.bf16.mxu0 0
  %371 = vmatpush1.bf16.msra.mxu0 0
  %372 = vmatprep.subr.bf16.mxu0 0
  %373 = vmatpush1.bf16.msra.mxu0 0
  %374 = vmatprep.subr.bf16.mxu0 0
  %375 = vmatpush1.bf16.msra.mxu0 0
  %376 = vmatprep.subr.bf16.mxu0 0
  %377 = vmatpush1.bf16.msra.mxu0 0
  %378 = vmatprep.subr.bf16.mxu0 0
  %379 = vmatpush1.bf16.msra.mxu0 0
  %380 = vmatprep.subr.bf16.mxu0 0
  %381 = vmatpush1.bf16.msra.mxu0 0
  %382 = vmatprep.subr.bf16.mxu0 0
  %383 = vmatpush1.bf16.msra.mxu0 0
  %384 = vmatprep.subr.bf16.mxu0 0
  %385 = vmatpush1.bf16.msra.mxu0 0
  %386 = vmatprep.subr.bf16.mxu0 0
  %387 = vmatpush1.bf16.msra.mxu0 0
  %388 = vmatprep.subr.bf16.mxu0 0
  %389 = vmatpush1.bf16.msra.mxu0 0
  %390 = vmatprep.subr.bf16.mxu0 0
  %391 = vmatpush1.bf16.msra.mxu0 0
  %392 = vmatprep.subr.bf16.mxu0 0
  %393 = vmatpush1.bf16.msra.mxu0 0
  %394 = vmatprep.subr.bf16.mxu0 0
  %395 = vmatpush1.bf16.msra.mxu0 0
  %396 = vmatprep.subr.bf16.mxu0 0
  %397 = vmatpush1.bf16.msra.mxu0 0
  %398 = vmatprep.mubr.bf16.mxu0 0
  %399 = vmatmul.mubr.bf16.gmra.mrb[0].mxu0 %v241
  %v400 = vpop.f32.mrb[0].mxu0
  %v401 = vadd.f32 0.0, %v400
  %v402 = vpop.f32.mrb[0].mxu0
  %v403 = vpop.f32.mrb[0].mxu0
  %v404 = vpop.f32.mrb[0].mxu0
  %405 = vdwg.mxu0
  %v406 = vadd.f32 %v29, %v401
  %v407 = vxor.u32 %v283, 2147483648
  %v408 = vmul.f32 %v407, 1.442695
  %v409 = vpow.pop %v408
  %v410 = vadd.f32 %v409, 1.0
  %v411 = vrcp.pop %v410
  %v412 = vmul.f32 1.0, %v411
  %v413 = vxor.u32 %v324, 2147483648
  %v414 = vmul.f32 %v413, 1.442695
  %v415 = vpow.pop %v414
  %v416 = vadd.f32 %v415, 1.0
  %v417 = vrcp.pop %v416
  %v418 = vmul.f32 1.0, %v417
  %v419 = vtanh.pop %v365
  %v420 = vxor.u32 %v406, 2147483648
  %v421 = vmul.f32 %v420, 1.442695
  %v422 = vpow.pop %v421
  %v423 = vadd.f32 %v422, 1.0
  %v424 = vrcp.pop %v423
  %v425 = vmul.f32 1.0, %v424
  %v426 = vmul.f32 %v418, %v235
  %v427 = vmul.f32 %v412, %v419
  %v428 = vadd.f32 %v426, %v427
  %v429 = vtanh.pop %v428
  %v430 = vmul.f32 %v425, %v429
  %s431 = scalar_lea.vmem %s2, 8
  %432 = vst.msk [vmem:[%s431] sm:$0xff] %vm33, %v430
  %v433 = vpack.c.bf16 %v430, %v430
  %v435 = vsel %vm33, %v433, 0
  %437 = vmatprep.subr.bf16.mxu0 0
  %438 = vmatpush1.bf16.msra.mxu0 %v39
  %439 = vmatprep.subr.bf16.mxu0 0
  %440 = vmatpush1.bf16.msra.mxu0 0
  %441 = vmatprep.subr.bf16.mxu0 0
  %442 = vmatpush1.bf16.msra.mxu0 0
  %443 = vmatprep.subr.bf16.mxu0 0
  %444 = vmatpush1.bf16.msra.mxu0 0
  %445 = vmatprep.subr.bf16.mxu0 0
  %446 = vmatpush1.bf16.msra.mxu0 0
  %447 = vmatprep.subr.bf16.mxu0 0
  %448 = vmatpush1.bf16.msra.mxu0 0
  %449 = vmatprep.subr.bf16.mxu0 0
  %450 = vmatpush1.bf16.msra.mxu0 0
  %451 = vmatprep.subr.bf16.mxu0 0
  %452 = vmatpush1.bf16.msra.mxu0 0
  %453 = vmatprep.subr.bf16.mxu0 0
  %454 = vmatpush1.bf16.msra.mxu0 0
  %455 = vmatprep.subr.bf16.mxu0 0
  %456 = vmatpush1.bf16.msra.mxu0 0
  %457 = vmatprep.subr.bf16.mxu0 0
  %458 = vmatpush1.bf16.msra.mxu0 0
  %459 = vmatprep.subr.bf16.mxu0 0
  %460 = vmatpush1.bf16.msra.mxu0 0
  %461 = vmatprep.subr.bf16.mxu0 0
  %462 = vmatpush1.bf16.msra.mxu0 0
  %463 = vmatprep.subr.bf16.mxu0 0
  %464 = vmatpush1.bf16.msra.mxu0 0
  %465 = vmatprep.subr.bf16.mxu0 0
  %466 = vmatpush1.bf16.msra.mxu0 0
  %467 = vmatprep.subr.bf16.mxu0 0
  %468 = vmatpush1.bf16.msra.mxu0 0
  %469 = vmatprep.mubr.bf16.mxu0 0
  %470 = vmatmul.mubr.bf16.gmra.mrb[0].mxu0 %v435
  %v471 = vpop.f32.mrb[0].mxu0
  %v472 = vadd.f32 0.0, %v471
  %v473 = vpop.f32.mrb[0].mxu0
  %v474 = vpop.f32.mrb[0].mxu0
  %v475 = vpop.f32.mrb[0].mxu0
  %476 = vdwg.mxu0
  %v477 = vadd.f32 %v26, %v472
  %478 = vmatprep.subr.bf16.mxu0 0
  %479 = vmatpush1.bf16.msra.mxu0 %v83
  %480 = vmatprep.subr.bf16.mxu0 0
  %481 = vmatpush1.bf16.msra.mxu0 0
  %482 = vmatprep.subr.bf16.mxu0 0
  %483 = vmatpush1.bf16.msra.mxu0 0
  %484 = vmatprep.subr.bf16.mxu0 0
  %485 = vmatpush1.bf16.msra.mxu0 0
  %486 = vmatprep.subr.bf16.mxu0 0
  %487 = vmatpush1.bf16.msra.mxu0 0
  %488 = vmatprep.subr.bf16.mxu0 0
  %489 = vmatpush1.bf16.msra.mxu0 0
  %490 = vmatprep.subr.bf16.mxu0 0
  %491 = vmatpush1.bf16.msra.mxu0 0
  %492 = vmatprep.subr.bf16.mxu0 0
  %493 = vmatpush1.bf16.msra.mxu0 0
  %494 = vmatprep.subr.bf16.mxu0 0
  %495 = vmatpush1.bf16.msra.mxu0 0
  %496 = vmatprep.subr.bf16.mxu0 0
  %497 = vmatpush1.bf16.msra.mxu0 0
  %498 = vmatprep.subr.bf16.mxu0 0
  %499 = vmatpush1.bf16.msra.mxu0 0
  %500 = vmatprep.subr.bf16.mxu0 0
  %501 = vmatpush1.bf16.msra.mxu0 0
  %502 = vmatprep.subr.bf16.mxu0 0
  %503 = vmatpush1.bf16.msra.mxu0 0
  %504 = vmatprep.subr.bf16.mxu0 0
  %505 = vmatpush1.bf16.msra.mxu0 0
  %506 = vmatprep.subr.bf16.mxu0 0
  %507 = vmatpush1.bf16.msra.mxu0 0
  %508 = vmatprep.subr.bf16.mxu0 0
  %509 = vmatpush1.bf16.msra.mxu0 0
  %510 = vmatprep.mubr.bf16.mxu0 0
  %511 = vmatmul.mubr.bf16.gmra.mrb[0].mxu0 %v435
  %v512 = vpop.f32.mrb[0].mxu0
  %v513 = vadd.f32 0.0, %v512
  %v514 = vpop.f32.mrb[0].mxu0
  %v515 = vpop.f32.mrb[0].mxu0
  %v516 = vpop.f32.mrb[0].mxu0
  %517 = vdwg.mxu0
  %v518 = vadd.f32 %v27, %v513
  %519 = vmatprep.subr.bf16.mxu0 0
  %520 = vmatpush1.bf16.msra.mxu0 %v127
  %521 = vmatprep.subr.bf16.mxu0 0
  %522 = vmatpush1.bf16.msra.mxu0 0
  %523 = vmatprep.subr.bf16.mxu0 0
  %524 = vmatpush1.bf16.msra.mxu0 0
  %525 = vmatprep.subr.bf16.mxu0 0
  %526 = vmatpush1.bf16.msra.mxu0 0
  %527 = vmatprep.subr.bf16.mxu0 0
  %528 = vmatpush1.bf16.msra.mxu0 0
  %529 = vmatprep.subr.bf16.mxu0 0
  %530 = vmatpush1.bf16.msra.mxu0 0
  %531 = vmatprep.subr.bf16.mxu0 0
  %532 = vmatpush1.bf16.msra.mxu0 0
  %533 = vmatprep.subr.bf16.mxu0 0
  %534 = vmatpush1.bf16.msra.mxu0 0
  %535 = vmatprep.subr.bf16.mxu0 0
  %536 = vmatpush1.bf16.msra.mxu0 0
  %537 = vmatprep.subr.bf16.mxu0 0
  %538 = vmatpush1.bf16.msra.mxu0 0
  %539 = vmatprep.subr.bf16.mxu0 0
  %540 = vmatpush1.bf16.msra.mxu0 0
  %541 = vmatprep.subr.bf16.mxu0 0
  %542 = vmatpush1.bf16.msra.mxu0 0
  %543 = vmatprep.subr.bf16.mxu0 0
  %544 = vmatpush1.bf16.msra.mxu0 0
  %545 = vmatprep.subr.bf16.mxu0 0
  %546 = vmatpush1.bf16.msra.mxu0 0
  %547 = vmatprep.subr.bf16.mxu0 0
  %548 = vmatpush1.bf16.msra.mxu0 0
  %549 = vmatprep.subr.bf16.mxu0 0
  %550 = vmatpush1.bf16.msra.mxu0 0
  %551 = vmatprep.mubr.bf16.mxu0 0
  %552 = vmatmul.mubr.bf16.gmra.mrb[0].mxu0 %v435
  %v553 = vpop.f32.mrb[0].mxu0
  %v554 = vadd.f32 0.0, %v553
  %v555 = vpop.f32.mrb[0].mxu0
  %v556 = vpop.f32.mrb[0].mxu0
  %v557 = vpop.f32.mrb[0].mxu0
  %558 = vdwg.mxu0
  %v559 = vadd.f32 %v28, %v554
  %560 = vmatprep.subr.bf16.mxu0 0
  %561 = vmatpush1.bf16.msra.mxu0 %v171
  %562 = vmatprep.subr.bf16.mxu0 0
  %563 = vmatpush1.bf16.msra.mxu0 0
  %564 = vmatprep.subr.bf16.mxu0 0
  %565 = vmatpush1.bf16.msra.mxu0 0
  %566 = vmatprep.subr.bf16.mxu0 0
  %567 = vmatpush1.bf16.msra.mxu0 0
  %568 = vmatprep.subr.bf16.mxu0 0
  %569 = vmatpush1.bf16.msra.mxu0 0
  %570 = vmatprep.subr.bf16.mxu0 0
  %571 = vmatpush1.bf16.msra.mxu0 0
  %572 = vmatprep.subr.bf16.mxu0 0
  %573 = vmatpush1.bf16.msra.mxu0 0
  %574 = vmatprep.subr.bf16.mxu0 0
  %575 = vmatpush1.bf16.msra.mxu0 0
  %576 = vmatprep.subr.bf16.mxu0 0
  %577 = vmatpush1.bf16.msra.mxu0 0
  %578 = vmatprep.subr.bf16.mxu0 0
  %579 = vmatpush1.bf16.msra.mxu0 0
  %580 = vmatprep.subr.bf16.mxu0 0
  %581 = vmatpush1.bf16.msra.mxu0 0
  %582 = vmatprep.subr.bf16.mxu0 0
  %583 = vmatpush1.bf16.msra.mxu0 0
  %584 = vmatprep.subr.bf16.mxu0 0
  %585 = vmatpush1.bf16.msra.mxu0 0
  %586 = vmatprep.subr.bf16.mxu0 0
  %587 = vmatpush1.bf16.msra.mxu0 0
  %588 = vmatprep.subr.bf16.mxu0 0
  %589 = vmatpush1.bf16.msra.mxu0 0
  %590 = vmatprep.subr.bf16.mxu0 0
  %591 = vmatpush1.bf16.msra.mxu0 0
  %592 = vmatprep.mubr.bf16.mxu0 0
  %593 = vmatmul.mubr.bf16.gmra.mrb[0].mxu0 %v435
  %v594 = vpop.f32.mrb[0].mxu0
  %v595 = vadd.f32 0.0, %v594
  %v596 = vpop.f32.mrb[0].mxu0
  %v597 = vpop.f32.mrb[0].mxu0
  %v598 = vpop.f32.mrb[0].mxu0
  %599 = vdwg.mxu0
  %v600 = vadd.f32 %v29, %v595
  %v601 = vxor.u32 %v477, 2147483648
  %v602 = vmul.f32 %v601, 1.442695
  %v603 = vpow.pop %v602
  %v604 = vadd.f32 %v603, 1.0
  %v605 = vrcp.pop %v604
  %v606 = vmul.f32 1.0, %v605
  %v607 = vxor.u32 %v518, 2147483648
  %v608 = vmul.f32 %v607, 1.442695
  %v609 = vpow.pop %v608
  %v610 = vadd.f32 %v609, 1.0
  %v611 = vrcp.pop %v610
  %v612 = vmul.f32 1.0, %v611
  %v613 = vtanh.pop %v559
  %v614 = vxor.u32 %v600, 2147483648
  %v615 = vmul.f32 %v614, 1.442695
  %v616 = vpow.pop %v615
  %v617 = vadd.f32 %v616, 1.0
  %v618 = vrcp.pop %v617
  %v619 = vmul.f32 1.0, %v618
  %v620 = vmul.f32 %v612, %v428
  %v621 = vmul.f32 %v606, %v613
  %v622 = vadd.f32 %v620, %v621
  %v623 = vtanh.pop %v622
  %v624 = vmul.f32 %v619, %v623
  %s625 = scalar_lea.vmem %s2, 16
  %626 = vst.msk [vmem:[%s625] sm:$0xff] %vm33, %v624
  %v627 = vpack.c.bf16 %v624, %v624
  %v629 = vsel %vm33, %v627, 0
  %631 = vmatprep.subr.bf16.mxu0 0
  %632 = vmatpush1.bf16.msra.mxu0 %v39
  %633 = vmatprep.subr.bf16.mxu0 0
  %634 = vmatpush1.bf16.msra.mxu0 0
  %635 = vmatprep.subr.bf16.mxu0 0
  %636 = vmatpush1.bf16.msra.mxu0 0
  %637 = vmatprep.subr.bf16.mxu0 0
  %638 = vmatpush1.bf16.msra.mxu0 0
  %639 = vmatprep.subr.bf16.mxu0 0
  %640 = vmatpush1.bf16.msra.mxu0 0
  %641 = vmatprep.subr.bf16.mxu0 0
  %642 = vmatpush1.bf16.msra.mxu0 0
  %643 = vmatprep.subr.bf16.mxu0 0
  %644 = vmatpush1.bf16.msra.mxu0 0
  %645 = vmatprep.subr.bf16.mxu0 0
  %646 = vmatpush1.bf16.msra.mxu0 0
  %647 = vmatprep.subr.bf16.mxu0 0
  %648 = vmatpush1.bf16.msra.mxu0 0
  %649 = vmatprep.subr.bf16.mxu0 0
  %650 = vmatpush1.bf16.msra.mxu0 0
  %651 = vmatprep.subr.bf16.mxu0 0
  %652 = vmatpush1.bf16.msra.mxu0 0
  %653 = vmatprep.subr.bf16.mxu0 0
  %654 = vmatpush1.bf16.msra.mxu0 0
  %655 = vmatprep.subr.bf16.mxu0 0
  %656 = vmatpush1.bf16.msra.mxu0 0
  %657 = vmatprep.subr.bf16.mxu0 0
  %658 = vmatpush1.bf16.msra.mxu0 0
  %659 = vmatprep.subr.bf16.mxu0 0
  %660 = vmatpush1.bf16.msra.mxu0 0
  %661 = vmatprep.subr.bf16.mxu0 0
  %662 = vmatpush1.bf16.msra.mxu0 0
  %663 = vmatprep.mubr.bf16.mxu0 0
  %664 = vmatmul.mubr.bf16.gmra.mrb[0].mxu0 %v629
  %v665 = vpop.f32.mrb[0].mxu0
  %v666 = vadd.f32 0.0, %v665
  %v667 = vpop.f32.mrb[0].mxu0
  %v668 = vpop.f32.mrb[0].mxu0
  %v669 = vpop.f32.mrb[0].mxu0
  %670 = vdwg.mxu0
  %v671 = vadd.f32 %v26, %v666
  %672 = vmatprep.subr.bf16.mxu0 0
  %673 = vmatpush1.bf16.msra.mxu0 %v83
  %674 = vmatprep.subr.bf16.mxu0 0
  %675 = vmatpush1.bf16.msra.mxu0 0
  %676 = vmatprep.subr.bf16.mxu0 0
  %677 = vmatpush1.bf16.msra.mxu0 0
  %678 = vmatprep.subr.bf16.mxu0 0
  %679 = vmatpush1.bf16.msra.mxu0 0
  %680 = vmatprep.subr.bf16.mxu0 0
  %681 = vmatpush1.bf16.msra.mxu0 0
  %682 = vmatprep.subr.bf16.mxu0 0
  %683 = vmatpush1.bf16.msra.mxu0 0
  %684 = vmatprep.subr.bf16.mxu0 0
  %685 = vmatpush1.bf16.msra.mxu0 0
  %686 = vmatprep.subr.bf16.mxu0 0
  %687 = vmatpush1.bf16.msra.mxu0 0
  %688 = vmatprep.subr.bf16.mxu0 0
  %689 = vmatpush1.bf16.msra.mxu0 0
  %690 = vmatprep.subr.bf16.mxu0 0
  %691 = vmatpush1.bf16.msra.mxu0 0
  %692 = vmatprep.subr.bf16.mxu0 0
  %693 = vmatpush1.bf16.msra.mxu0 0
  %694 = vmatprep.subr.bf16.mxu0 0
  %695 = vmatpush1.bf16.msra.mxu0 0
  %696 = vmatprep.subr.bf16.mxu0 0
  %697 = vmatpush1.bf16.msra.mxu0 0
  %698 = vmatprep.subr.bf16.mxu0 0
  %699 = vmatpush1.bf16.msra.mxu0 0
  %700 = vmatprep.subr.bf16.mxu0 0
  %701 = vmatpush1.bf16.msra.mxu0 0
  %702 = vmatprep.subr.bf16.mxu0 0
  %703 = vmatpush1.bf16.msra.mxu0 0
  %704 = vmatprep.mubr.bf16.mxu0 0
  %705 = vmatmul.mubr.bf16.gmra.mrb[0].mxu0 %v629
  %v706 = vpop.f32.mrb[0].mxu0
  %v707 = vadd.f32 0.0, %v706
  %v708 = vpop.f32.mrb[0].mxu0
  %v709 = vpop.f32.mrb[0].mxu0
  %v710 = vpop.f32.mrb[0].mxu0
  %711 = vdwg.mxu0
  %v712 = vadd.f32 %v27, %v707
  %713 = vmatprep.subr.bf16.mxu0 0
  %714 = vmatpush1.bf16.msra.mxu0 %v127
  %715 = vmatprep.subr.bf16.mxu0 0
  %716 = vmatpush1.bf16.msra.mxu0 0
  %717 = vmatprep.subr.bf16.mxu0 0
  %718 = vmatpush1.bf16.msra.mxu0 0
  %719 = vmatprep.subr.bf16.mxu0 0
  %720 = vmatpush1.bf16.msra.mxu0 0
  %721 = vmatprep.subr.bf16.mxu0 0
  %722 = vmatpush1.bf16.msra.mxu0 0
  %723 = vmatprep.subr.bf16.mxu0 0
  %724 = vmatpush1.bf16.msra.mxu0 0
  %725 = vmatprep.subr.bf16.mxu0 0
  %726 = vmatpush1.bf16.msra.mxu0 0
  %727 = vmatprep.subr.bf16.mxu0 0
  %728 = vmatpush1.bf16.msra.mxu0 0
  %729 = vmatprep.subr.bf16.mxu0 0
  %730 = vmatpush1.bf16.msra.mxu0 0
  %731 = vmatprep.subr.bf16.mxu0 0
  %732 = vmatpush1.bf16.msra.mxu0 0
  %733 = vmatprep.subr.bf16.mxu0 0
  %734 = vmatpush1.bf16.msra.mxu0 0
  %735 = vmatprep.subr.bf16.mxu0 0
  %736 = vmatpush1.bf16.msra.mxu0 0
  %737 = vmatprep.subr.bf16.mxu0 0
  %738 = vmatpush1.bf16.msra.mxu0 0
  %739 = vmatprep.subr.bf16.mxu0 0
  %740 = vmatpush1.bf16.msra.mxu0 0
  %741 = vmatprep.subr.bf16.mxu0 0
  %742 = vmatpush1.bf16.msra.mxu0 0
  %743 = vmatprep.subr.bf16.mxu0 0
  %744 = vmatpush1.bf16.msra.mxu0 0
  %745 = vmatprep.mubr.bf16.mxu0 0
  %746 = vmatmul.mubr.bf16.gmra.mrb[0].mxu0 %v629
  %v747 = vpop.f32.mrb[0].mxu0
  %v748 = vadd.f32 0.0, %v747
  %v749 = vpop.f32.mrb[0].mxu0
  %v750 = vpop.f32.mrb[0].mxu0
  %v751 = vpop.f32.mrb[0].mxu0
  %752 = vdwg.mxu0
  %v753 = vadd.f32 %v28, %v748
  %754 = vmatprep.subr.bf16.mxu0 0
  %755 = vmatpush1.bf16.msra.mxu0 %v171
  %756 = vmatprep.subr.bf16.mxu0 0
  %757 = vmatpush1.bf16.msra.mxu0 0
  %758 = vmatprep.subr.bf16.mxu0 0
  %759 = vmatpush1.bf16.msra.mxu0 0
  %760 = vmatprep.subr.bf16.mxu0 0
  %761 = vmatpush1.bf16.msra.mxu0 0
  %762 = vmatprep.subr.bf16.mxu0 0
  %763 = vmatpush1.bf16.msra.mxu0 0
  %764 = vmatprep.subr.bf16.mxu0 0
  %765 = vmatpush1.bf16.msra.mxu0 0
  %766 = vmatprep.subr.bf16.mxu0 0
  %767 = vmatpush1.bf16.msra.mxu0 0
  %768 = vmatprep.subr.bf16.mxu0 0
  %769 = vmatpush1.bf16.msra.mxu0 0
  %770 = vmatprep.subr.bf16.mxu0 0
  %771 = vmatpush1.bf16.msra.mxu0 0
  %772 = vmatprep.subr.bf16.mxu0 0
  %773 = vmatpush1.bf16.msra.mxu0 0
  %774 = vmatprep.subr.bf16.mxu0 0
  %775 = vmatpush1.bf16.msra.mxu0 0
  %776 = vmatprep.subr.bf16.mxu0 0
  %777 = vmatpush1.bf16.msra.mxu0 0
  %778 = vmatprep.subr.bf16.mxu0 0
  %779 = vmatpush1.bf16.msra.mxu0 0
  %780 = vmatprep.subr.bf16.mxu0 0
  %781 = vmatpush1.bf16.msra.mxu0 0
  %782 = vmatprep.subr.bf16.mxu0 0
  %783 = vmatpush1.bf16.msra.mxu0 0
  %784 = vmatprep.subr.bf16.mxu0 0
  %785 = vmatpush1.bf16.msra.mxu0 0
  %786 = vmatprep.mubr.bf16.mxu0 0
  %787 = vmatmul.mubr.bf16.gmra.mrb[0].mxu0 %v629
  %v788 = vpop.f32.mrb[0].mxu0
  %v789 = vadd.f32 0.0, %v788
  %v790 = vpop.f32.mrb[0].mxu0
  %v791 = vpop.f32.mrb[0].mxu0
  %v792 = vpop.f32.mrb[0].mxu0
  %793 = vdwg.mxu0
  %v794 = vadd.f32 %v29, %v789
  %v795 = vxor.u32 %v671, 2147483648
  %v796 = vmul.f32 %v795, 1.442695
  %v797 = vpow.pop %v796
  %v798 = vadd.f32 %v797, 1.0
  %v799 = vrcp.pop %v798
  %v800 = vmul.f32 1.0, %v799
  %v801 = vxor.u32 %v712, 2147483648
  %v802 = vmul.f32 %v801, 1.442695
  %v803 = vpow.pop %v802
  %v804 = vadd.f32 %v803, 1.0
  %v805 = vrcp.pop %v804
  %v806 = vmul.f32 1.0, %v805
  %v807 = vtanh.pop %v753
  %v808 = vxor.u32 %v794, 2147483648
  %v809 = vmul.f32 %v808, 1.442695
  %v810 = vpow.pop %v809
  %v811 = vadd.f32 %v810, 1.0
  %v812 = vrcp.pop %v811
  %v813 = vmul.f32 1.0, %v812
  %v814 = vmul.f32 %v806, %v622
  %v815 = vmul.f32 %v800, %v807
  %v816 = vadd.f32 %v814, %v815
  %v817 = vtanh.pop %v816
  %v818 = vmul.f32 %v813, %v817
  %s819 = scalar_lea.vmem %s2, 24
  %820 = vst.msk [vmem:[%s819] sm:$0xff] %vm33, %v818
  %v821 = vpack.c.bf16 %v818, %v818
  %v823 = vsel %vm33, %v821, 0
  %825 = vmatprep.subr.bf16.mxu0 0
  %826 = vmatpush1.bf16.msra.mxu0 %v39
  %827 = vmatprep.subr.bf16.mxu0 0
  %828 = vmatpush1.bf16.msra.mxu0 0
  %829 = vmatprep.subr.bf16.mxu0 0
  %830 = vmatpush1.bf16.msra.mxu0 0
  %831 = vmatprep.subr.bf16.mxu0 0
  %832 = vmatpush1.bf16.msra.mxu0 0
  %833 = vmatprep.subr.bf16.mxu0 0
  %834 = vmatpush1.bf16.msra.mxu0 0
  %835 = vmatprep.subr.bf16.mxu0 0
  %836 = vmatpush1.bf16.msra.mxu0 0
  %837 = vmatprep.subr.bf16.mxu0 0
  %838 = vmatpush1.bf16.msra.mxu0 0
  %839 = vmatprep.subr.bf16.mxu0 0
  %840 = vmatpush1.bf16.msra.mxu0 0
  %841 = vmatprep.subr.bf16.mxu0 0
  %842 = vmatpush1.bf16.msra.mxu0 0
  %843 = vmatprep.subr.bf16.mxu0 0
  %844 = vmatpush1.bf16.msra.mxu0 0
  %845 = vmatprep.subr.bf16.mxu0 0
  %846 = vmatpush1.bf16.msra.mxu0 0
  %847 = vmatprep.subr.bf16.mxu0 0
  %848 = vmatpush1.bf16.msra.mxu0 0
  %849 = vmatprep.subr.bf16.mxu0 0
  %850 = vmatpush1.bf16.msra.mxu0 0
  %851 = vmatprep.subr.bf16.mxu0 0
  %852 = vmatpush1.bf16.msra.mxu0 0
  %853 = vmatprep.subr.bf16.mxu0 0
  %854 = vmatpush1.bf16.msra.mxu0 0
  %855 = vmatprep.subr.bf16.mxu0 0
  %856 = vmatpush1.bf16.msra.mxu0 0
  %857 = vmatprep.mubr.bf16.mxu0 0
  %858 = vmatmul.mubr.bf16.gmra.mrb[0].mxu0 %v823
  %v859 = vpop.f32.mrb[0].mxu0
  %v860 = vadd.f32 0.0, %v859
  %v861 = vpop.f32.mrb[0].mxu0
  %v862 = vpop.f32.mrb[0].mxu0
  %v863 = vpop.f32.mrb[0].mxu0
  %864 = vdwg.mxu0
  %v865 = vadd.f32 %v26, %v860
  %866 = vmatprep.subr.bf16.mxu0 0
  %867 = vmatpush1.bf16.msra.mxu0 %v83
  %868 = vmatprep.subr.bf16.mxu0 0
  %869 = vmatpush1.bf16.msra.mxu0 0
  %870 = vmatprep.subr.bf16.mxu0 0
  %871 = vmatpush1.bf16.msra.mxu0 0
  %872 = vmatprep.subr.bf16.mxu0 0
  %873 = vmatpush1.bf16.msra.mxu0 0
  %874 = vmatprep.subr.bf16.mxu0 0
  %875 = vmatpush1.bf16.msra.mxu0 0
  %876 = vmatprep.subr.bf16.mxu0 0
  %877 = vmatpush1.bf16.msra.mxu0 0
  %878 = vmatprep.subr.bf16.mxu0 0
  %879 = vmatpush1.bf16.msra.mxu0 0
  %880 = vmatprep.subr.bf16.mxu0 0
  %881 = vmatpush1.bf16.msra.mxu0 0
  %882 = vmatprep.subr.bf16.mxu0 0
  %883 = vmatpush1.bf16.msra.mxu0 0
  %884 = vmatprep.subr.bf16.mxu0 0
  %885 = vmatpush1.bf16.msra.mxu0 0
  %886 = vmatprep.subr.bf16.mxu0 0
  %887 = vmatpush1.bf16.msra.mxu0 0
  %888 = vmatprep.subr.bf16.mxu0 0
  %889 = vmatpush1.bf16.msra.mxu0 0
  %890 = vmatprep.subr.bf16.mxu0 0
  %891 = vmatpush1.bf16.msra.mxu0 0
  %892 = vmatprep.subr.bf16.mxu0 0
  %893 = vmatpush1.bf16.msra.mxu0 0
  %894 = vmatprep.subr.bf16.mxu0 0
  %895 = vmatpush1.bf16.msra.mxu0 0
  %896 = vmatprep.subr.bf16.mxu0 0
  %897 = vmatpush1.bf16.msra.mxu0 0
  %898 = vmatprep.mubr.bf16.mxu0 0
  %899 = vmatmul.mubr.bf16.gmra.mrb[0].mxu0 %v823
  %v900 = vpop.f32.mrb[0].mxu0
  %v901 = vadd.f32 0.0, %v900
  %v902 = vpop.f32.mrb[0].mxu0
  %v903 = vpop.f32.mrb[0].mxu0
  %v904 = vpop.f32.mrb[0].mxu0
  %905 = vdwg.mxu0
  %v906 = vadd.f32 %v27, %v901
  %907 = vmatprep.subr.bf16.mxu0 0
  %908 = vmatpush1.bf16.msra.mxu0 %v127
  %909 = vmatprep.subr.bf16.mxu0 0
  %910 = vmatpush1.bf16.msra.mxu0 0
  %911 = vmatprep.subr.bf16.mxu0 0
  %912 = vmatpush1.bf16.msra.mxu0 0
  %913 = vmatprep.subr.bf16.mxu0 0
  %914 = vmatpush1.bf16.msra.mxu0 0
  %915 = vmatprep.subr.bf16.mxu0 0
  %916 = vmatpush1.bf16.msra.mxu0 0
  %917 = vmatprep.subr.bf16.mxu0 0
  %918 = vmatpush1.bf16.msra.mxu0 0
  %919 = vmatprep.subr.bf16.mxu0 0
  %920 = vmatpush1.bf16.msra.mxu0 0
  %921 = vmatprep.subr.bf16.mxu0 0
  %922 = vmatpush1.bf16.msra.mxu0 0
  %923 = vmatprep.subr.bf16.mxu0 0
  %924 = vmatpush1.bf16.msra.mxu0 0
  %925 = vmatprep.subr.bf16.mxu0 0
  %926 = vmatpush1.bf16.msra.mxu0 0
  %927 = vmatprep.subr.bf16.mxu0 0
  %928 = vmatpush1.bf16.msra.mxu0 0
  %929 = vmatprep.subr.bf16.mxu0 0
  %930 = vmatpush1.bf16.msra.mxu0 0
  %931 = vmatprep.subr.bf16.mxu0 0
  %932 = vmatpush1.bf16.msra.mxu0 0
  %933 = vmatprep.subr.bf16.mxu0 0
  %934 = vmatpush1.bf16.msra.mxu0 0
  %935 = vmatprep.subr.bf16.mxu0 0
  %936 = vmatpush1.bf16.msra.mxu0 0
  %937 = vmatprep.subr.bf16.mxu0 0
  %938 = vmatpush1.bf16.msra.mxu0 0
  %939 = vmatprep.mubr.bf16.mxu0 0
  %940 = vmatmul.mubr.bf16.gmra.mrb[0].mxu0 %v823
  %v941 = vpop.f32.mrb[0].mxu0
  %v942 = vadd.f32 0.0, %v941
  %v943 = vpop.f32.mrb[0].mxu0
  %v944 = vpop.f32.mrb[0].mxu0
  %v945 = vpop.f32.mrb[0].mxu0
  %946 = vdwg.mxu0
  %v947 = vadd.f32 %v28, %v942
  %948 = vmatprep.subr.bf16.mxu0 0
  %949 = vmatpush1.bf16.msra.mxu0 %v171
  %950 = vmatprep.subr.bf16.mxu0 0
  %951 = vmatpush1.bf16.msra.mxu0 0
  %952 = vmatprep.subr.bf16.mxu0 0
  %953 = vmatpush1.bf16.msra.mxu0 0
  %954 = vmatprep.subr.bf16.mxu0 0
  %955 = vmatpush1.bf16.msra.mxu0 0
  %956 = vmatprep.subr.bf16.mxu0 0
  %957 = vmatpush1.bf16.msra.mxu0 0
  %958 = vmatprep.subr.bf16.mxu0 0
  %959 = vmatpush1.bf16.msra.mxu0 0
  %960 = vmatprep.subr.bf16.mxu0 0
  %961 = vmatpush1.bf16.msra.mxu0 0
  %962 = vmatprep.subr.bf16.mxu0 0
  %963 = vmatpush1.bf16.msra.mxu0 0
  %964 = vmatprep.subr.bf16.mxu0 0
  %965 = vmatpush1.bf16.msra.mxu0 0
  %966 = vmatprep.subr.bf16.mxu0 0
  %967 = vmatpush1.bf16.msra.mxu0 0
  %968 = vmatprep.subr.bf16.mxu0 0
  %969 = vmatpush1.bf16.msra.mxu0 0
  %970 = vmatprep.subr.bf16.mxu0 0
  %971 = vmatpush1.bf16.msra.mxu0 0
  %972 = vmatprep.subr.bf16.mxu0 0
  %973 = vmatpush1.bf16.msra.mxu0 0
  %974 = vmatprep.subr.bf16.mxu0 0
  %975 = vmatpush1.bf16.msra.mxu0 0
  %976 = vmatprep.subr.bf16.mxu0 0
  %977 = vmatpush1.bf16.msra.mxu0 0
  %978 = vmatprep.subr.bf16.mxu0 0
  %979 = vmatpush1.bf16.msra.mxu0 0
  %980 = vmatprep.mubr.bf16.mxu0 0
  %981 = vmatmul.mubr.bf16.gmra.mrb[0].mxu0 %v823
  %v982 = vpop.f32.mrb[0].mxu0
  %v983 = vadd.f32 0.0, %v982
  %v984 = vpop.f32.mrb[0].mxu0
  %v985 = vpop.f32.mrb[0].mxu0
  %v986 = vpop.f32.mrb[0].mxu0
  %987 = vdwg.mxu0
  %v988 = vadd.f32 %v29, %v983
  %v989 = vxor.u32 %v865, 2147483648
  %v990 = vmul.f32 %v989, 1.442695
  %v991 = vpow.pop %v990
  %v992 = vadd.f32 %v991, 1.0
  %v993 = vrcp.pop %v992
  %v994 = vmul.f32 1.0, %v993
  %v995 = vxor.u32 %v906, 2147483648
  %v996 = vmul.f32 %v995, 1.442695
  %v997 = vpow.pop %v996
  %v998 = vadd.f32 %v997, 1.0
  %v999 = vrcp.pop %v998
  %v1000 = vmul.f32 1.0, %v999
  %v1001 = vtanh.pop %v947
  %v1002 = vxor.u32 %v988, 2147483648
  %v1003 = vmul.f32 %v1002, 1.442695
  %v1004 = vpow.pop %v1003
  %v1005 = vadd.f32 %v1004, 1.0
  %v1006 = vrcp.pop %v1005
  %v1007 = vmul.f32 1.0, %v1006
  %v1008 = vmul.f32 %v1000, %v816
  %v1009 = vmul.f32 %v994, %v1001
  %v1010 = vadd.f32 %v1008, %v1009
  %v1011 = vtanh.pop %v1010
  %v1012 = vmul.f32 %v1007, %v1011
  %s1013 = scalar_lea.vmem %s2, 32
  %1014 = vst.msk [vmem:[%s1013] sm:$0xff] %vm33, %v1012
  %v1015 = vpack.c.bf16 %v1012, %v1012
  %v1017 = vsel %vm33, %v1015, 0
  %1019 = vmatprep.subr.bf16.mxu0 0
  %1020 = vmatpush1.bf16.msra.mxu0 %v39
  %1021 = vmatprep.subr.bf16.mxu0 0
  %1022 = vmatpush1.bf16.msra.mxu0 0
  %1023 = vmatprep.subr.bf16.mxu0 0
  %1024 = vmatpush1.bf16.msra.mxu0 0
  %1025 = vmatprep.subr.bf16.mxu0 0
  %1026 = vmatpush1.bf16.msra.mxu0 0
  %1027 = vmatprep.subr.bf16.mxu0 0
  %1028 = vmatpush1.bf16.msra.mxu0 0
  %1029 = vmatprep.subr.bf16.mxu0 0
  %1030 = vmatpush1.bf16.msra.mxu0 0
  %1031 = vmatprep.subr.bf16.mxu0 0
  %1032 = vmatpush1.bf16.msra.mxu0 0
  %1033 = vmatprep.subr.bf16.mxu0 0
  %1034 = vmatpush1.bf16.msra.mxu0 0
  %1035 = vmatprep.subr.bf16.mxu0 0
  %1036 = vmatpush1.bf16.msra.mxu0 0
  %1037 = vmatprep.subr.bf16.mxu0 0
  %1038 = vmatpush1.bf16.msra.mxu0 0
  %1039 = vmatprep.subr.bf16.mxu0 0
  %1040 = vmatpush1.bf16.msra.mxu0 0
  %1041 = vmatprep.subr.bf16.mxu0 0
  %1042 = vmatpush1.bf16.msra.mxu0 0
  %1043 = vmatprep.subr.bf16.mxu0 0
  %1044 = vmatpush1.bf16.msra.mxu0 0
  %1045 = vmatprep.subr.bf16.mxu0 0
  %1046 = vmatpush1.bf16.msra.mxu0 0
  %1047 = vmatprep.subr.bf16.mxu0 0
  %1048 = vmatpush1.bf16.msra.mxu0 0
  %1049 = vmatprep.subr.bf16.mxu0 0
  %1050 = vmatpush1.bf16.msra.mxu0 0
  %1051 = vmatprep.mubr.bf16.mxu0 0
  %1052 = vmatmul.mubr.bf16.gmra.mrb[0].mxu0 %v1017
  %v1053 = vpop.f32.mrb[0].mxu0
  %v1054 = vadd.f32 0.0, %v1053
  %v1055 = vpop.f32.mrb[0].mxu0
  %v1056 = vpop.f32.mrb[0].mxu0
  %v1057 = vpop.f32.mrb[0].mxu0
  %1058 = vdwg.mxu0
  %v1059 = vadd.f32 %v26, %v1054
  %1060 = vmatprep.subr.bf16.mxu0 0
  %1061 = vmatpush1.bf16.msra.mxu0 %v83
  %1062 = vmatprep.subr.bf16.mxu0 0
  %1063 = vmatpush1.bf16.msra.mxu0 0
  %1064 = vmatprep.subr.bf16.mxu0 0
  %1065 = vmatpush1.bf16.msra.mxu0 0
  %1066 = vmatprep.subr.bf16.mxu0 0
  %1067 = vmatpush1.bf16.msra.mxu0 0
  %1068 = vmatprep.subr.bf16.mxu0 0
  %1069 = vmatpush1.bf16.msra.mxu0 0
  %1070 = vmatprep.subr.bf16.mxu0 0
  %1071 = vmatpush1.bf16.msra.mxu0 0
  %1072 = vmatprep.subr.bf16.mxu0 0
  %1073 = vmatpush1.bf16.msra.mxu0 0
  %1074 = vmatprep.subr.bf16.mxu0 0
  %1075 = vmatpush1.bf16.msra.mxu0 0
  %1076 = vmatprep.subr.bf16.mxu0 0
  %1077 = vmatpush1.bf16.msra.mxu0 0
  %1078 = vmatprep.subr.bf16.mxu0 0
  %1079 = vmatpush1.bf16.msra.mxu0 0
  %1080 = vmatprep.subr.bf16.mxu0 0
  %1081 = vmatpush1.bf16.msra.mxu0 0
  %1082 = vmatprep.subr.bf16.mxu0 0
  %1083 = vmatpush1.bf16.msra.mxu0 0
  %1084 = vmatprep.subr.bf16.mxu0 0
  %1085 = vmatpush1.bf16.msra.mxu0 0
  %1086 = vmatprep.subr.bf16.mxu0 0
  %1087 = vmatpush1.bf16.msra.mxu0 0
  %1088 = vmatprep.subr.bf16.mxu0 0
  %1089 = vmatpush1.bf16.msra.mxu0 0
  %1090 = vmatprep.subr.bf16.mxu0 0
  %1091 = vmatpush1.bf16.msra.mxu0 0
  %1092 = vmatprep.mubr.bf16.mxu0 0
  %1093 = vmatmul.mubr.bf16.gmra.mrb[0].mxu0 %v1017
  %v1094 = vpop.f32.mrb[0].mxu0
  %v1095 = vadd.f32 0.0, %v1094
  %v1096 = vpop.f32.mrb[0].mxu0
  %v1097 = vpop.f32.mrb[0].mxu0
  %v1098 = vpop.f32.mrb[0].mxu0
  %1099 = vdwg.mxu0
  %v1100 = vadd.f32 %v27, %v1095
  %1101 = vmatprep.subr.bf16.mxu0 0
  %1102 = vmatpush1.bf16.msra.mxu0 %v127
  %1103 = vmatprep.subr.bf16.mxu0 0
  %1104 = vmatpush1.bf16.msra.mxu0 0
  %1105 = vmatprep.subr.bf16.mxu0 0
  %1106 = vmatpush1.bf16.msra.mxu0 0
  %1107 = vmatprep.subr.bf16.mxu0 0
  %1108 = vmatpush1.bf16.msra.mxu0 0
  %1109 = vmatprep.subr.bf16.mxu0 0
  %1110 = vmatpush1.bf16.msra.mxu0 0
  %1111 = vmatprep.subr.bf16.mxu0 0
  %1112 = vmatpush1.bf16.msra.mxu0 0
  %1113 = vmatprep.subr.bf16.mxu0 0
  %1114 = vmatpush1.bf16.msra.mxu0 0
  %1115 = vmatprep.subr.bf16.mxu0 0
  %1116 = vmatpush1.bf16.msra.mxu0 0
  %1117 = vmatprep.subr.bf16.mxu0 0
  %1118 = vmatpush1.bf16.msra.mxu0 0
  %1119 = vmatprep.subr.bf16.mxu0 0
  %1120 = vmatpush1.bf16.msra.mxu0 0
  %1121 = vmatprep.subr.bf16.mxu0 0
  %1122 = vmatpush1.bf16.msra.mxu0 0
  %1123 = vmatprep.subr.bf16.mxu0 0
  %1124 = vmatpush1.bf16.msra.mxu0 0
  %1125 = vmatprep.subr.bf16.mxu0 0
  %1126 = vmatpush1.bf16.msra.mxu0 0
  %1127 = vmatprep.subr.bf16.mxu0 0
  %1128 = vmatpush1.bf16.msra.mxu0 0
  %1129 = vmatprep.subr.bf16.mxu0 0
  %1130 = vmatpush1.bf16.msra.mxu0 0
  %1131 = vmatprep.subr.bf16.mxu0 0
  %1132 = vmatpush1.bf16.msra.mxu0 0
  %1133 = vmatprep.mubr.bf16.mxu0 0
  %1134 = vmatmul.mubr.bf16.gmra.mrb[0].mxu0 %v1017
  %v1135 = vpop.f32.mrb[0].mxu0
  %v1136 = vadd.f32 0.0, %v1135
  %v1137 = vpop.f32.mrb[0].mxu0
  %v1138 = vpop.f32.mrb[0].mxu0
  %v1139 = vpop.f32.mrb[0].mxu0
  %1140 = vdwg.mxu0
  %v1141 = vadd.f32 %v28, %v1136
  %1142 = vmatprep.subr.bf16.mxu0 0
  %1143 = vmatpush1.bf16.msra.mxu0 %v171
  %1144 = vmatprep.subr.bf16.mxu0 0
  %1145 = vmatpush1.bf16.msra.mxu0 0
  %1146 = vmatprep.subr.bf16.mxu0 0
  %1147 = vmatpush1.bf16.msra.mxu0 0
  %1148 = vmatprep.subr.bf16.mxu0 0
  %1149 = vmatpush1.bf16.msra.mxu0 0
  %1150 = vmatprep.subr.bf16.mxu0 0
  %1151 = vmatpush1.bf16.msra.mxu0 0
  %1152 = vmatprep.subr.bf16.mxu0 0
  %1153 = vmatpush1.bf16.msra.mxu0 0
  %1154 = vmatprep.subr.bf16.mxu0 0
  %1155 = vmatpush1.bf16.msra.mxu0 0
  %1156 = vmatprep.subr.bf16.mxu0 0
  %1157 = vmatpush1.bf16.msra.mxu0 0
  %1158 = vmatprep.subr.bf16.mxu0 0
  %1159 = vmatpush1.bf16.msra.mxu0 0
  %1160 = vmatprep.subr.bf16.mxu0 0
  %1161 = vmatpush1.bf16.msra.mxu0 0
  %1162 = vmatprep.subr.bf16.mxu0 0
  %1163 = vmatpush1.bf16.msra.mxu0 0
  %1164 = vmatprep.subr.bf16.mxu0 0
  %1165 = vmatpush1.bf16.msra.mxu0 0
  %1166 = vmatprep.subr.bf16.mxu0 0
  %1167 = vmatpush1.bf16.msra.mxu0 0
  %1168 = vmatprep.subr.bf16.mxu0 0
  %1169 = vmatpush1.bf16.msra.mxu0 0
  %1170 = vmatprep.subr.bf16.mxu0 0
  %1171 = vmatpush1.bf16.msra.mxu0 0
  %1172 = vmatprep.subr.bf16.mxu0 0
  %1173 = vmatpush1.bf16.msra.mxu0 0
  %1174 = vmatprep.mubr.bf16.mxu0 0
  %1175 = vmatmul.mubr.bf16.gmra.mrb[0].mxu0 %v1017
  %v1176 = vpop.f32.mrb[0].mxu0
  %v1177 = vadd.f32 0.0, %v1176
  %v1178 = vpop.f32.mrb[0].mxu0
  %v1179 = vpop.f32.mrb[0].mxu0
  %v1180 = vpop.f32.mrb[0].mxu0
  %1181 = vdwg.mxu0
  %v1182 = vadd.f32 %v29, %v1177
  %v1183 = vxor.u32 %v1059, 2147483648
  %v1184 = vmul.f32 %v1183, 1.442695
  %v1185 = vpow.pop %v1184
  %v1186 = vadd.f32 %v1185, 1.0
  %v1187 = vrcp.pop %v1186
  %v1188 = vmul.f32 1.0, %v1187
  %v1189 = vxor.u32 %v1100, 2147483648
  %v1190 = vmul.f32 %v1189, 1.442695
  %v1191 = vpow.pop %v1190
  %v1192 = vadd.f32 %v1191, 1.0
  %v1193 = vrcp.pop %v1192
  %v1194 = vmul.f32 1.0, %v1193
  %v1195 = vtanh.pop %v1141
  %v1196 = vxor.u32 %v1182, 2147483648
  %v1197 = vmul.f32 %v1196, 1.442695
  %v1198 = vpow.pop %v1197
  %v1199 = vadd.f32 %v1198, 1.0
  %v1200 = vrcp.pop %v1199
  %v1201 = vmul.f32 1.0, %v1200
  %v1202 = vmul.f32 %v1194, %v1010
  %v1203 = vmul.f32 %v1188, %v1195
  %v1204 = vadd.f32 %v1202, %v1203
  %v1205 = vtanh.pop %v1204
  %v1206 = vmul.f32 %v1201, %v1205
  %s1207 = scalar_lea.vmem %s2, 40
  %1208 = vst.msk [vmem:[%s1207] sm:$0xff] %vm33, %v1206
  %v1209 = vpack.c.bf16 %v1206, %v1206
  %v1211 = vsel %vm33, %v1209, 0
  %1213 = vmatprep.subr.bf16.mxu0 0
  %1214 = vmatpush1.bf16.msra.mxu0 %v39
  %1215 = vmatprep.subr.bf16.mxu0 0
  %1216 = vmatpush1.bf16.msra.mxu0 0
  %1217 = vmatprep.subr.bf16.mxu0 0
  %1218 = vmatpush1.bf16.msra.mxu0 0
  %1219 = vmatprep.subr.bf16.mxu0 0
  %1220 = vmatpush1.bf16.msra.mxu0 0
  %1221 = vmatprep.subr.bf16.mxu0 0
  %1222 = vmatpush1.bf16.msra.mxu0 0
  %1223 = vmatprep.subr.bf16.mxu0 0
  %1224 = vmatpush1.bf16.msra.mxu0 0
  %1225 = vmatprep.subr.bf16.mxu0 0
  %1226 = vmatpush1.bf16.msra.mxu0 0
  %1227 = vmatprep.subr.bf16.mxu0 0
  %1228 = vmatpush1.bf16.msra.mxu0 0
  %1229 = vmatprep.subr.bf16.mxu0 0
  %1230 = vmatpush1.bf16.msra.mxu0 0
  %1231 = vmatprep.subr.bf16.mxu0 0
  %1232 = vmatpush1.bf16.msra.mxu0 0
  %1233 = vmatprep.subr.bf16.mxu0 0
  %1234 = vmatpush1.bf16.msra.mxu0 0
  %1235 = vmatprep.subr.bf16.mxu0 0
  %1236 = vmatpush1.bf16.msra.mxu0 0
  %1237 = vmatprep.subr.bf16.mxu0 0
  %1238 = vmatpush1.bf16.msra.mxu0 0
  %1239 = vmatprep.subr.bf16.mxu0 0
  %1240 = vmatpush1.bf16.msra.mxu0 0
  %1241 = vmatprep.subr.bf16.mxu0 0
  %1242 = vmatpush1.bf16.msra.mxu0 0
  %1243 = vmatprep.subr.bf16.mxu0 0
  %1244 = vmatpush1.bf16.msra.mxu0 0
  %1245 = vmatprep.mubr.bf16.mxu0 0
  %1246 = vmatmul.mubr.bf16.gmra.mrb[0].mxu0 %v1211
  %v1247 = vpop.f32.mrb[0].mxu0
  %v1248 = vadd.f32 0.0, %v1247
  %v1249 = vpop.f32.mrb[0].mxu0
  %v1250 = vpop.f32.mrb[0].mxu0
  %v1251 = vpop.f32.mrb[0].mxu0
  %1252 = vdwg.mxu0
  %v1253 = vadd.f32 %v26, %v1248
  %1254 = vmatprep.subr.bf16.mxu0 0
  %1255 = vmatpush1.bf16.msra.mxu0 %v83
  %1256 = vmatprep.subr.bf16.mxu0 0
  %1257 = vmatpush1.bf16.msra.mxu0 0
  %1258 = vmatprep.subr.bf16.mxu0 0
  %1259 = vmatpush1.bf16.msra.mxu0 0
  %1260 = vmatprep.subr.bf16.mxu0 0
  %1261 = vmatpush1.bf16.msra.mxu0 0
  %1262 = vmatprep.subr.bf16.mxu0 0
  %1263 = vmatpush1.bf16.msra.mxu0 0
  %1264 = vmatprep.subr.bf16.mxu0 0
  %1265 = vmatpush1.bf16.msra.mxu0 0
  %1266 = vmatprep.subr.bf16.mxu0 0
  %1267 = vmatpush1.bf16.msra.mxu0 0
  %1268 = vmatprep.subr.bf16.mxu0 0
  %1269 = vmatpush1.bf16.msra.mxu0 0
  %1270 = vmatprep.subr.bf16.mxu0 0
  %1271 = vmatpush1.bf16.msra.mxu0 0
  %1272 = vmatprep.subr.bf16.mxu0 0
  %1273 = vmatpush1.bf16.msra.mxu0 0
  %1274 = vmatprep.subr.bf16.mxu0 0
  %1275 = vmatpush1.bf16.msra.mxu0 0
  %1276 = vmatprep.subr.bf16.mxu0 0
  %1277 = vmatpush1.bf16.msra.mxu0 0
  %1278 = vmatprep.subr.bf16.mxu0 0
  %1279 = vmatpush1.bf16.msra.mxu0 0
  %1280 = vmatprep.subr.bf16.mxu0 0
  %1281 = vmatpush1.bf16.msra.mxu0 0
  %1282 = vmatprep.subr.bf16.mxu0 0
  %1283 = vmatpush1.bf16.msra.mxu0 0
  %1284 = vmatprep.subr.bf16.mxu0 0
  %1285 = vmatpush1.bf16.msra.mxu0 0
  %1286 = vmatprep.mubr.bf16.mxu0 0
  %1287 = vmatmul.mubr.bf16.gmra.mrb[0].mxu0 %v1211
  %v1288 = vpop.f32.mrb[0].mxu0
  %v1289 = vadd.f32 0.0, %v1288
  %v1290 = vpop.f32.mrb[0].mxu0
  %v1291 = vpop.f32.mrb[0].mxu0
  %v1292 = vpop.f32.mrb[0].mxu0
  %1293 = vdwg.mxu0
  %v1294 = vadd.f32 %v27, %v1289
  %1295 = vmatprep.subr.bf16.mxu0 0
  %1296 = vmatpush1.bf16.msra.mxu0 %v127
  %1297 = vmatprep.subr.bf16.mxu0 0
  %1298 = vmatpush1.bf16.msra.mxu0 0
  %1299 = vmatprep.subr.bf16.mxu0 0
  %1300 = vmatpush1.bf16.msra.mxu0 0
  %1301 = vmatprep.subr.bf16.mxu0 0
  %1302 = vmatpush1.bf16.msra.mxu0 0
  %1303 = vmatprep.subr.bf16.mxu0 0
  %1304 = vmatpush1.bf16.msra.mxu0 0
  %1305 = vmatprep.subr.bf16.mxu0 0
  %1306 = vmatpush1.bf16.msra.mxu0 0
  %1307 = vmatprep.subr.bf16.mxu0 0
  %1308 = vmatpush1.bf16.msra.mxu0 0
  %1309 = vmatprep.subr.bf16.mxu0 0
  %1310 = vmatpush1.bf16.msra.mxu0 0
  %1311 = vmatprep.subr.bf16.mxu0 0
  %1312 = vmatpush1.bf16.msra.mxu0 0
  %1313 = vmatprep.subr.bf16.mxu0 0
  %1314 = vmatpush1.bf16.msra.mxu0 0
  %1315 = vmatprep.subr.bf16.mxu0 0
  %1316 = vmatpush1.bf16.msra.mxu0 0
  %1317 = vmatprep.subr.bf16.mxu0 0
  %1318 = vmatpush1.bf16.msra.mxu0 0
  %1319 = vmatprep.subr.bf16.mxu0 0
  %1320 = vmatpush1.bf16.msra.mxu0 0
  %1321 = vmatprep.subr.bf16.mxu0 0
  %1322 = vmatpush1.bf16.msra.mxu0 0
  %1323 = vmatprep.subr.bf16.mxu0 0
  %1324 = vmatpush1.bf16.msra.mxu0 0
  %1325 = vmatprep.subr.bf16.mxu0 0
  %1326 = vmatpush1.bf16.msra.mxu0 0
  %1327 = vmatprep.mubr.bf16.mxu0 0
  %1328 = vmatmul.mubr.bf16.gmra.mrb[0].mxu0 %v1211
  %v1329 = vpop.f32.mrb[0].mxu0
  %v1330 = vadd.f32 0.0, %v1329
  %v1331 = vpop.f32.mrb[0].mxu0
  %v1332 = vpop.f32.mrb[0].mxu0
  %v1333 = vpop.f32.mrb[0].mxu0
  %1334 = vdwg.mxu0
  %v1335 = vadd.f32 %v28, %v1330
  %1336 = vmatprep.subr.bf16.mxu0 0
  %1337 = vmatpush1.bf16.msra.mxu0 %v171
  %1338 = vmatprep.subr.bf16.mxu0 0
  %1339 = vmatpush1.bf16.msra.mxu0 0
  %1340 = vmatprep.subr.bf16.mxu0 0
  %1341 = vmatpush1.bf16.msra.mxu0 0
  %1342 = vmatprep.subr.bf16.mxu0 0
  %1343 = vmatpush1.bf16.msra.mxu0 0
  %1344 = vmatprep.subr.bf16.mxu0 0
  %1345 = vmatpush1.bf16.msra.mxu0 0
  %1346 = vmatprep.subr.bf16.mxu0 0
  %1347 = vmatpush1.bf16.msra.mxu0 0
  %1348 = vmatprep.subr.bf16.mxu0 0
  %1349 = vmatpush1.bf16.msra.mxu0 0
  %1350 = vmatprep.subr.bf16.mxu0 0
  %1351 = vmatpush1.bf16.msra.mxu0 0
  %1352 = vmatprep.subr.bf16.mxu0 0
  %1353 = vmatpush1.bf16.msra.mxu0 0
  %1354 = vmatprep.subr.bf16.mxu0 0
  %1355 = vmatpush1.bf16.msra.mxu0 0
  %1356 = vmatprep.subr.bf16.mxu0 0
  %1357 = vmatpush1.bf16.msra.mxu0 0
  %1358 = vmatprep.subr.bf16.mxu0 0
  %1359 = vmatpush1.bf16.msra.mxu0 0
  %1360 = vmatprep.subr.bf16.mxu0 0
  %1361 = vmatpush1.bf16.msra.mxu0 0
  %1362 = vmatprep.subr.bf16.mxu0 0
  %1363 = vmatpush1.bf16.msra.mxu0 0
  %1364 = vmatprep.subr.bf16.mxu0 0
  %1365 = vmatpush1.bf16.msra.mxu0 0
  %1366 = vmatprep.subr.bf16.mxu0 0
  %1367 = vmatpush1.bf16.msra.mxu0 0
  %1368 = vmatprep.mubr.bf16.mxu0 0
  %1369 = vmatmul.mubr.bf16.gmra.mrb[0].mxu0 %v1211
  %v1370 = vpop.f32.mrb[0].mxu0
  %v1371 = vadd.f32 0.0, %v1370
  %v1372 = vpop.f32.mrb[0].mxu0
  %v1373 = vpop.f32.mrb[0].mxu0
  %v1374 = vpop.f32.mrb[0].mxu0
  %1375 = vdwg.mxu0
  %v1376 = vadd.f32 %v29, %v1371
  %v1377 = vxor.u32 %v1253, 2147483648
  %v1378 = vmul.f32 %v1377, 1.442695
  %v1379 = vpow.pop %v1378
  %v1380 = vadd.f32 %v1379, 1.0
  %v1381 = vrcp.pop %v1380
  %v1382 = vmul.f32 1.0, %v1381
  %v1383 = vxor.u32 %v1294, 2147483648
  %v1384 = vmul.f32 %v1383, 1.442695
  %v1385 = vpow.pop %v1384
  %v1386 = vadd.f32 %v1385, 1.0
  %v1387 = vrcp.pop %v1386
  %v1388 = vmul.f32 1.0, %v1387
  %v1389 = vtanh.pop %v1335
  %v1390 = vxor.u32 %v1376, 2147483648
  %v1391 = vmul.f32 %v1390, 1.442695
  %v1392 = vpow.pop %v1391
  %v1393 = vadd.f32 %v1392, 1.0
  %v1394 = vrcp.pop %v1393
  %v1395 = vmul.f32 1.0, %v1394
  %v1396 = vmul.f32 %v1388, %v1204
  %v1397 = vmul.f32 %v1382, %v1389
  %v1398 = vadd.f32 %v1396, %v1397
  %v1399 = vtanh.pop %v1398
  %v1400 = vmul.f32 %v1395, %v1399
  %s1401 = scalar_lea.vmem %s2, 48
  %1402 = vst.msk [vmem:[%s1401] sm:$0xff] %vm33, %v1400
  %v1403 = vpack.c.bf16 %v1400, %v1400
  %v1405 = vsel %vm33, %v1403, 0
  %1407 = vmatprep.subr.bf16.mxu0 0
  %1408 = vmatpush1.bf16.msra.mxu0 %v39
  %1409 = vmatprep.subr.bf16.mxu0 0
  %1410 = vmatpush1.bf16.msra.mxu0 0
  %1411 = vmatprep.subr.bf16.mxu0 0
  %1412 = vmatpush1.bf16.msra.mxu0 0
  %1413 = vmatprep.subr.bf16.mxu0 0
  %1414 = vmatpush1.bf16.msra.mxu0 0
  %1415 = vmatprep.subr.bf16.mxu0 0
  %1416 = vmatpush1.bf16.msra.mxu0 0
  %1417 = vmatprep.subr.bf16.mxu0 0
  %1418 = vmatpush1.bf16.msra.mxu0 0
  %1419 = vmatprep.subr.bf16.mxu0 0
  %1420 = vmatpush1.bf16.msra.mxu0 0
  %1421 = vmatprep.subr.bf16.mxu0 0
  %1422 = vmatpush1.bf16.msra.mxu0 0
  %1423 = vmatprep.subr.bf16.mxu0 0
  %1424 = vmatpush1.bf16.msra.mxu0 0
  %1425 = vmatprep.subr.bf16.mxu0 0
  %1426 = vmatpush1.bf16.msra.mxu0 0
  %1427 = vmatprep.subr.bf16.mxu0 0
  %1428 = vmatpush1.bf16.msra.mxu0 0
  %1429 = vmatprep.subr.bf16.mxu0 0
  %1430 = vmatpush1.bf16.msra.mxu0 0
  %1431 = vmatprep.subr.bf16.mxu0 0
  %1432 = vmatpush1.bf16.msra.mxu0 0
  %1433 = vmatprep.subr.bf16.mxu0 0
  %1434 = vmatpush1.bf16.msra.mxu0 0
  %1435 = vmatprep.subr.bf16.mxu0 0
  %1436 = vmatpush1.bf16.msra.mxu0 0
  %1437 = vmatprep.subr.bf16.mxu0 0
  %1438 = vmatpush1.bf16.msra.mxu0 0
  %1439 = vmatprep.mubr.bf16.mxu0 0
  %1440 = vmatmul.mubr.bf16.gmra.mrb[0].mxu0 %v1405
  %v1441 = vpop.f32.mrb[0].mxu0
  %v1442 = vadd.f32 0.0, %v1441
  %v1443 = vpop.f32.mrb[0].mxu0
  %v1444 = vpop.f32.mrb[0].mxu0
  %v1445 = vpop.f32.mrb[0].mxu0
  %1446 = vdwg.mxu0
  %v1447 = vadd.f32 %v26, %v1442
  %1448 = vmatprep.subr.bf16.mxu0 0
  %1449 = vmatpush1.bf16.msra.mxu0 %v83
  %1450 = vmatprep.subr.bf16.mxu0 0
  %1451 = vmatpush1.bf16.msra.mxu0 0
  %1452 = vmatprep.subr.bf16.mxu0 0
  %1453 = vmatpush1.bf16.msra.mxu0 0
  %1454 = vmatprep.subr.bf16.mxu0 0
  %1455 = vmatpush1.bf16.msra.mxu0 0
  %1456 = vmatprep.subr.bf16.mxu0 0
  %1457 = vmatpush1.bf16.msra.mxu0 0
  %1458 = vmatprep.subr.bf16.mxu0 0
  %1459 = vmatpush1.bf16.msra.mxu0 0
  %1460 = vmatprep.subr.bf16.mxu0 0
  %1461 = vmatpush1.bf16.msra.mxu0 0
  %1462 = vmatprep.subr.bf16.mxu0 0
  %1463 = vmatpush1.bf16.msra.mxu0 0
  %1464 = vmatprep.subr.bf16.mxu0 0
  %1465 = vmatpush1.bf16.msra.mxu0 0
  %1466 = vmatprep.subr.bf16.mxu0 0
  %1467 = vmatpush1.bf16.msra.mxu0 0
  %1468 = vmatprep.subr.bf16.mxu0 0
  %1469 = vmatpush1.bf16.msra.mxu0 0
  %1470 = vmatprep.subr.bf16.mxu0 0
  %1471 = vmatpush1.bf16.msra.mxu0 0
  %1472 = vmatprep.subr.bf16.mxu0 0
  %1473 = vmatpush1.bf16.msra.mxu0 0
  %1474 = vmatprep.subr.bf16.mxu0 0
  %1475 = vmatpush1.bf16.msra.mxu0 0
  %1476 = vmatprep.subr.bf16.mxu0 0
  %1477 = vmatpush1.bf16.msra.mxu0 0
  %1478 = vmatprep.subr.bf16.mxu0 0
  %1479 = vmatpush1.bf16.msra.mxu0 0
  %1480 = vmatprep.mubr.bf16.mxu0 0
  %1481 = vmatmul.mubr.bf16.gmra.mrb[0].mxu0 %v1405
  %v1482 = vpop.f32.mrb[0].mxu0
  %v1483 = vadd.f32 0.0, %v1482
  %v1484 = vpop.f32.mrb[0].mxu0
  %v1485 = vpop.f32.mrb[0].mxu0
  %v1486 = vpop.f32.mrb[0].mxu0
  %1487 = vdwg.mxu0
  %v1488 = vadd.f32 %v27, %v1483
  %1489 = vmatprep.subr.bf16.mxu0 0
  %1490 = vmatpush1.bf16.msra.mxu0 %v127
  %1491 = vmatprep.subr.bf16.mxu0 0
  %1492 = vmatpush1.bf16.msra.mxu0 0
  %1493 = vmatprep.subr.bf16.mxu0 0
  %1494 = vmatpush1.bf16.msra.mxu0 0
  %1495 = vmatprep.subr.bf16.mxu0 0
  %1496 = vmatpush1.bf16.msra.mxu0 0
  %1497 = vmatprep.subr.bf16.mxu0 0
  %1498 = vmatpush1.bf16.msra.mxu0 0
  %1499 = vmatprep.subr.bf16.mxu0 0
  %1500 = vmatpush1.bf16.msra.mxu0 0
  %1501 = vmatprep.subr.bf16.mxu0 0
  %1502 = vmatpush1.bf16.msra.mxu0 0
  %1503 = vmatprep.subr.bf16.mxu0 0
  %1504 = vmatpush1.bf16.msra.mxu0 0
  %1505 = vmatprep.subr.bf16.mxu0 0
  %1506 = vmatpush1.bf16.msra.mxu0 0
  %1507 = vmatprep.subr.bf16.mxu0 0
  %1508 = vmatpush1.bf16.msra.mxu0 0
  %1509 = vmatprep.subr.bf16.mxu0 0
  %1510 = vmatpush1.bf16.msra.mxu0 0
  %1511 = vmatprep.subr.bf16.mxu0 0
  %1512 = vmatpush1.bf16.msra.mxu0 0
  %1513 = vmatprep.subr.bf16.mxu0 0
  %1514 = vmatpush1.bf16.msra.mxu0 0
  %1515 = vmatprep.subr.bf16.mxu0 0
  %1516 = vmatpush1.bf16.msra.mxu0 0
  %1517 = vmatprep.subr.bf16.mxu0 0
  %1518 = vmatpush1.bf16.msra.mxu0 0
  %1519 = vmatprep.subr.bf16.mxu0 0
  %1520 = vmatpush1.bf16.msra.mxu0 0
  %1521 = vmatprep.mubr.bf16.mxu0 0
  %1522 = vmatmul.mubr.bf16.gmra.mrb[0].mxu0 %v1405
  %v1523 = vpop.f32.mrb[0].mxu0
  %v1524 = vadd.f32 0.0, %v1523
  %v1525 = vpop.f32.mrb[0].mxu0
  %v1526 = vpop.f32.mrb[0].mxu0
  %v1527 = vpop.f32.mrb[0].mxu0
  %1528 = vdwg.mxu0
  %v1529 = vadd.f32 %v28, %v1524
  %1530 = vmatprep.subr.bf16.mxu0 0
  %1531 = vmatpush1.bf16.msra.mxu0 %v171
  %1532 = vmatprep.subr.bf16.mxu0 0
  %1533 = vmatpush1.bf16.msra.mxu0 0
  %1534 = vmatprep.subr.bf16.mxu0 0
  %1535 = vmatpush1.bf16.msra.mxu0 0
  %1536 = vmatprep.subr.bf16.mxu0 0
  %1537 = vmatpush1.bf16.msra.mxu0 0
  %1538 = vmatprep.subr.bf16.mxu0 0
  %1539 = vmatpush1.bf16.msra.mxu0 0
  %1540 = vmatprep.subr.bf16.mxu0 0
  %1541 = vmatpush1.bf16.msra.mxu0 0
  %1542 = vmatprep.subr.bf16.mxu0 0
  %1543 = vmatpush1.bf16.msra.mxu0 0
  %1544 = vmatprep.subr.bf16.mxu0 0
  %1545 = vmatpush1.bf16.msra.mxu0 0
  %1546 = vmatprep.subr.bf16.mxu0 0
  %1547 = vmatpush1.bf16.msra.mxu0 0
  %1548 = vmatprep.subr.bf16.mxu0 0
  %1549 = vmatpush1.bf16.msra.mxu0 0
  %1550 = vmatprep.subr.bf16.mxu0 0
  %1551 = vmatpush1.bf16.msra.mxu0 0
  %1552 = vmatprep.subr.bf16.mxu0 0
  %1553 = vmatpush1.bf16.msra.mxu0 0
  %1554 = vmatprep.subr.bf16.mxu0 0
  %1555 = vmatpush1.bf16.msra.mxu0 0
  %1556 = vmatprep.subr.bf16.mxu0 0
  %1557 = vmatpush1.bf16.msra.mxu0 0
  %1558 = vmatprep.subr.bf16.mxu0 0
  %1559 = vmatpush1.bf16.msra.mxu0 0
  %1560 = vmatprep.subr.bf16.mxu0 0
  %1561 = vmatpush1.bf16.msra.mxu0 0
  %1562 = vmatprep.mubr.bf16.mxu0 0
  %1563 = vmatmul.mubr.bf16.gmra.mrb[0].mxu0 %v1405
  %v1564 = vpop.f32.mrb[0].mxu0
  %v1565 = vadd.f32 0.0, %v1564
  %v1566 = vpop.f32.mrb[0].mxu0
  %v1567 = vpop.f32.mrb[0].mxu0
  %v1568 = vpop.f32.mrb[0].mxu0
  %1569 = vdwg.mxu0
  %v1570 = vadd.f32 %v29, %v1565
  %v1571 = vxor.u32 %v1447, 2147483648
  %v1572 = vmul.f32 %v1571, 1.442695
  %v1573 = vpow.pop %v1572
  %v1574 = vadd.f32 %v1573, 1.0
  %v1575 = vrcp.pop %v1574
  %v1576 = vmul.f32 1.0, %v1575
  %v1577 = vxor.u32 %v1488, 2147483648
  %v1578 = vmul.f32 %v1577, 1.442695
  %v1579 = vpow.pop %v1578
  %v1580 = vadd.f32 %v1579, 1.0
  %v1581 = vrcp.pop %v1580
  %v1582 = vmul.f32 1.0, %v1581
  %v1583 = vtanh.pop %v1529
  %v1584 = vxor.u32 %v1570, 2147483648
  %v1585 = vmul.f32 %v1584, 1.442695
  %v1586 = vpow.pop %v1585
  %v1587 = vadd.f32 %v1586, 1.0
  %v1588 = vrcp.pop %v1587
  %v1589 = vmul.f32 1.0, %v1588
  %v1590 = vmul.f32 %v1582, %v1398
  %v1591 = vmul.f32 %v1576, %v1583
  %v1592 = vadd.f32 %v1590, %v1591
  %v1593 = vtanh.pop %v1592
  %v1594 = vmul.f32 %v1589, %v1593
  %s1595 = scalar_lea.vmem %s2, 56
  %1596 = vst.msk [vmem:[%s1595] sm:$0xff] %vm33, %v1594
  %1597 = vst.msk [vmem:[#allocation2] sm:$0xff] %vm33, %v1594
  %1598 = vst.msk [vmem:[#allocation3] sm:$0xff] %vm33, %v1592
  // Predicated region
  $region14: #{timeseries_autoencoder_forward.3} parent=0 // pred_check
    _
  $region15: #{timeseries_autoencoder_forward.3} parent=0 // pred_check_branch
    %1600 = sbr.rel (0) target = $region17
  $region16: #{timeseries_autoencoder_forward.3} parent=0 // pred_region
    _
  $region17: #{timeseries_autoencoder_forward.3} parent=0 // pred_fallthru
    _
  // Predicated region
  $region18: #{timeseries_autoencoder_forward.3} parent=0 // pred_check
    _
  $region19: #{timeseries_autoencoder_forward.3} parent=0 // pred_check_branch
    %1602 = sbr.rel (0) target = $region21
  $region20: #{timeseries_autoencoder_forward.3} parent=0 // pred_region
    _
  $region21: #{timeseries_autoencoder_forward.3} parent=0 // pred_fallthru
    _

</llo_original>
